<compile_context>
chip_gen: v5e
topology: v5e:2x2
jax: 0.10.0
libtpu: 0.0.40
codegen_flags: <defaults>
</compile_context>

<pallas_src>
import numpy as np
import jax
import jax.numpy as jnp
from jax.experimental import pallas as pl
from jax.experimental.pallas import tpu as pltpu


# ----------------------------------------------------------------------------
# Pallas fused matmul + bias kernel (the hot path every conv is lowered onto)
# ----------------------------------------------------------------------------
def _mm_bias_kernel(a_ref, b_ref, bias_ref, o_ref):
    acc = jnp.dot(a_ref[...], b_ref[...], preferred_element_type=jnp.float32)
    o_ref[...] = acc + bias_ref[...]          # fused bias epilogue, f32


def _round_up(x, m):
    return (x + m - 1) // m * m


def matmul_bias(a, b, bias):
    """(M,K) @ (K,N) + bias -> f32 (M,N).

    a is cast to bf16 (MXU bf16 rate, halved DMA bytes); b/bias are expected
    pre-cast (weights bf16, bias f32).  Tiny/degenerate GEMMs route to XLA
    where a pallas_call launch + tile padding would cost more than the GEMM.
    """
    M, K = a.shape
    K2, N = b.shape
    assert K == K2
    a = a.astype(jnp.bfloat16)
    b = b.astype(jnp.bfloat16)
    bias = bias.astype(jnp.float32)

    # Shape gate: deep layers at 2x2/4x4/8x8 spatial (M<=128), the 1-channel
    # first 1x1 conv (K=1) and the 1-channel generate conv (N=1) go to XLA.
    if M < 256 or K < 16 or N < 16 or (K % 8) or (N % 8):
        return jnp.dot(a, b, preferred_element_type=jnp.float32) + bias[None, :]

    tm = 512 if M >= 1024 else (256 if M >= 512 else 128)
    Mp = _round_up(M, tm)
    if Mp != M:
        a = jnp.pad(a, ((0, Mp - M), (0, 0)))

    bias2d = bias.reshape(1, N)
    cost = pl.CostEstimate(
        flops=2 * Mp * K * N,
        transcendentals=0,
        bytes_accessed=(Mp * K + K * N) * 2 + Mp * N * 4)

    out = pl.pallas_call(
        _mm_bias_kernel,
        out_shape=jax.ShapeDtypeStruct((Mp, N), jnp.float32),
        grid_spec=pltpu.PrefetchScalarGridSpec(
            num_scalar_prefetch=0,
            grid=(Mp // tm,),
            in_specs=[
                pl.BlockSpec((tm, K), lambda i: (i, 0)),   # full-K block
                pl.BlockSpec((K, N), lambda i: (0, 0)),    # weights stay resident
                pl.BlockSpec((1, N), lambda i: (0, 0)),    # bias stays resident
            ],
            out_specs=pl.BlockSpec((tm, N), lambda i: (i, 0)),
        ),
        compiler_params=pltpu.CompilerParams(
            dimension_semantics=("parallel",)),
        cost_estimate=cost,
    )(a, b, bias2d)
    return out if Mp == M else out[:M]


# ----------------------------------------------------------------------------
# Conv / BN / pooling / resize primitives built on the fused Pallas matmul
# ----------------------------------------------------------------------------
def conv3x3(x, w_mat, bias):
    """x: (N,H,W,Cin) f32; w_mat: (9*Cin, Cout) bf16; padding=1, stride=1."""
    N, H, W, C = x.shape
    xb = x.astype(jnp.bfloat16)                          # bf16 im2col buffer
    xp = jnp.pad(xb, ((0, 0), (1, 1), (1, 1), (0, 0)))
    patches = [xp[:, dh:dh + H, dw:dw + W, :] for dh in range(3) for dw in range(3)]
    cols = jnp.concatenate(patches, axis=-1).reshape(N * H * W, 9 * C)
    # TODO(synk): the 9x im2col buffer is still materialized (now bf16); the
    # row-major (h,w) shift cannot be expressed as a rectangular BlockSpec
    # window, so shifted-window in-kernel accumulation is not done here.
    y = matmul_bias(cols, w_mat, bias)
    return y.reshape(N, H, W, -1)


def conv1x1(x, w_mat, bias):
    N, H, W, C = x.shape
    y = matmul_bias(x.astype(jnp.bfloat16).reshape(N * H * W, C), w_mat, bias)
    return y.reshape(N, H, W, -1)


def batchnorm(x, gamma, beta, eps=1e-5):
    # PyTorch BatchNorm2d in (default) training mode: biased batch statistics.
    mean = jnp.mean(x, axis=(0, 1, 2))
    var = jnp.var(x, axis=(0, 1, 2))
    return (x - mean) * jax.lax.rsqrt(var + eps) * gamma + beta


def maxpool2(x):
    N, H, W, C = x.shape
    return x.reshape(N, H // 2, 2, W // 2, 2, C).max(axis=(2, 4))


def _bilinear_matrix(H):
    # PyTorch nn.Upsample(scale_factor=2, mode='bilinear', align_corners=False)
    Hout = 2 * H
    i = np.arange(Hout)
    src = np.maximum((i + 0.5) / 2.0 - 0.5, 0.0)
    i0 = np.minimum(np.floor(src).astype(np.int32), H - 1)
    i1 = np.minimum(i0 + 1, H - 1)
    lam = src - i0
    M = np.zeros((Hout, H), dtype=np.float32)
    M[np.arange(Hout), i0] += (1.0 - lam)
    M[np.arange(Hout), i1] += lam
    return jnp.asarray(M)


def upsample2x(x):
    N, H, W, C = x.shape
    Mh = _bilinear_matrix(H)
    Mw = _bilinear_matrix(W)
    y = jnp.einsum('ph,nhwc->npwc', Mh, x)
    y = jnp.einsum('qw,npwc->npqc', Mw, y)
    return y


def _adaptive_matrix(Hin, Hout):
    M = np.zeros((Hout, Hin), dtype=np.float32)
    for i in range(Hout):
        s = (i * Hin) // Hout
        e = -((-(i + 1) * Hin) // Hout)
        M[i, s:e] = 1.0 / (e - s)
    return jnp.asarray(M)


def adaptive_avg_pool(x, out_hw):
    N, H, W, C = x.shape
    if (H, W) == tuple(out_hw):
        return x                                  # identity — skip the pass
    Mh = _adaptive_matrix(H, out_hw[0])
    Mw = _adaptive_matrix(W, out_hw[1])
    y = jnp.einsum('ph,nhwc->npwc', Mh, x)
    y = jnp.einsum('qw,npwc->npqc', Mw, y)
    return y


# ----------------------------------------------------------------------------
# Parameter initialization (deterministic, PyTorch-like fan-in uniform).
# Weights are stored matmul-ready: (k*k*Cin, Cout) in bf16; biases in f32.
# ----------------------------------------------------------------------------
def init_conv(key, cout, cin, k):
    k1, k2 = jax.random.split(key)
    bound = 1.0 / np.sqrt(cin * k * k)
    w = jax.random.uniform(k1, (cout, cin, k, k), jnp.float32, -bound, bound)
    b = jax.random.uniform(k2, (cout,), jnp.float32, -bound, bound)
    w_mat = jnp.transpose(w, (2, 3, 1, 0)).reshape(k * k * cin, cout)   # (kh,kw,Cin,Cout)
    return w_mat.astype(jnp.bfloat16), b


def init_recurrent(key, c):
    w, b = init_conv(key, c, c, 3)
    return {'w': w, 'b': b,
            'gamma': jnp.ones((c,), jnp.float32),
            'beta': jnp.zeros((c,), jnp.float32)}


def init_r2block(key, cin, cout, hid):
    k0, k1, k2, k3 = jax.random.split(key, 4)
    return {'conv_in': init_conv(k0, hid, cin, 1),
            'conv_out': init_conv(k1, cout, hid, 1),
            'rb1': init_recurrent(k2, hid),
            'rb2': init_recurrent(k3, hid)}


def init_r2unet(key):
    keys = jax.random.split(key, 10)
    p = {}
    p['encode_1'] = init_r2block(keys[0], 1, 16, 16)
    p['encode_2'] = init_r2block(keys[1], 16, 32, 32)
    p['encode_3'] = init_r2block(keys[2], 32, 64, 64)
    p['encode_4'] = init_r2block(keys[3], 64, 128, 128)
    p['encode_5'] = init_r2block(keys[4], 128, 128, 256)
    p['decode_1'] = init_r2block(keys[5], 256, 64, 128)
    p['decode_2'] = init_r2block(keys[6], 128, 32, 64)
    p['decode_3'] = init_r2block(keys[7], 64, 16, 32)
    p['decode_4'] = init_r2block(keys[8], 32, 16, 16)
    gw, gb = init_conv(keys[9], 1, 16, 3)
    p['generate'] = {'w': gw, 'b': gb,
                     'gamma': jnp.ones((1,), jnp.float32),
                     'beta': jnp.zeros((1,), jnp.float32)}
    return p


# ----------------------------------------------------------------------------
# Forward pass (mirrors R2UNet.forward semantics exactly)
# ----------------------------------------------------------------------------
def recurrent_block(x, p):
    def seq(z):
        y = conv3x3(z, p['w'], p['b'])
        y = batchnorm(y, p['gamma'], p['beta'])
        return jax.nn.relu(y)
    x1 = seq(x)
    return seq(x + x1)           # same (shared) layer applied twice


def r2block(x, p):
    x = conv1x1(x, *p['conv_in'])
    r = recurrent_block(x, p['rb1'])
    r = recurrent_block(r, p['rb2'])
    r2_out = r + x
    return conv1x1(r2_out, *p['conv_out'])


def r2unet_forward(params, x_nchw, input_size=(32, 32), output_size=(32, 32)):
    x = jnp.transpose(x_nchw, (0, 2, 3, 1))            # NCHW -> NHWC
    in_1 = adaptive_avg_pool(x, input_size)

    out_1 = r2block(in_1, params['encode_1'])
    skip_1 = out_1
    out_1 = maxpool2(out_1)

    out_2 = r2block(out_1, params['encode_2'])
    skip_2 = out_2
    out_2 = maxpool2(out_2)

    out_3 = r2block(out_2, params['encode_3'])
    skip_3 = out_3
    out_3 = maxpool2(out_3)

    out_4 = r2block(out_3, params['encode_4'])
    skip_4 = out_4
    out_4 = maxpool2(out_4)

    out_5 = r2block(out_4, params['encode_5'])
    out_5 = upsample2x(out_5)

    out_6 = r2block(jnp.concatenate((skip_4, out_5), axis=-1), params['decode_1'])
    out_6 = upsample2x(out_6)

    out_7 = r2block(jnp.concatenate((skip_3, out_6), axis=-1), params['decode_2'])
    out_7 = upsample2x(out_7)

    out_8 = r2block(jnp.concatenate((skip_2, out_7), axis=-1), params['decode_3'])
    out_8 = upsample2x(out_8)

    out_9 = r2block(jnp.concatenate((skip_1, out_8), axis=-1), params['decode_4'])

    g = params['generate']
    out = conv3x3(out_9, g['w'], g['b'])
    out = batchnorm(out, g['gamma'], g['beta'])
    out = jax.nn.sigmoid(out)

    out = adaptive_avg_pool(out, output_size)
    return jnp.transpose(out, (0, 3, 1, 2))            # NHWC -> NCHW


# ----------------------------------------------------------------------------
if __name__ == "__main__":
    key = jax.random.PRNGKey(0)
    k_params, k_input = jax.random.split(key)

    # UNet with 4 pool levels needs spatial divisible by 16; use 32x32,
    # batch=2, 1 input channel (matches the module's in_channels=1).
    x = jax.random.normal(k_input, (2, 1, 32, 32), dtype=jnp.float32)
    params = init_r2unet(k_params)

    fwd = jax.jit(lambda inp: r2unet_forward(params, inp,
                                             input_size=(32, 32),
                                             output_size=(32, 32)))
    out = fwd(x)
    jax.block_until_ready(out)
    assert out.shape == (2, 1, 32, 32)
    assert bool(jnp.all(jnp.isfinite(out)))
    print("KERNEL_OK")
</pallas_src>

<mosaic_0001>
module attributes {stable_mosaic.version = 11 : i64} {
  func.func @_mm_bias_kernel(%arg0: i32, %arg1: memref<512x144xbf16, #tpu.memory_space<vmem>>, %arg2: memref<144x16xbf16, #tpu.memory_space<vmem>>, %arg3: memref<1x16xf32, #tpu.memory_space<vmem>>, %arg4: memref<512x16xf32, #tpu.memory_space<vmem>>) attributes {dimension_semantics = [#tpu.dimension_semantics<parallel>], iteration_bounds = array<i64: 4>, scalar_prefetch = 0 : i64, scratch_operands = 0 : i64, tpu.core_type = #tpu.core_type<tc>, window_params = [{transform_indices = @transform_0, window_bounds = array<i64: 512, 144>}, {pipeline_mode = #tpu.pipeline_mode<synchronous>, transform_indices = @transform_1, window_bounds = array<i64: 144, 16>}, {pipeline_mode = #tpu.pipeline_mode<synchronous>, transform_indices = @transform_2, window_bounds = array<i64: 1, 16>}, {transform_indices = @transform_3, window_bounds = array<i64: 512, 16>}]} {
    %c0 = arith.constant 0 : index
    %c0_0 = arith.constant 0 : index
    %0 = vector.load %arg1[%c0, %c0_0] : memref<512x144xbf16, #tpu.memory_space<vmem>>, vector<512x144xbf16>
    %c0_1 = arith.constant 0 : index
    %c0_2 = arith.constant 0 : index
    %1 = vector.load %arg2[%c0_1, %c0_2] : memref<144x16xbf16, #tpu.memory_space<vmem>>, vector<144x16xbf16>
    %cst = arith.constant dense<0.000000e+00> : vector<512x16xf32>
    %2 = tpu.matmul %0, %1, %cst {dimension_numbers = #tpu.dot_dimension_numbers<[1], [0], [0], [1], [0, 0, 1, 1], [], []>} : vector<512x144xbf16>, vector<144x16xbf16>, vector<512x16xf32> -> vector<512x16xf32>
    %c0_3 = arith.constant 0 : index
    %c0_4 = arith.constant 0 : index
    %3 = vector.load %arg3[%c0_3, %c0_4] : memref<1x16xf32, #tpu.memory_space<vmem>>, vector<1x16xf32>
    %4 = vector.broadcast %3 : vector<1x16xf32> to vector<512x16xf32>
    %5 = arith.addf %2, %4 : vector<512x16xf32>
    %c0_5 = arith.constant 0 : index
    %c0_6 = arith.constant 0 : index
    %6 = vector.load %arg4[%c0_5, %c0_6] : memref<512x16xf32, #tpu.memory_space<vmem>>, vector<512x16xf32>
    tpu.vector_store %arg4[%c0_5, %c0_6], %5 {strides = array<i32>} : memref<512x16xf32, #tpu.memory_space<vmem>>, vector<512x16xf32>,
    return
  }
  func.func @transform_0(%arg0: i32) -> (i32, i32) {
    %c0_i32 = arith.constant 0 : i32
    %c0_i32_0 = arith.constant 0 : i32
    return %arg0, %c0_i32 : i32, i32
  }
  func.func @transform_1(%arg0: i32) -> (i32, i32) {
    %c0_i32 = arith.constant 0 : i32
    %c0_i32_0 = arith.constant 0 : i32
    %c0_i32_1 = arith.constant 0 : i32
    return %c0_i32, %c0_i32_0 : i32, i32
  }
  func.func @transform_2(%arg0: i32) -> (i32, i32) {
    %c0_i32 = arith.constant 0 : i32
    %c0_i32_0 = arith.constant 0 : i32
    %c0_i32_1 = arith.constant 0 : i32
    return %c0_i32, %c0_i32_0 : i32, i32
  }
  func.func @transform_3(%arg0: i32) -> (i32, i32) {
    %c0_i32 = arith.constant 0 : i32
    %c0_i32_0 = arith.constant 0 : i32
    return %arg0, %c0_i32 : i32, i32
  }
}

module attributes {stable_mosaic.version = 11 : i64} {
  func.func @_mm_bias_kernel(%arg0: i32, %arg1: memref<512x16xbf16, #tpu.memory_space<vmem>>, %arg2: memref<16x16xbf16, #tpu.memory_space<vmem>>, %arg3: memref<1x16xf32, #tpu.memory_space<vmem>>, %arg4: memref<512x16xf32, #tpu.memory_space<vmem>>) attributes {dimension_semantics = [#tpu.dimension_semantics<parallel>], iteration_bounds = array<i64: 4>, scalar_prefetch = 0 : i64, scratch_operands = 0 : i64, tpu.core_type = #tpu.core_type<tc>, window_params = [{transform_indices = @transform_0, window_bounds = array<i64: 512, 16>}, {pipeline_mode = #tpu.pipeline_mode<synchronous>, transform_indices = @transform_1, window_bounds = array<i64: 16, 16>}, {pipeline_mode = #tpu.pipeline_mode<synchronous>, transform_indices = @transform_2, window_bounds = array<i64: 1, 16>}, {transform_indices = @transform_3, window_bounds = array<i64: 512, 16>}]} {
    %c0 = arith.constant 0 : index
    %c0_0 = arith.constant 0 : index
    %0 = vector.load %arg1[%c0, %c0_0] : memref<512x16xbf16, #tpu.memory_space<vmem>>, vector<512x16xbf16>
    %c0_1 = arith.constant 0 : index
    %c0_2 = arith.constant 0 : index
    %1 = vector.load %arg2[%c0_1, %c0_2] : memref<16x16xbf16, #tpu.memory_space<vmem>>, vector<16x16xbf16>
    %cst = arith.constant dense<0.000000e+00> : vector<512x16xf32>
    %2 = tpu.matmul %0, %1, %cst {dimension_numbers = #tpu.dot_dimension_numbers<[1], [0], [0], [1], [0, 0, 1, 1], [], []>} : vector<512x16xbf16>, vector<16x16xbf16>, vector<512x16xf32> -> vector<512x16xf32>
    %c0_3 = arith.constant 0 : index
    %c0_4 = arith.constant 0 : index
    %3 = vector.load %arg3[%c0_3, %c0_4] : memref<1x16xf32, #tpu.memory_space<vmem>>, vector<1x16xf32>
    %4 = vector.broadcast %3 : vector<1x16xf32> to vector<512x16xf32>
    %5 = arith.addf %2, %4 : vector<512x16xf32>
    %c0_5 = arith.constant 0 : index
    %c0_6 = arith.constant 0 : index
    %6 = vector.load %arg4[%c0_5, %c0_6] : memref<512x16xf32, #tpu.memory_space<vmem>>, vector<512x16xf32>
    tpu.vector_store %arg4[%c0_5, %c0_6], %5 {strides = array<i32>} : memref<512x16xf32, #tpu.memory_space<vmem>>, vector<512x16xf32>,
    return
  }
  func.func @transform_0(%arg0: i32) -> (i32, i32) {
    %c0_i32 = arith.constant 0 : i32
    %c0_i32_0 = arith.constant 0 : i32
    return %arg0, %c0_i32 : i32, i32
  }
  func.func @transform_1(%arg0: i32) -> (i32, i32) {
    %c0_i32 = arith.constant 0 : i32
    %c0_i32_0 = arith.constant 0 : i32
    %c0_i32_1 = arith.constant 0 : i32
    return %c0_i32, %c0_i32_0 : i32, i32
  }
  func.func @transform_2(%arg0: i32) -> (i32, i32) {
    %c0_i32 = arith.constant 0 : i32
    %c0_i32_0 = arith.constant 0 : i32
    %c0_i32_1 = arith.constant 0 : i32
    return %c0_i32, %c0_i32_0 : i32, i32
  }
  func.func @transform_3(%arg0: i32) -> (i32, i32) {
    %c0_i32 = arith.constant 0 : i32
    %c0_i32_0 = arith.constant 0 : i32
    return %arg0, %c0_i32 : i32, i32
  }
}

module attributes {stable_mosaic.version = 11 : i64} {
  func.func @_mm_bias_kernel(%arg0: i32, %arg1: memref<256x16xbf16, #tpu.memory_space<vmem>>, %arg2: memref<16x32xbf16, #tpu.memory_space<vmem>>, %arg3: memref<1x32xf32, #tpu.memory_space<vmem>>, %arg4: memref<256x32xf32, #tpu.memory_space<vmem>>) attributes {dimension_semantics = [#tpu.dimension_semantics<parallel>], iteration_bounds = array<i64: 2>, scalar_prefetch = 0 : i64, scratch_operands = 0 : i64, tpu.core_type = #tpu.core_type<tc>, window_params = [{transform_indices = @transform_0, window_bounds = array<i64: 256, 16>}, {pipeline_mode = #tpu.pipeline_mode<synchronous>, transform_indices = @transform_1, window_bounds = array<i64: 16, 32>}, {pipeline_mode = #tpu.pipeline_mode<synchronous>, transform_indices = @transform_2, window_bounds = array<i64: 1, 32>}, {transform_indices = @transform_3, window_bounds = array<i64: 256, 32>}]} {
    %c0 = arith.constant 0 : index
    %c0_0 = arith.constant 0 : index
    %0 = vector.load %arg1[%c0, %c0_0] : memref<256x16xbf16, #tpu.memory_space<vmem>>, vector<256x16xbf16>
    %c0_1 = arith.constant 0 : index
    %c0_2 = arith.constant 0 : index
    %1 = vector.load %arg2[%c0_1, %c0_2] : memref<16x32xbf16, #tpu.memory_space<vmem>>, vector<16x32xbf16>
    %cst = arith.constant dense<0.000000e+00> : vector<256x32xf32>
    %2 = tpu.matmul %0, %1, %cst {dimension_numbers = #tpu.dot_dimension_numbers<[1], [0], [0], [1], [0, 0, 1, 1], [], []>} : vector<256x16xbf16>, vector<16x32xbf16>, vector<256x32xf32> -> vector<256x32xf32>
    %c0_3 = arith.constant 0 : index
    %c0_4 = arith.constant 0 : index
    %3 = vector.load %arg3[%c0_3, %c0_4] : memref<1x32xf32, #tpu.memory_space<vmem>>, vector<1x32xf32>
    %4 = vector.broadcast %3 : vector<1x32xf32> to vector<256x32xf32>
    %5 = arith.addf %2, %4 : vector<256x32xf32>
    %c0_5 = arith.constant 0 : index
    %c0_6 = arith.constant 0 : index
    %6 = vector.load %arg4[%c0_5, %c0_6] : memref<256x32xf32, #tpu.memory_space<vmem>>, vector<256x32xf32>
    tpu.vector_store %arg4[%c0_5, %c0_6], %5 {strides = array<i32>} : memref<256x32xf32, #tpu.memory_space<vmem>>, vector<256x32xf32>,
    return
  }
  func.func @transform_0(%arg0: i32) -> (i32, i32) {
    %c0_i32 = arith.constant 0 : i32
    %c0_i32_0 = arith.constant 0 : i32
    return %arg0, %c0_i32 : i32, i32
  }
  func.func @transform_1(%arg0: i32) -> (i32, i32) {
    %c0_i32 = arith.constant 0 : i32
    %c0_i32_0 = arith.constant 0 : i32
    %c0_i32_1 = arith.constant 0 : i32
    return %c0_i32, %c0_i32_0 : i32, i32
  }
  func.func @transform_2(%arg0: i32) -> (i32, i32) {
    %c0_i32 = arith.constant 0 : i32
    %c0_i32_0 = arith.constant 0 : i32
    %c0_i32_1 = arith.constant 0 : i32
    return %c0_i32, %c0_i32_0 : i32, i32
  }
  func.func @transform_3(%arg0: i32) -> (i32, i32) {
    %c0_i32 = arith.constant 0 : i32
    %c0_i32_0 = arith.constant 0 : i32
    return %arg0, %c0_i32 : i32, i32
  }
}

module attributes {stable_mosaic.version = 11 : i64} {
  func.func @_mm_bias_kernel(%arg0: i32, %arg1: memref<256x288xbf16, #tpu.memory_space<vmem>>, %arg2: memref<288x32xbf16, #tpu.memory_space<vmem>>, %arg3: memref<1x32xf32, #tpu.memory_space<vmem>>, %arg4: memref<256x32xf32, #tpu.memory_space<vmem>>) attributes {dimension_semantics = [#tpu.dimension_semantics<parallel>], iteration_bounds = array<i64: 2>, scalar_prefetch = 0 : i64, scratch_operands = 0 : i64, tpu.core_type = #tpu.core_type<tc>, window_params = [{transform_indices = @transform_0, window_bounds = array<i64: 256, 288>}, {pipeline_mode = #tpu.pipeline_mode<synchronous>, transform_indices = @transform_1, window_bounds = array<i64: 288, 32>}, {pipeline_mode = #tpu.pipeline_mode<synchronous>, transform_indices = @transform_2, window_bounds = array<i64: 1, 32>}, {transform_indices = @transform_3, window_bounds = array<i64: 256, 32>}]} {
    %c0 = arith.constant 0 : index
    %c0_0 = arith.constant 0 : index
    %0 = vector.load %arg1[%c0, %c0_0] : memref<256x288xbf16, #tpu.memory_space<vmem>>, vector<256x288xbf16>
    %c0_1 = arith.constant 0 : index
    %c0_2 = arith.constant 0 : index
    %1 = vector.load %arg2[%c0_1, %c0_2] : memref<288x32xbf16, #tpu.memory_space<vmem>>, vector<288x32xbf16>
    %cst = arith.constant dense<0.000000e+00> : vector<256x32xf32>
    %2 = tpu.matmul %0, %1, %cst {dimension_numbers = #tpu.dot_dimension_numbers<[1], [0], [0], [1], [0, 0, 1, 1], [], []>} : vector<256x288xbf16>, vector<288x32xbf16>, vector<256x32xf32> -> vector<256x32xf32>
    %c0_3 = arith.constant 0 : index
    %c0_4 = arith.constant 0 : index
    %3 = vector.load %arg3[%c0_3, %c0_4] : memref<1x32xf32, #tpu.memory_space<vmem>>, vector<1x32xf32>
    %4 = vector.broadcast %3 : vector<1x32xf32> to vector<256x32xf32>
    %5 = arith.addf %2, %4 : vector<256x32xf32>
    %c0_5 = arith.constant 0 : index
    %c0_6 = arith.constant 0 : index
    %6 = vector.load %arg4[%c0_5, %c0_6] : memref<256x32xf32, #tpu.memory_space<vmem>>, vector<256x32xf32>
    tpu.vector_store %arg4[%c0_5, %c0_6], %5 {strides = array<i32>} : memref<256x32xf32, #tpu.memory_space<vmem>>, vector<256x32xf32>,
    return
  }
  func.func @transform_0(%arg0: i32) -> (i32, i32) {
    %c0_i32 = arith.constant 0 : i32
    %c0_i32_0 = arith.constant 0 : i32
    return %arg0, %c0_i32 : i32, i32
  }
  func.func @transform_1(%arg0: i32) -> (i32, i32) {
    %c0_i32 = arith.constant 0 : i32
    %c0_i32_0 = arith.constant 0 : i32
    %c0_i32_1 = arith.constant 0 : i32
    return %c0_i32, %c0_i32_0 : i32, i32
  }
  func.func @transform_2(%arg0: i32) -> (i32, i32) {
    %c0_i32 = arith.constant 0 : i32
    %c0_i32_0 = arith.constant 0 : i32
    %c0_i32_1 = arith.constant 0 : i32
    return %c0_i32, %c0_i32_0 : i32, i32
  }
  func.func @transform_3(%arg0: i32) -> (i32, i32) {
    %c0_i32 = arith.constant 0 : i32
    %c0_i32_0 = arith.constant 0 : i32
    return %arg0, %c0_i32 : i32, i32
  }
}

module attributes {stable_mosaic.version = 11 : i64} {
  func.func @_mm_bias_kernel(%arg0: i32, %arg1: memref<256x32xbf16, #tpu.memory_space<vmem>>, %arg2: memref<32x32xbf16, #tpu.memory_space<vmem>>, %arg3: memref<1x32xf32, #tpu.memory_space<vmem>>, %arg4: memref<256x32xf32, #tpu.memory_space<vmem>>) attributes {dimension_semantics = [#tpu.dimension_semantics<parallel>], iteration_bounds = array<i64: 2>, scalar_prefetch = 0 : i64, scratch_operands = 0 : i64, tpu.core_type = #tpu.core_type<tc>, window_params = [{transform_indices = @transform_0, window_bounds = array<i64: 256, 32>}, {pipeline_mode = #tpu.pipeline_mode<synchronous>, transform_indices = @transform_1, window_bounds = array<i64: 32, 32>}, {pipeline_mode = #tpu.pipeline_mode<synchronous>, transform_indices = @transform_2, window_bounds = array<i64: 1, 32>}, {transform_indices = @transform_3, window_bounds = array<i64: 256, 32>}]} {
    %c0 = arith.constant 0 : index
    %c0_0 = arith.constant 0 : index
    %0 = vector.load %arg1[%c0, %c0_0] : memref<256x32xbf16, #tpu.memory_space<vmem>>, vector<256x32xbf16>
    %c0_1 = arith.constant 0 : index
    %c0_2 = arith.constant 0 : index
    %1 = vector.load %arg2[%c0_1, %c0_2] : memref<32x32xbf16, #tpu.memory_space<vmem>>, vector<32x32xbf16>
    %cst = arith.constant dense<0.000000e+00> : vector<256x32xf32>
    %2 = tpu.matmul %0, %1, %cst {dimension_numbers = #tpu.dot_dimension_numbers<[1], [0], [0], [1], [0, 0, 1, 1], [], []>} : vector<256x32xbf16>, vector<32x32xbf16>, vector<256x32xf32> -> vector<256x32xf32>
    %c0_3 = arith.constant 0 : index
    %c0_4 = arith.constant 0 : index
    %3 = vector.load %arg3[%c0_3, %c0_4] : memref<1x32xf32, #tpu.memory_space<vmem>>, vector<1x32xf32>
    %4 = vector.broadcast %3 : vector<1x32xf32> to vector<256x32xf32>
    %5 = arith.addf %2, %4 : vector<256x32xf32>
    %c0_5 = arith.constant 0 : index
    %c0_6 = arith.constant 0 : index
    %6 = vector.load %arg4[%c0_5, %c0_6] : memref<256x32xf32, #tpu.memory_space<vmem>>, vector<256x32xf32>
    tpu.vector_store %arg4[%c0_5, %c0_6], %5 {strides = array<i32>} : memref<256x32xf32, #tpu.memory_space<vmem>>, vector<256x32xf32>,
    return
  }
  func.func @transform_0(%arg0: i32) -> (i32, i32) {
    %c0_i32 = arith.constant 0 : i32
    %c0_i32_0 = arith.constant 0 : i32
    return %arg0, %c0_i32 : i32, i32
  }
  func.func @transform_1(%arg0: i32) -> (i32, i32) {
    %c0_i32 = arith.constant 0 : i32
    %c0_i32_0 = arith.constant 0 : i32
    %c0_i32_1 = arith.constant 0 : i32
    return %c0_i32, %c0_i32_0 : i32, i32
  }
  func.func @transform_2(%arg0: i32) -> (i32, i32) {
    %c0_i32 = arith.constant 0 : i32
    %c0_i32_0 = arith.constant 0 : i32
    %c0_i32_1 = arith.constant 0 : i32
    return %c0_i32, %c0_i32_0 : i32, i32
  }
  func.func @transform_3(%arg0: i32) -> (i32, i32) {
    %c0_i32 = arith.constant 0 : i32
    %c0_i32_0 = arith.constant 0 : i32
    return %arg0, %c0_i32 : i32, i32
  }
}

module attributes {stable_mosaic.version = 11 : i64} {
  func.func @_mm_bias_kernel(%arg0: i32, %arg1: memref<256x64xbf16, #tpu.memory_space<vmem>>, %arg2: memref<64x32xbf16, #tpu.memory_space<vmem>>, %arg3: memref<1x32xf32, #tpu.memory_space<vmem>>, %arg4: memref<256x32xf32, #tpu.memory_space<vmem>>) attributes {dimension_semantics = [#tpu.dimension_semantics<parallel>], iteration_bounds = array<i64: 2>, scalar_prefetch = 0 : i64, scratch_operands = 0 : i64, tpu.core_type = #tpu.core_type<tc>, window_params = [{transform_indices = @transform_0, window_bounds = array<i64: 256, 64>}, {pipeline_mode = #tpu.pipeline_mode<synchronous>, transform_indices = @transform_1, window_bounds = array<i64: 64, 32>}, {pipeline_mode = #tpu.pipeline_mode<synchronous>, transform_indices = @transform_2, window_bounds = array<i64: 1, 32>}, {transform_indices = @transform_3, window_bounds = array<i64: 256, 32>}]} {
    %c0 = arith.constant 0 : index
    %c0_0 = arith.constant 0 : index
    %0 = vector.load %arg1[%c0, %c0_0] : memref<256x64xbf16, #tpu.memory_space<vmem>>, vector<256x64xbf16>
    %c0_1 = arith.constant 0 : index
    %c0_2 = arith.constant 0 : index
    %1 = vector.load %arg2[%c0_1, %c0_2] : memref<64x32xbf16, #tpu.memory_space<vmem>>, vector<64x32xbf16>
    %cst = arith.constant dense<0.000000e+00> : vector<256x32xf32>
    %2 = tpu.matmul %0, %1, %cst {dimension_numbers = #tpu.dot_dimension_numbers<[1], [0], [0], [1], [0, 0, 1, 1], [], []>} : vector<256x64xbf16>, vector<64x32xbf16>, vector<256x32xf32> -> vector<256x32xf32>
    %c0_3 = arith.constant 0 : index
    %c0_4 = arith.constant 0 : index
    %3 = vector.load %arg3[%c0_3, %c0_4] : memref<1x32xf32, #tpu.memory_space<vmem>>, vector<1x32xf32>
    %4 = vector.broadcast %3 : vector<1x32xf32> to vector<256x32xf32>
    %5 = arith.addf %2, %4 : vector<256x32xf32>
    %c0_5 = arith.constant 0 : index
    %c0_6 = arith.constant 0 : index
    %6 = vector.load %arg4[%c0_5, %c0_6] : memref<256x32xf32, #tpu.memory_space<vmem>>, vector<256x32xf32>
    tpu.vector_store %arg4[%c0_5, %c0_6], %5 {strides = array<i32>} : memref<256x32xf32, #tpu.memory_space<vmem>>, vector<256x32xf32>,
    return
  }
  func.func @transform_0(%arg0: i32) -> (i32, i32) {
    %c0_i32 = arith.constant 0 : i32
    %c0_i32_0 = arith.constant 0 : i32
    return %arg0, %c0_i32 : i32, i32
  }
  func.func @transform_1(%arg0: i32) -> (i32, i32) {
    %c0_i32 = arith.constant 0 : i32
    %c0_i32_0 = arith.constant 0 : i32
    %c0_i32_1 = arith.constant 0 : i32
    return %c0_i32, %c0_i32_0 : i32, i32
  }
  func.func @transform_2(%arg0: i32) -> (i32, i32) {
    %c0_i32 = arith.constant 0 : i32
    %c0_i32_0 = arith.constant 0 : i32
    %c0_i32_1 = arith.constant 0 : i32
    return %c0_i32, %c0_i32_0 : i32, i32
  }
  func.func @transform_3(%arg0: i32) -> (i32, i32) {
    %c0_i32 = arith.constant 0 : i32
    %c0_i32_0 = arith.constant 0 : i32
    return %arg0, %c0_i32 : i32, i32
  }
}

module attributes {stable_mosaic.version = 11 : i64} {
  func.func @_mm_bias_kernel(%arg0: i32, %arg1: memref<256x32xbf16, #tpu.memory_space<vmem>>, %arg2: memref<32x16xbf16, #tpu.memory_space<vmem>>, %arg3: memref<1x16xf32, #tpu.memory_space<vmem>>, %arg4: memref<256x16xf32, #tpu.memory_space<vmem>>) attributes {dimension_semantics = [#tpu.dimension_semantics<parallel>], iteration_bounds = array<i64: 2>, scalar_prefetch = 0 : i64, scratch_operands = 0 : i64, tpu.core_type = #tpu.core_type<tc>, window_params = [{transform_indices = @transform_0, window_bounds = array<i64: 256, 32>}, {pipeline_mode = #tpu.pipeline_mode<synchronous>, transform_indices = @transform_1, window_bounds = array<i64: 32, 16>}, {pipeline_mode = #tpu.pipeline_mode<synchronous>, transform_indices = @transform_2, window_bounds = array<i64: 1, 16>}, {transform_indices = @transform_3, window_bounds = array<i64: 256, 16>}]} {
    %c0 = arith.constant 0 : index
    %c0_0 = arith.constant 0 : index
    %0 = vector.load %arg1[%c0, %c0_0] : memref<256x32xbf16, #tpu.memory_space<vmem>>, vector<256x32xbf16>
    %c0_1 = arith.constant 0 : index
    %c0_2 = arith.constant 0 : index
    %1 = vector.load %arg2[%c0_1, %c0_2] : memref<32x16xbf16, #tpu.memory_space<vmem>>, vector<32x16xbf16>
    %cst = arith.constant dense<0.000000e+00> : vector<256x16xf32>
    %2 = tpu.matmul %0, %1, %cst {dimension_numbers = #tpu.dot_dimension_numbers<[1], [0], [0], [1], [0, 0, 1, 1], [], []>} : vector<256x32xbf16>, vector<32x16xbf16>, vector<256x16xf32> -> vector<256x16xf32>
    %c0_3 = arith.constant 0 : index
    %c0_4 = arith.constant 0 : index
    %3 = vector.load %arg3[%c0_3, %c0_4] : memref<1x16xf32, #tpu.memory_space<vmem>>, vector<1x16xf32>
    %4 = vector.broadcast %3 : vector<1x16xf32> to vector<256x16xf32>
    %5 = arith.addf %2, %4 : vector<256x16xf32>
    %c0_5 = arith.constant 0 : index
    %c0_6 = arith.constant 0 : index
    %6 = vector.load %arg4[%c0_5, %c0_6] : memref<256x16xf32, #tpu.memory_space<vmem>>, vector<256x16xf32>
    tpu.vector_store %arg4[%c0_5, %c0_6], %5 {strides = array<i32>} : memref<256x16xf32, #tpu.memory_space<vmem>>, vector<256x16xf32>,
    return
  }
  func.func @transform_0(%arg0: i32) -> (i32, i32) {
    %c0_i32 = arith.constant 0 : i32
    %c0_i32_0 = arith.constant 0 : i32
    return %arg0, %c0_i32 : i32, i32
  }
  func.func @transform_1(%arg0: i32) -> (i32, i32) {
    %c0_i32 = arith.constant 0 : i32
    %c0_i32_0 = arith.constant 0 : i32
    %c0_i32_1 = arith.constant 0 : i32
    return %c0_i32, %c0_i32_0 : i32, i32
  }
  func.func @transform_2(%arg0: i32) -> (i32, i32) {
    %c0_i32 = arith.constant 0 : i32
    %c0_i32_0 = arith.constant 0 : i32
    %c0_i32_1 = arith.constant 0 : i32
    return %c0_i32, %c0_i32_0 : i32, i32
  }
  func.func @transform_3(%arg0: i32) -> (i32, i32) {
    %c0_i32 = arith.constant 0 : i32
    %c0_i32_0 = arith.constant 0 : i32
    return %arg0, %c0_i32 : i32, i32
  }
}

module attributes {stable_mosaic.version = 11 : i64} {
  func.func @_mm_bias_kernel(%arg0: i32, %arg1: memref<512x32xbf16, #tpu.memory_space<vmem>>, %arg2: memref<32x16xbf16, #tpu.memory_space<vmem>>, %arg3: memref<1x16xf32, #tpu.memory_space<vmem>>, %arg4: memref<512x16xf32, #tpu.memory_space<vmem>>) attributes {dimension_semantics = [#tpu.dimension_semantics<parallel>], iteration_bounds = array<i64: 4>, scalar_prefetch = 0 : i64, scratch_operands = 0 : i64, tpu.core_type = #tpu.core_type<tc>, window_params = [{transform_indices = @transform_0, window_bounds = array<i64: 512, 32>}, {pipeline_mode = #tpu.pipeline_mode<synchronous>, transform_indices = @transform_1, window_bounds = array<i64: 32, 16>}, {pipeline_mode = #tpu.pipeline_mode<synchronous>, transform_indices = @transform_2, window_bounds = array<i64: 1, 16>}, {transform_indices = @transform_3, window_bounds = array<i64: 512, 16>}]} {
    %c0 = arith.constant 0 : index
    %c0_0 = arith.constant 0 : index
    %0 = vector.load %arg1[%c0, %c0_0] : memref<512x32xbf16, #tpu.memory_space<vmem>>, vector<512x32xbf16>
    %c0_1 = arith.constant 0 : index
    %c0_2 = arith.constant 0 : index
    %1 = vector.load %arg2[%c0_1, %c0_2] : memref<32x16xbf16, #tpu.memory_space<vmem>>, vector<32x16xbf16>
    %cst = arith.constant dense<0.000000e+00> : vector<512x16xf32>
    %2 = tpu.matmul %0, %1, %cst {dimension_numbers = #tpu.dot_dimension_numbers<[1], [0], [0], [1], [0, 0, 1, 1], [], []>} : vector<512x32xbf16>, vector<32x16xbf16>, vector<512x16xf32> -> vector<512x16xf32>
    %c0_3 = arith.constant 0 : index
    %c0_4 = arith.constant 0 : index
    %3 = vector.load %arg3[%c0_3, %c0_4] : memref<1x16xf32, #tpu.memory_space<vmem>>, vector<1x16xf32>
    %4 = vector.broadcast %3 : vector<1x16xf32> to vector<512x16xf32>
    %5 = arith.addf %2, %4 : vector<512x16xf32>
    %c0_5 = arith.constant 0 : index
    %c0_6 = arith.constant 0 : index
    %6 = vector.load %arg4[%c0_5, %c0_6] : memref<512x16xf32, #tpu.memory_space<vmem>>, vector<512x16xf32>
    tpu.vector_store %arg4[%c0_5, %c0_6], %5 {strides = array<i32>} : memref<512x16xf32, #tpu.memory_space<vmem>>, vector<512x16xf32>,
    return
  }
  func.func @transform_0(%arg0: i32) -> (i32, i32) {
    %c0_i32 = arith.constant 0 : i32
    %c0_i32_0 = arith.constant 0 : i32
    return %arg0, %c0_i32 : i32, i32
  }
  func.func @transform_1(%arg0: i32) -> (i32, i32) {
    %c0_i32 = arith.constant 0 : i32
    %c0_i32_0 = arith.constant 0 : i32
    %c0_i32_1 = arith.constant 0 : i32
    return %c0_i32, %c0_i32_0 : i32, i32
  }
  func.func @transform_2(%arg0: i32) -> (i32, i32) {
    %c0_i32 = arith.constant 0 : i32
    %c0_i32_0 = arith.constant 0 : i32
    %c0_i32_1 = arith.constant 0 : i32
    return %c0_i32, %c0_i32_0 : i32, i32
  }
  func.func @transform_3(%arg0: i32) -> (i32, i32) {
    %c0_i32 = arith.constant 0 : i32
    %c0_i32_0 = arith.constant 0 : i32
    return %arg0, %c0_i32 : i32, i32
  }
}

</mosaic_0001>

<llo_original>
// kernel: _lambda_.23
$region0: #{_lambda_.23}
  #allocation0 [shape = 'u32[]', space=smem, size = 0x4, offset = 0x4, fixed_abs, tag = 'smem constant byte address 0x4 - core index']
  #allocation1 [shape = 'u32[72,128]{1,0:T(1,128)}', space=vmem, size = 0x9000, scoped, tag = 'internal scratch']
  %s0 = inlined_call_operand.vmem [shape: bf16[2048,144], index: 0, kind: input, shape index: {}]
  %s1 = inlined_call_operand.vmem [shape: bf16[144,16], index: 1, kind: input, shape index: {}]
  %s2 = inlined_call_operand.vmem [shape: f32[1,16], index: 2, kind: input, shape index: {}]
  %s3 = inlined_call_operand.vmem [shape: f32[2048,16], index: 3, kind: output, shape index: {}]
  %s4 = sld [smem:[#allocation0]]
  $region45: #{_lambda_.23} parent=0
    _
  %s6 = ssub.s32 1, %s4
  %s7 = scalar_select 0, %s6, %s4
  loop: start=0, step=1, limit=6
  $region2: #{_lambda_.23} parent=0 // loop_pre_header
    _
  $region3: #{_lambda_.23} parent=0 // loop_header
    %s9 = sphi 0, %s13
    %p10 = scmp.ge.s32.totalorder %s9, 6
    %s19 = sphi 0, %s21
    %s22 = sphi 0, %s19
    %s23 = sphi 0, %s22
    %s39 = sphi 0, %s23
    %s43 = sphi 0, %s43
    %s45 = sphi 0, %s43
    %s46 = sphi 0, %s45
    %s60 = sphi 0, %s46
    %s64 = sphi 0, %s64
    %s66 = sphi 0, %s64
    %s67 = sphi 0, %s66
    %s81 = sphi 0, %s67
    %s87 = sphi 0, %s89
    %s90 = sphi 0, %s87
    %s91 = sphi 0, %s90
    %s107 = sphi 0, %s91
  $region4: #{_lambda_.23} parent=0 // loop_header_branch
    %12 = sbr.rel (%p10) target = $region8
  $region5: #{_lambda_.23} parent=0 // loop_body
    %s14 = ssub.s32 %s9, 1
    %s15 = ssub.s32 %s9, 2
    %s16 = sadd.s32 %s9, 1
    %s17 = ssub.s32 %s9, %s16
    %p18 = scmp.eq.s32.totalorder %s17, 0
    %s20 = sadd.s32 %s19, 1
    %s21 = scalar_select %p18, %s19, %s20
    %p24 = pneg %p18
    %p25 = scmp.eq.s32.totalorder %s9, 3
    %p26 = por %p24, %p25
    %p27 = scmp.ne.s32.totalorder %s19, %s22
    %p28 = scmp.eq.s32.totalorder %s9, 0
    %p29 = por %p27, %p28
    %p30 = scmp.ne.s32.totalorder %s19, %s22
    %p31 = scmp.eq.s32.totalorder %s14, 3
    %p32 = por %p30, %p31
    %p33 = scmp.ne.s32.totalorder %s22, %s23
    %p34 = scmp.eq.s32.totalorder %s14, 0
    %p35 = por %p33, %p34
    %p36 = scmp.ne.s32.totalorder %s22, %s23
    %p37 = scmp.eq.s32.totalorder %s15, 3
    %p38 = por %p36, %p37
    %p40 = scmp.ne.s32.totalorder %s23, %s39
    %p41 = scmp.eq.s32.totalorder %s15, 0
    %p42 = por %p40, %p41
    %s44 = sadd.s32 %s43, 1
    %p47 = scmp.eq.s32.totalorder %s9, 3
    %p48 = scmp.ne.s32.totalorder %s43, %s45
    %p49 = scmp.eq.s32.totalorder %s9, 0
    %p50 = por %p48, %p49
    %p51 = scmp.ne.s32.totalorder %s43, %s45
    %p52 = scmp.eq.s32.totalorder %s14, 3
    %p53 = por %p51, %p52
    %p54 = scmp.ne.s32.totalorder %s45, %s46
    %p55 = scmp.eq.s32.totalorder %s14, 0
    %p56 = por %p54, %p55
    %p57 = scmp.ne.s32.totalorder %s45, %s46
    %p58 = scmp.eq.s32.totalorder %s15, 3
    %p59 = por %p57, %p58
    %p61 = scmp.ne.s32.totalorder %s46, %s60
    %p62 = scmp.eq.s32.totalorder %s15, 0
    %p63 = por %p61, %p62
    %s65 = sadd.s32 %s64, 1
    %p68 = scmp.eq.s32.totalorder %s9, 3
    %p69 = scmp.ne.s32.totalorder %s64, %s66
    %p70 = scmp.eq.s32.totalorder %s9, 0
    %p71 = por %p69, %p70
    %p72 = scmp.ne.s32.totalorder %s64, %s66
    %p73 = scmp.eq.s32.totalorder %s14, 3
    %p74 = por %p72, %p73
    %p75 = scmp.ne.s32.totalorder %s66, %s67
    %p76 = scmp.eq.s32.totalorder %s14, 0
    %p77 = por %p75, %p76
    %p78 = scmp.ne.s32.totalorder %s66, %s67
    %p79 = scmp.eq.s32.totalorder %s15, 3
    %p80 = por %p78, %p79
    %p82 = scmp.ne.s32.totalorder %s67, %s81
    %p83 = scmp.eq.s32.totalorder %s15, 0
    %p84 = por %p82, %p83
    %s85 = ssub.s32 %s9, %s16
    %p86 = scmp.eq.s32.totalorder %s85, 0
    %s88 = sadd.s32 %s87, 1
    %s89 = scalar_select %p86, %s87, %s88
    %p92 = pneg %p86
    %p93 = scmp.eq.s32.totalorder %s9, 3
    %p94 = por %p92, %p93
    %p95 = scmp.ne.s32.totalorder %s87, %s90
    %p96 = scmp.eq.s32.totalorder %s9, 0
    %p97 = por %p95, %p96
    %p98 = scmp.ne.s32.totalorder %s87, %s90
    %p99 = scmp.eq.s32.totalorder %s14, 3
    %p100 = por %p98, %p99
    %p101 = scmp.ne.s32.totalorder %s90, %s91
    %p102 = scmp.eq.s32.totalorder %s14, 0
    %p103 = por %p101, %p102
    %p104 = scmp.ne.s32.totalorder %s90, %s91
    %p105 = scmp.eq.s32.totalorder %s15, 3
    %p106 = por %p104, %p105
    %p108 = scmp.ne.s32.totalorder %s91, %s107
    %p109 = scmp.eq.s32.totalorder %s15, 0
    %p110 = por %p108, %p109
    %p111 = scmp.le.s32.totalorder 1, %s9
    %p112 = scmp.lt.s32.totalorder %s9, 5
    %p113 = pnand %p111, %p112
    %p114 = pneg %p113
    // Predicated region
    $region9: #{_lambda_.23} parent=5 // pred_check
      _
    $region10: #{_lambda_.23} parent=5 // pred_check_branch
      %116 = sbr.rel (%p113) target = $region12
    $region11: #{_lambda_.23} parent=5 // pred_region
      %s117 = ssub.s32 %s9, 1
      // Predicated region
      $region13: #{_lambda_.23} parent=11 // pred_check
        %p118 = pneg %p56
      $region14: #{_lambda_.23} parent=11 // pred_check_branch
        %120 = sbr.rel (%p118) target = $region16
      $region15: #{_lambda_.23} parent=11 // pred_region
        _
      $region16: #{_lambda_.23} parent=11 // pred_fallthru
        _
      // Predicated region
      $region17: #{_lambda_.23} parent=11 // pred_check
        %p121 = pneg %p77
      $region18: #{_lambda_.23} parent=11 // pred_check_branch
        %123 = sbr.rel (%p121) target = $region20
      $region19: #{_lambda_.23} parent=11 // pred_region
        _
      $region20: #{_lambda_.23} parent=11 // pred_fallthru
        _
    $region12: #{_lambda_.23} parent=5 // pred_fallthru
      _
    %p124 = scmp.lt.s32.totalorder %s9, 4
    // Predicated region
    $region21: #{_lambda_.23} parent=5 // pred_check
      %p125 = pneg %p124
    $region22: #{_lambda_.23} parent=5 // pred_check_branch
      %127 = sbr.rel (%p125) target = $region24
    $region23: #{_lambda_.23} parent=5 // pred_region
      // Predicated region
      $region25: #{_lambda_.23} parent=23 // pred_check
        %p128 = pneg %p29
      $region26: #{_lambda_.23} parent=23 // pred_check_branch
        %130 = sbr.rel (%p128) target = $region28
      $region27: #{_lambda_.23} parent=23 // pred_region
        %s131 = smul.u32 64, %s9
        %p132 = scmp.lt.s32.totalorder %s131, 255
        %s133 = scalar_select %p132, %s131, 255
        %s134 = smul.addr %s133, 2
        %s135 = smul.addr %s134, 4
        %s136 = scalar_lea.vmem %s0, %s135
        %s137 = smul.u32 64, %s9
      $region28: #{_lambda_.23} parent=23 // pred_fallthru
        _
    $region24: #{_lambda_.23} parent=5 // pred_fallthru
      _
    %p138 = scmp.le.s32.totalorder 1, %s9
    %p139 = scmp.lt.s32.totalorder %s9, 5
    %p140 = pnand %p138, %p139
    %p141 = pneg %p140
    // Predicated region
    $region29: #{_lambda_.23} parent=5 // pred_check
      _
    $region30: #{_lambda_.23} parent=5 // pred_check_branch
      %143 = sbr.rel (%p140) target = $region32
    $region31: #{_lambda_.23} parent=5 // pred_region
      %s144 = ssub.s32 %s9, 1
      %s145 = smul.u32 64, %s14
      %p146 = scmp.lt.s32.totalorder %s145, 255
      %s147 = scalar_select %p146, %s145, 255
      %s148 = smul.addr %s147, 2
      %s149 = smul.addr %s148, 4
      %s150 = scalar_lea.vmem %s0, %s149
      %p151 = pneg %p35
      %p152 = pneg %p32
      %p153 = pneg %p56
      %p154 = pneg %p53
      %p155 = pneg %p77
      %p156 = pneg %p74
      %p157 = pneg %p103
      %p158 = pneg %p100
      %s159 = smul.u32 64, %s14
      %p160 = scmp.lt.s32.totalorder %s159, 255
      %s161 = scalar_select %p160, %s159, 255
      %s162 = smul.addr %s161, 8
      %s163 = scalar_lea.vmem %s3, %s162
      %s164 = smul.u32 64, %s14
      %p165 = scmp.lt.s32.totalorder %s164, 255
      %s166 = scalar_select %p165, %s164, 255
      %s167 = smul.addr %s166, 2
      %s168 = smul.addr %s167, 4
      %s169 = scalar_lea.vmem %s0, %s168
      %s170 = smul.u32 64, %s14
      %s171 = smul.u32 64, %s14
      %p172 = scmp.lt.s32.totalorder %s171, 255
      %s173 = scalar_select %p172, %s171, 255
      %s174 = smul.addr %s173, 8
      %s175 = scalar_lea.vmem %s3, %s174
      %s176 = smul.u32 64, %s14
      %v178 = vld [vmem:[%s169] sm:$0xff]
      %v179 = vld [vmem:[%s169 + $0x8] sm:$0xff]
      %v180 = vld [vmem:[%s169 + $0x10] sm:$0xff]
      %v181 = vld [vmem:[%s169 + $0x18] sm:$0xff]
      %v182 = vld [vmem:[%s169 + $0x20] sm:$0xff]
      %v183 = vld [vmem:[%s169 + $0x28] sm:$0xff]
      %v184 = vld [vmem:[%s169 + $0x30] sm:$0xff]
      %v185 = vld [vmem:[%s169 + $0x38] sm:$0xff]
      %v186 = vld [vmem:[%s169 + $0x40] sm:$0xff]
      %v187 = vld [vmem:[%s169 + $0x48] sm:$0xff]
      %v188 = vld [vmem:[%s169 + $0x50] sm:$0xff]
      %v189 = vld [vmem:[%s169 + $0x58] sm:$0xff]
      %v190 = vld [vmem:[%s169 + $0x60] sm:$0xff]
      %v191 = vld [vmem:[%s169 + $0x68] sm:$0xff]
      %v192 = vld [vmem:[%s169 + $0x70] sm:$0xff]
      %v193 = vld [vmem:[%s169 + $0x78] sm:$0xff]
      %v194 = vld [vmem:[%s169 + $0x80] sm:$0xff]
      %v195 = vld [vmem:[%s169 + $0x88] sm:$0xff]
      %v196 = vld [vmem:[%s169 + $0x90] sm:$0xff]
      %v197 = vld [vmem:[%s169 + $0x98] sm:$0xff]
      %v198 = vld [vmem:[%s169 + $0xa0] sm:$0xff]
      %v199 = vld [vmem:[%s169 + $0xa8] sm:$0xff]
      %v200 = vld [vmem:[%s169 + $0xb0] sm:$0xff]
      %v201 = vld [vmem:[%s169 + $0xb8] sm:$0xff]
      %v202 = vld [vmem:[%s169 + $0xc0] sm:$0xff]
      %v203 = vld [vmem:[%s169 + $0xc8] sm:$0xff]
      %v204 = vld [vmem:[%s169 + $0xd0] sm:$0xff]
      %v205 = vld [vmem:[%s169 + $0xd8] sm:$0xff]
      %v206 = vld [vmem:[%s169 + $0xe0] sm:$0xff]
      %v207 = vld [vmem:[%s169 + $0xe8] sm:$0xff]
      %v208 = vld [vmem:[%s169 + $0xf0] sm:$0xff]
      %v209 = vld [vmem:[%s169 + $0xf8] sm:$0xff]
      %v210 = vld [vmem:[%s169 + $0x100] sm:$0xff]
      %v211 = vld [vmem:[%s169 + $0x108] sm:$0xff]
      %v212 = vld [vmem:[%s169 + $0x110] sm:$0xff]
      %v213 = vld [vmem:[%s169 + $0x118] sm:$0xff]
      %v214 = vld [vmem:[%s169 + $0x120] sm:$0xff]
      %v215 = vld [vmem:[%s169 + $0x128] sm:$0xff]
      %v216 = vld [vmem:[%s169 + $0x130] sm:$0xff]
      %v217 = vld [vmem:[%s169 + $0x138] sm:$0xff]
      %v218 = vld [vmem:[%s169 + $0x140] sm:$0xff]
      %v219 = vld [vmem:[%s169 + $0x148] sm:$0xff]
      %v220 = vld [vmem:[%s169 + $0x150] sm:$0xff]
      %v221 = vld [vmem:[%s169 + $0x158] sm:$0xff]
      %v222 = vld [vmem:[%s169 + $0x160] sm:$0xff]
      %v223 = vld [vmem:[%s169 + $0x168] sm:$0xff]
      %v224 = vld [vmem:[%s169 + $0x170] sm:$0xff]
      %v225 = vld [vmem:[%s169 + $0x178] sm:$0xff]
      %v226 = vld [vmem:[%s169 + $0x180] sm:$0xff]
      %v227 = vld [vmem:[%s169 + $0x188] sm:$0xff]
      %v228 = vld [vmem:[%s169 + $0x190] sm:$0xff]
      %v229 = vld [vmem:[%s169 + $0x198] sm:$0xff]
      %v230 = vld [vmem:[%s169 + $0x1a0] sm:$0xff]
      %v231 = vld [vmem:[%s169 + $0x1a8] sm:$0xff]
      %v232 = vld [vmem:[%s169 + $0x1b0] sm:$0xff]
      %v233 = vld [vmem:[%s169 + $0x1b8] sm:$0xff]
      %v234 = vld [vmem:[%s169 + $0x1c0] sm:$0xff]
      %v235 = vld [vmem:[%s169 + $0x1c8] sm:$0xff]
      %v236 = vld [vmem:[%s169 + $0x1d0] sm:$0xff]
      %v237 = vld [vmem:[%s169 + $0x1d8] sm:$0xff]
      %v238 = vld [vmem:[%s169 + $0x1e0] sm:$0xff]
      %v239 = vld [vmem:[%s169 + $0x1e8] sm:$0xff]
      %v240 = vld [vmem:[%s169 + $0x1f0] sm:$0xff]
      %v241 = vld [vmem:[%s169 + $0x1f8] sm:$0xff]
      %v242 = vld [vmem:[%s1] sm:$0xf]
      %v243 = vld [vmem:[%s1 + $0x4] sm:$0xf]
      %v244 = vld [vmem:[%s1 + $0x8] sm:$0xf]
      %v245 = vld [vmem:[%s1 + $0xc] sm:$0xf]
      %v246 = vld [vmem:[%s1 + $0x10] sm:$0xf]
      %v247 = vld [vmem:[%s1 + $0x14] sm:$0xf]
      %v248 = vld [vmem:[%s1 + $0x18] sm:$0xf]
      %v249 = vld [vmem:[%s1 + $0x1c] sm:$0xf]
      %v250 = vld [vmem:[%s1 + $0x20] sm:$0xf]
      %v251 = vld [vmem:[%s1 + $0x24] sm:$0xf]
      %v252 = vld [vmem:[%s1 + $0x28] sm:$0xf]
      %v253 = vld [vmem:[%s1 + $0x2c] sm:$0xf]
      %v254 = vld [vmem:[%s1 + $0x30] sm:$0xf]
      %v255 = vld [vmem:[%s1 + $0x34] sm:$0xf]
      %v256 = vld [vmem:[%s1 + $0x38] sm:$0xf]
      %v257 = vld [vmem:[%s1 + $0x3c] sm:$0xf]
      %v258 = vld [vmem:[%s1 + $0x40] sm:$0xf]
      %v259 = vld [vmem:[%s1 + $0x44] sm:$0xf]
      %v260 = vld [vmem:[%s2] sm:$0x1]
      %v262 = vperm.slane %v260, 0
      %v328 = vunpack.c.l.b16 %v178
      %v329 = vunpack.c.h.b16 %v178
      %v330 = vunpack.c.l.b16 %v179
      %v331 = vunpack.c.h.b16 %v179
      %v332 = vunpack.c.l.b16 %v180
      %v333 = vunpack.c.h.b16 %v180
      %v334 = vunpack.c.l.b16 %v181
      %v335 = vunpack.c.h.b16 %v181
      %v336 = vunpack.c.l.b16 %v182
      %v337 = vunpack.c.h.b16 %v182
      %v338 = vunpack.c.l.b16 %v183
      %v339 = vunpack.c.h.b16 %v183
      %v340 = vunpack.c.l.b16 %v184
      %v341 = vunpack.c.h.b16 %v184
      %v342 = vunpack.c.l.b16 %v185
      %v343 = vunpack.c.h.b16 %v185
      %v344 = vunpack.c.l.b16 %v186
      %v345 = vunpack.c.h.b16 %v186
      %v346 = vunpack.c.l.b16 %v187
      %v347 = vunpack.c.h.b16 %v187
      %v348 = vunpack.c.l.b16 %v188
      %v349 = vunpack.c.h.b16 %v188
      %v350 = vunpack.c.l.b16 %v189
      %v351 = vunpack.c.h.b16 %v189
      %v352 = vunpack.c.l.b16 %v190
      %v353 = vunpack.c.h.b16 %v190
      %v354 = vunpack.c.l.b16 %v191
      %v355 = vunpack.c.h.b16 %v191
      %v356 = vunpack.c.l.b16 %v192
      %v357 = vunpack.c.h.b16 %v192
      %v358 = vunpack.c.l.b16 %v193
      %v359 = vunpack.c.h.b16 %v193
      %v360 = vunpack.c.l.b16 %v194
      %v361 = vunpack.c.h.b16 %v194
      %v362 = vunpack.c.l.b16 %v195
      %v363 = vunpack.c.h.b16 %v195
      %v364 = vunpack.c.l.b16 %v196
      %v365 = vunpack.c.h.b16 %v196
      %v366 = vunpack.c.l.b16 %v197
      %v367 = vunpack.c.h.b16 %v197
      %v368 = vunpack.c.l.b16 %v198
      %v369 = vunpack.c.h.b16 %v198
      %v370 = vunpack.c.l.b16 %v199
      %v371 = vunpack.c.h.b16 %v199
      %v372 = vunpack.c.l.b16 %v200
      %v373 = vunpack.c.h.b16 %v200
      %v374 = vunpack.c.l.b16 %v201
      %v375 = vunpack.c.h.b16 %v201
      %v376 = vunpack.c.l.b16 %v202
      %v377 = vunpack.c.h.b16 %v202
      %v378 = vunpack.c.l.b16 %v203
      %v379 = vunpack.c.h.b16 %v203
      %v380 = vunpack.c.l.b16 %v204
      %v381 = vunpack.c.h.b16 %v204
      %v382 = vunpack.c.l.b16 %v205
      %v383 = vunpack.c.h.b16 %v205
      %v384 = vunpack.c.l.b16 %v206
      %v385 = vunpack.c.h.b16 %v206
      %v386 = vunpack.c.l.b16 %v207
      %v387 = vunpack.c.h.b16 %v207
      %v388 = vunpack.c.l.b16 %v208
      %v389 = vunpack.c.h.b16 %v208
      %v390 = vunpack.c.l.b16 %v209
      %v391 = vunpack.c.h.b16 %v209
      %v392 = vunpack.c.l.b16 %v210
      %v393 = vunpack.c.h.b16 %v210
      %v394 = vunpack.c.l.b16 %v211
      %v395 = vunpack.c.h.b16 %v211
      %v396 = vunpack.c.l.b16 %v212
      %v397 = vunpack.c.h.b16 %v212
      %v398 = vunpack.c.l.b16 %v213
      %v399 = vunpack.c.h.b16 %v213
      %v400 = vunpack.c.l.b16 %v214
      %v401 = vunpack.c.h.b16 %v214
      %v402 = vunpack.c.l.b16 %v215
      %v403 = vunpack.c.h.b16 %v215
      %v404 = vunpack.c.l.b16 %v216
      %v405 = vunpack.c.h.b16 %v216
      %v406 = vunpack.c.l.b16 %v217
      %v407 = vunpack.c.h.b16 %v217
      %v408 = vunpack.c.l.b16 %v218
      %v409 = vunpack.c.h.b16 %v218
      %v410 = vunpack.c.l.b16 %v219
      %v411 = vunpack.c.h.b16 %v219
      %v412 = vunpack.c.l.b16 %v220
      %v413 = vunpack.c.h.b16 %v220
      %v414 = vunpack.c.l.b16 %v221
      %v415 = vunpack.c.h.b16 %v221
      %v416 = vunpack.c.l.b16 %v222
      %v417 = vunpack.c.h.b16 %v222
      %v418 = vunpack.c.l.b16 %v223
      %v419 = vunpack.c.h.b16 %v223
      %v420 = vunpack.c.l.b16 %v224
      %v421 = vunpack.c.h.b16 %v224
      %v422 = vunpack.c.l.b16 %v225
      %v423 = vunpack.c.h.b16 %v225
      %v424 = vunpack.c.l.b16 %v226
      %v425 = vunpack.c.h.b16 %v226
      %v426 = vunpack.c.l.b16 %v227
      %v427 = vunpack.c.h.b16 %v227
      %v428 = vunpack.c.l.b16 %v228
      %v429 = vunpack.c.h.b16 %v228
      %v430 = vunpack.c.l.b16 %v229
      %v431 = vunpack.c.h.b16 %v229
      %v432 = vunpack.c.l.b16 %v230
      %v433 = vunpack.c.h.b16 %v230
      %v434 = vunpack.c.l.b16 %v231
      %v435 = vunpack.c.h.b16 %v231
      %v436 = vunpack.c.l.b16 %v232
      %v437 = vunpack.c.h.b16 %v232
      %v438 = vunpack.c.l.b16 %v233
      %v439 = vunpack.c.h.b16 %v233
      %v440 = vunpack.c.l.b16 %v234
      %v441 = vunpack.c.h.b16 %v234
      %v442 = vunpack.c.l.b16 %v235
      %v443 = vunpack.c.h.b16 %v235
      %v444 = vunpack.c.l.b16 %v236
      %v445 = vunpack.c.h.b16 %v236
      %v446 = vunpack.c.l.b16 %v237
      %v447 = vunpack.c.h.b16 %v237
      %v448 = vunpack.c.l.b16 %v238
      %v449 = vunpack.c.h.b16 %v238
      %v450 = vunpack.c.l.b16 %v239
      %v451 = vunpack.c.h.b16 %v239
      %v452 = vunpack.c.l.b16 %v240
      %v453 = vunpack.c.h.b16 %v240
      %v454 = vunpack.c.l.b16 %v241
      %v455 = vunpack.c.h.b16 %v241
      %v456 = vpack.c.b16 %v330, %v328
      %v457 = vpack.c.b16 %v331, %v329
      %v458 = vpack.c.b16 %v334, %v332
      %v459 = vpack.c.b16 %v335, %v333
      %v460 = vpack.c.b16 %v338, %v336
      %v461 = vpack.c.b16 %v339, %v337
      %v462 = vpack.c.b16 %v342, %v340
      %v463 = vpack.c.b16 %v343, %v341
      %v464 = vpack.c.b16 %v346, %v344
      %v465 = vpack.c.b16 %v347, %v345
      %v466 = vpack.c.b16 %v350, %v348
      %v467 = vpack.c.b16 %v351, %v349
      %v468 = vpack.c.b16 %v354, %v352
      %v469 = vpack.c.b16 %v355, %v353
      %v470 = vpack.c.b16 %v358, %v356
      %v471 = vpack.c.b16 %v359, %v357
      %v472 = vpack.c.b16 %v362, %v360
      %v473 = vpack.c.b16 %v363, %v361
      %v474 = vpack.c.b16 %v366, %v364
      %v475 = vpack.c.b16 %v367, %v365
      %v476 = vpack.c.b16 %v370, %v368
      %v477 = vpack.c.b16 %v371, %v369
      %v478 = vpack.c.b16 %v374, %v372
      %v479 = vpack.c.b16 %v375, %v373
      %v480 = vpack.c.b16 %v378, %v376
      %v481 = vpack.c.b16 %v379, %v377
      %v482 = vpack.c.b16 %v382, %v380
      %v483 = vpack.c.b16 %v383, %v381
      %v484 = vpack.c.b16 %v386, %v384
      %v485 = vpack.c.b16 %v387, %v385
      %v486 = vpack.c.b16 %v390, %v388
      %v487 = vpack.c.b16 %v391, %v389
      %v488 = vpack.c.b16 %v394, %v392
      %v489 = vpack.c.b16 %v395, %v393
      %v490 = vpack.c.b16 %v398, %v396
      %v491 = vpack.c.b16 %v399, %v397
      %v492 = vpack.c.b16 %v402, %v400
      %v493 = vpack.c.b16 %v403, %v401
      %v494 = vpack.c.b16 %v406, %v404
      %v495 = vpack.c.b16 %v407, %v405
      %v496 = vpack.c.b16 %v410, %v408
      %v497 = vpack.c.b16 %v411, %v409
      %v498 = vpack.c.b16 %v414, %v412
      %v499 = vpack.c.b16 %v415, %v413
      %v500 = vpack.c.b16 %v418, %v416
      %v501 = vpack.c.b16 %v419, %v417
      %v502 = vpack.c.b16 %v422, %v420
      %v503 = vpack.c.b16 %v423, %v421
      %v504 = vpack.c.b16 %v426, %v424
      %v505 = vpack.c.b16 %v427, %v425
      %v506 = vpack.c.b16 %v430, %v428
      %v507 = vpack.c.b16 %v431, %v429
      %v508 = vpack.c.b16 %v434, %v432
      %v509 = vpack.c.b16 %v435, %v433
      %v510 = vpack.c.b16 %v438, %v436
      %v511 = vpack.c.b16 %v439, %v437
      %v512 = vpack.c.b16 %v442, %v440
      %v513 = vpack.c.b16 %v443, %v441
      %v514 = vpack.c.b16 %v446, %v444
      %v515 = vpack.c.b16 %v447, %v445
      %v516 = vpack.c.b16 %v450, %v448
      %v517 = vpack.c.b16 %v451, %v449
      %v518 = vpack.c.b16 %v454, %v452
      %v519 = vpack.c.b16 %v455, %v453
      %v570 = vunpack.c.l.b16 %v242
      %v571 = vunpack.c.l.b16 %v243
      %v572 = vunpack.c.l.b16 %v244
      %v573 = vunpack.c.l.b16 %v245
      %v574 = vunpack.c.l.b16 %v246
      %v575 = vunpack.c.l.b16 %v247
      %v576 = vunpack.c.l.b16 %v248
      %v577 = vunpack.c.l.b16 %v249
      %v578 = vunpack.c.l.b16 %v250
      %v579 = vunpack.c.l.b16 %v251
      %v580 = vunpack.c.l.b16 %v252
      %v581 = vunpack.c.l.b16 %v253
      %v582 = vunpack.c.l.b16 %v254
      %v583 = vunpack.c.l.b16 %v255
      %v584 = vunpack.c.l.b16 %v256
      %v585 = vunpack.c.l.b16 %v257
      %v586 = vunpack.c.l.b16 %v258
      %v587 = vunpack.c.l.b16 %v259
      %v588 = vpack.c.b16 %v571, %v570
      %v589 = vpack.c.b16 %v573, %v572
      %v590 = vpack.c.b16 %v575, %v574
      %v591 = vpack.c.b16 %v577, %v576
      %v592 = vpack.c.b16 %v579, %v578
      %v593 = vpack.c.b16 %v581, %v580
      %v594 = vpack.c.b16 %v583, %v582
      %v595 = vpack.c.b16 %v585, %v584
      %v596 = vpack.c.b16 %v587, %v586
      %vm606 = vcmask 130048
      %v608 = vsel %vm606, %v457, 0
      %v611 = vsel %vm606, %v459, 0
      %v614 = vsel %vm606, %v461, 0
      %v617 = vsel %vm606, %v463, 0
      %v620 = vsel %vm606, %v465, 0
      %v623 = vsel %vm606, %v467, 0
      %v626 = vsel %vm606, %v469, 0
      %v629 = vsel %vm606, %v471, 0
      %v632 = vsel %vm606, %v473, 0
      %v635 = vsel %vm606, %v475, 0
      %v638 = vsel %vm606, %v477, 0
      %v641 = vsel %vm606, %v479, 0
      %v644 = vsel %vm606, %v481, 0
      %v647 = vsel %vm606, %v483, 0
      %v650 = vsel %vm606, %v485, 0
      %v653 = vsel %vm606, %v487, 0
      %v656 = vsel %vm606, %v489, 0
      %v659 = vsel %vm606, %v491, 0
      %v662 = vsel %vm606, %v493, 0
      %v665 = vsel %vm606, %v495, 0
      %v668 = vsel %vm606, %v497, 0
      %v671 = vsel %vm606, %v499, 0
      %v674 = vsel %vm606, %v501, 0
      %v677 = vsel %vm606, %v503, 0
      %v680 = vsel %vm606, %v505, 0
      %v683 = vsel %vm606, %v507, 0
      %v686 = vsel %vm606, %v509, 0
      %v689 = vsel %vm606, %v511, 0
      %v692 = vsel %vm606, %v513, 0
      %v695 = vsel %vm606, %v515, 0
      %v698 = vsel %vm606, %v517, 0
      %v701 = vsel %vm606, %v519, 0
      %703 = vmatpush.bf16.msra.mxu0 %v595
      %704 = vmatpush.bf16.msra.mxu0 %v594
      %705 = vmatpush.bf16.msra.mxu0 %v593
      %706 = vmatpush.bf16.msra.mxu0 %v592
      %707 = vmatpush.bf16.msra.mxu0 %v591
      %708 = vmatpush.bf16.msra.mxu0 %v590
      %709 = vmatpush.bf16.msra.mxu0 %v589
      %710 = vmatpush.bf16.msra.mxu0 %v588
      %711 = vmatmul.bf16.gmra.mxu0 %v456
      %v712 = vpop.f32.mrf.mxu0
      %v713 = vadd.f32 %v262, %v712
      %v714 = vpop.f32.mrf.mxu0
      %v715 = vadd.f32 %v262, %v714
      %716 = vmatmul.bf16.gmra.mxu0 %v458
      %v717 = vpop.f32.mrf.mxu0
      %v718 = vadd.f32 %v262, %v717
      %v719 = vpop.f32.mrf.mxu0
      %v720 = vadd.f32 %v262, %v719
      %721 = vmatmul.bf16.gmra.mxu0 %v460
      %v722 = vpop.f32.mrf.mxu0
      %v723 = vadd.f32 %v262, %v722
      %v724 = vpop.f32.mrf.mxu0
      %v725 = vadd.f32 %v262, %v724
      %726 = vmatmul.bf16.gmra.mxu0 %v462
      %v727 = vpop.f32.mrf.mxu0
      %v728 = vadd.f32 %v262, %v727
      %v729 = vpop.f32.mrf.mxu0
      %v730 = vadd.f32 %v262, %v729
      %731 = vmatmul.bf16.gmra.mxu0 %v464
      %v732 = vpop.f32.mrf.mxu0
      %v733 = vadd.f32 %v262, %v732
      %v734 = vpop.f32.mrf.mxu0
      %v735 = vadd.f32 %v262, %v734
      %736 = vmatmul.bf16.gmra.mxu0 %v466
      %v737 = vpop.f32.mrf.mxu0
      %v738 = vadd.f32 %v262, %v737
      %v739 = vpop.f32.mrf.mxu0
      %v740 = vadd.f32 %v262, %v739
      %741 = vmatmul.bf16.gmra.mxu0 %v468
      %v742 = vpop.f32.mrf.mxu0
      %v743 = vadd.f32 %v262, %v742
      %v744 = vpop.f32.mrf.mxu0
      %v745 = vadd.f32 %v262, %v744
      %746 = vmatmul.bf16.gmra.mxu0 %v470
      %v747 = vpop.f32.mrf.mxu0
      %v748 = vadd.f32 %v262, %v747
      %v749 = vpop.f32.mrf.mxu0
      %v750 = vadd.f32 %v262, %v749
      %751 = vmatmul.bf16.gmra.mxu0 %v472
      %v752 = vpop.f32.mrf.mxu0
      %v753 = vadd.f32 %v262, %v752
      %v754 = vpop.f32.mrf.mxu0
      %v755 = vadd.f32 %v262, %v754
      %756 = vmatmul.bf16.gmra.mxu0 %v474
      %v757 = vpop.f32.mrf.mxu0
      %v758 = vadd.f32 %v262, %v757
      %v759 = vpop.f32.mrf.mxu0
      %v760 = vadd.f32 %v262, %v759
      %761 = vmatmul.bf16.gmra.mxu0 %v476
      %v762 = vpop.f32.mrf.mxu0
      %v763 = vadd.f32 %v262, %v762
      %v764 = vpop.f32.mrf.mxu0
      %v765 = vadd.f32 %v262, %v764
      %766 = vmatmul.bf16.gmra.mxu0 %v478
      %v767 = vpop.f32.mrf.mxu0
      %v768 = vadd.f32 %v262, %v767
      %v769 = vpop.f32.mrf.mxu0
      %v770 = vadd.f32 %v262, %v769
      %771 = vmatmul.bf16.gmra.mxu0 %v480
      %v772 = vpop.f32.mrf.mxu0
      %v773 = vadd.f32 %v262, %v772
      %v774 = vpop.f32.mrf.mxu0
      %v775 = vadd.f32 %v262, %v774
      %776 = vmatmul.bf16.gmra.mxu0 %v482
      %v777 = vpop.f32.mrf.mxu0
      %v778 = vadd.f32 %v262, %v777
      %v779 = vpop.f32.mrf.mxu0
      %v780 = vadd.f32 %v262, %v779
      %781 = vmatmul.bf16.gmra.mxu0 %v484
      %v782 = vpop.f32.mrf.mxu0
      %v783 = vadd.f32 %v262, %v782
      %v784 = vpop.f32.mrf.mxu0
      %v785 = vadd.f32 %v262, %v784
      %786 = vmatmul.bf16.gmra.mxu0 %v486
      %v787 = vpop.f32.mrf.mxu0
      %v788 = vadd.f32 %v262, %v787
      %v789 = vpop.f32.mrf.mxu0
      %v790 = vadd.f32 %v262, %v789
      %791 = vmatmul.bf16.gmra.mxu0 %v488
      %v792 = vpop.f32.mrf.mxu0
      %v793 = vadd.f32 %v262, %v792
      %v794 = vpop.f32.mrf.mxu0
      %v795 = vadd.f32 %v262, %v794
      %796 = vmatmul.bf16.gmra.mxu0 %v490
      %v797 = vpop.f32.mrf.mxu0
      %v798 = vadd.f32 %v262, %v797
      %v799 = vpop.f32.mrf.mxu0
      %v800 = vadd.f32 %v262, %v799
      %801 = vmatmul.bf16.gmra.mxu0 %v492
      %v802 = vpop.f32.mrf.mxu0
      %v803 = vadd.f32 %v262, %v802
      %v804 = vpop.f32.mrf.mxu0
      %v805 = vadd.f32 %v262, %v804
      %806 = vmatmul.bf16.gmra.mxu0 %v494
      %v807 = vpop.f32.mrf.mxu0
      %v808 = vadd.f32 %v262, %v807
      %v809 = vpop.f32.mrf.mxu0
      %v810 = vadd.f32 %v262, %v809
      %811 = vmatmul.bf16.gmra.mxu0 %v496
      %v812 = vpop.f32.mrf.mxu0
      %v813 = vadd.f32 %v262, %v812
      %v814 = vpop.f32.mrf.mxu0
      %v815 = vadd.f32 %v262, %v814
      %816 = vmatmul.bf16.gmra.mxu0 %v498
      %v817 = vpop.f32.mrf.mxu0
      %v818 = vadd.f32 %v262, %v817
      %v819 = vpop.f32.mrf.mxu0
      %v820 = vadd.f32 %v262, %v819
      %821 = vmatmul.bf16.gmra.mxu0 %v500
      %v822 = vpop.f32.mrf.mxu0
      %v823 = vadd.f32 %v262, %v822
      %v824 = vpop.f32.mrf.mxu0
      %v825 = vadd.f32 %v262, %v824
      %826 = vmatmul.bf16.gmra.mxu0 %v502
      %v827 = vpop.f32.mrf.mxu0
      %v828 = vadd.f32 %v262, %v827
      %v829 = vpop.f32.mrf.mxu0
      %v830 = vadd.f32 %v262, %v829
      %831 = vmatmul.bf16.gmra.mxu0 %v504
      %v832 = vpop.f32.mrf.mxu0
      %v833 = vadd.f32 %v262, %v832
      %v834 = vpop.f32.mrf.mxu0
      %v835 = vadd.f32 %v262, %v834
      %836 = vmatmul.bf16.gmra.mxu0 %v506
      %v837 = vpop.f32.mrf.mxu0
      %v838 = vadd.f32 %v262, %v837
      %v839 = vpop.f32.mrf.mxu0
      %v840 = vadd.f32 %v262, %v839
      %841 = vmatmul.bf16.gmra.mxu0 %v508
      %v842 = vpop.f32.mrf.mxu0
      %v843 = vadd.f32 %v262, %v842
      %v844 = vpop.f32.mrf.mxu0
      %v845 = vadd.f32 %v262, %v844
      %846 = vmatmul.bf16.gmra.mxu0 %v510
      %v847 = vpop.f32.mrf.mxu0
      %v848 = vadd.f32 %v262, %v847
      %v849 = vpop.f32.mrf.mxu0
      %v850 = vadd.f32 %v262, %v849
      %851 = vmatmul.bf16.gmra.mxu0 %v512
      %v852 = vpop.f32.mrf.mxu0
      %v853 = vadd.f32 %v262, %v852
      %v854 = vpop.f32.mrf.mxu0
      %v855 = vadd.f32 %v262, %v854
      %856 = vmatmul.bf16.gmra.mxu0 %v514
      %v857 = vpop.f32.mrf.mxu0
      %v858 = vadd.f32 %v262, %v857
      %v859 = vpop.f32.mrf.mxu0
      %v860 = vadd.f32 %v262, %v859
      %861 = vmatmul.bf16.gmra.mxu0 %v516
      %v862 = vpop.f32.mrf.mxu0
      %v863 = vadd.f32 %v262, %v862
      %v864 = vpop.f32.mrf.mxu0
      %v865 = vadd.f32 %v262, %v864
      %866 = vmatmul.bf16.gmra.mxu0 %v518
      %v867 = vpop.f32.mrf.mxu0
      %v868 = vadd.f32 %v262, %v867
      %v869 = vpop.f32.mrf.mxu0
      %v870 = vadd.f32 %v262, %v869
      %871 = vdwg.mxu0
      %872 = vmatpush.bf16.msra.mxu0 0
      %873 = vmatpush.bf16.msra.mxu0 0
      %874 = vmatpush.bf16.msra.mxu0 0
      %875 = vmatpush.bf16.msra.mxu0 0
      %876 = vmatpush.bf16.msra.mxu0 0
      %877 = vmatpush.bf16.msra.mxu0 0
      %878 = vmatpush.bf16.msra.mxu0 0
      %879 = vmatpush.bf16.msra.mxu0 %v596
      %880 = vmatmul.bf16.gmra.mxu0 %v608
      %v881 = vpop.f32.mrf.mxu0
      %v882 = vadd.f32 %v713, %v881
      %v883 = vpop.f32.mrf.mxu0
      %v884 = vadd.f32 %v715, %v883
      %885 = vmatmul.bf16.gmra.mxu0 %v611
      %v886 = vpop.f32.mrf.mxu0
      %v887 = vadd.f32 %v718, %v886
      %v888 = vpop.f32.mrf.mxu0
      %v889 = vadd.f32 %v720, %v888
      %890 = vmatmul.bf16.gmra.mxu0 %v614
      %v891 = vpop.f32.mrf.mxu0
      %v892 = vadd.f32 %v723, %v891
      %v893 = vpop.f32.mrf.mxu0
      %v894 = vadd.f32 %v725, %v893
      %895 = vmatmul.bf16.gmra.mxu0 %v617
      %v896 = vpop.f32.mrf.mxu0
      %v897 = vadd.f32 %v728, %v896
      %v898 = vpop.f32.mrf.mxu0
      %v899 = vadd.f32 %v730, %v898
      %900 = vmatmul.bf16.gmra.mxu0 %v620
      %v901 = vpop.f32.mrf.mxu0
      %v902 = vadd.f32 %v733, %v901
      %v903 = vpop.f32.mrf.mxu0
      %v904 = vadd.f32 %v735, %v903
      %905 = vmatmul.bf16.gmra.mxu0 %v623
      %v906 = vpop.f32.mrf.mxu0
      %v907 = vadd.f32 %v738, %v906
      %v908 = vpop.f32.mrf.mxu0
      %v909 = vadd.f32 %v740, %v908
      %910 = vmatmul.bf16.gmra.mxu0 %v626
      %v911 = vpop.f32.mrf.mxu0
      %v912 = vadd.f32 %v743, %v911
      %v913 = vpop.f32.mrf.mxu0
      %v914 = vadd.f32 %v745, %v913
      %915 = vmatmul.bf16.gmra.mxu0 %v629
      %v916 = vpop.f32.mrf.mxu0
      %v917 = vadd.f32 %v748, %v916
      %v918 = vpop.f32.mrf.mxu0
      %v919 = vadd.f32 %v750, %v918
      %920 = vmatmul.bf16.gmra.mxu0 %v632
      %v921 = vpop.f32.mrf.mxu0
      %v922 = vadd.f32 %v753, %v921
      %v923 = vpop.f32.mrf.mxu0
      %v924 = vadd.f32 %v755, %v923
      %925 = vmatmul.bf16.gmra.mxu0 %v635
      %v926 = vpop.f32.mrf.mxu0
      %v927 = vadd.f32 %v758, %v926
      %v928 = vpop.f32.mrf.mxu0
      %v929 = vadd.f32 %v760, %v928
      %930 = vmatmul.bf16.gmra.mxu0 %v638
      %v931 = vpop.f32.mrf.mxu0
      %v932 = vadd.f32 %v763, %v931
      %v933 = vpop.f32.mrf.mxu0
      %v934 = vadd.f32 %v765, %v933
      %935 = vmatmul.bf16.gmra.mxu0 %v641
      %v936 = vpop.f32.mrf.mxu0
      %v937 = vadd.f32 %v768, %v936
      %v938 = vpop.f32.mrf.mxu0
      %v939 = vadd.f32 %v770, %v938
      %940 = vmatmul.bf16.gmra.mxu0 %v644
      %v941 = vpop.f32.mrf.mxu0
      %v942 = vadd.f32 %v773, %v941
      %v943 = vpop.f32.mrf.mxu0
      %v944 = vadd.f32 %v775, %v943
      %945 = vmatmul.bf16.gmra.mxu0 %v647
      %v946 = vpop.f32.mrf.mxu0
      %v947 = vadd.f32 %v778, %v946
      %v948 = vpop.f32.mrf.mxu0
      %v949 = vadd.f32 %v780, %v948
      %950 = vmatmul.bf16.gmra.mxu0 %v650
      %v951 = vpop.f32.mrf.mxu0
      %v952 = vadd.f32 %v783, %v951
      %v953 = vpop.f32.mrf.mxu0
      %v954 = vadd.f32 %v785, %v953
      %955 = vmatmul.bf16.gmra.mxu0 %v653
      %v956 = vpop.f32.mrf.mxu0
      %v957 = vadd.f32 %v788, %v956
      %v958 = vpop.f32.mrf.mxu0
      %v959 = vadd.f32 %v790, %v958
      %960 = vmatmul.bf16.gmra.mxu0 %v656
      %v961 = vpop.f32.mrf.mxu0
      %v962 = vadd.f32 %v793, %v961
      %v963 = vpop.f32.mrf.mxu0
      %v964 = vadd.f32 %v795, %v963
      %965 = vmatmul.bf16.gmra.mxu0 %v659
      %v966 = vpop.f32.mrf.mxu0
      %v967 = vadd.f32 %v798, %v966
      %v968 = vpop.f32.mrf.mxu0
      %v969 = vadd.f32 %v800, %v968
      %970 = vmatmul.bf16.gmra.mxu0 %v662
      %v971 = vpop.f32.mrf.mxu0
      %v972 = vadd.f32 %v803, %v971
      %v973 = vpop.f32.mrf.mxu0
      %v974 = vadd.f32 %v805, %v973
      %975 = vmatmul.bf16.gmra.mxu0 %v665
      %v976 = vpop.f32.mrf.mxu0
      %v977 = vadd.f32 %v808, %v976
      %v978 = vpop.f32.mrf.mxu0
      %v979 = vadd.f32 %v810, %v978
      %980 = vmatmul.bf16.gmra.mxu0 %v668
      %v981 = vpop.f32.mrf.mxu0
      %v982 = vadd.f32 %v813, %v981
      %v983 = vpop.f32.mrf.mxu0
      %v984 = vadd.f32 %v815, %v983
      %985 = vmatmul.bf16.gmra.mxu0 %v671
      %v986 = vpop.f32.mrf.mxu0
      %v987 = vadd.f32 %v818, %v986
      %v988 = vpop.f32.mrf.mxu0
      %v989 = vadd.f32 %v820, %v988
      %990 = vmatmul.bf16.gmra.mxu0 %v674
      %v991 = vpop.f32.mrf.mxu0
      %v992 = vadd.f32 %v823, %v991
      %v993 = vpop.f32.mrf.mxu0
      %v994 = vadd.f32 %v825, %v993
      %995 = vmatmul.bf16.gmra.mxu0 %v677
      %v996 = vpop.f32.mrf.mxu0
      %v997 = vadd.f32 %v828, %v996
      %v998 = vpop.f32.mrf.mxu0
      %v999 = vadd.f32 %v830, %v998
      %1000 = vmatmul.bf16.gmra.mxu0 %v680
      %v1001 = vpop.f32.mrf.mxu0
      %v1002 = vadd.f32 %v833, %v1001
      %v1003 = vpop.f32.mrf.mxu0
      %v1004 = vadd.f32 %v835, %v1003
      %1005 = vmatmul.bf16.gmra.mxu0 %v683
      %v1006 = vpop.f32.mrf.mxu0
      %v1007 = vadd.f32 %v838, %v1006
      %v1008 = vpop.f32.mrf.mxu0
      %v1009 = vadd.f32 %v840, %v1008
      %1010 = vmatmul.bf16.gmra.mxu0 %v686
      %v1011 = vpop.f32.mrf.mxu0
      %v1012 = vadd.f32 %v843, %v1011
      %v1013 = vpop.f32.mrf.mxu0
      %v1014 = vadd.f32 %v845, %v1013
      %1015 = vmatmul.bf16.gmra.mxu0 %v689
      %v1016 = vpop.f32.mrf.mxu0
      %v1017 = vadd.f32 %v848, %v1016
      %v1018 = vpop.f32.mrf.mxu0
      %v1019 = vadd.f32 %v850, %v1018
      %1020 = vmatmul.bf16.gmra.mxu0 %v692
      %v1021 = vpop.f32.mrf.mxu0
      %v1022 = vadd.f32 %v853, %v1021
      %v1023 = vpop.f32.mrf.mxu0
      %v1024 = vadd.f32 %v855, %v1023
      %1025 = vmatmul.bf16.gmra.mxu0 %v695
      %v1026 = vpop.f32.mrf.mxu0
      %v1027 = vadd.f32 %v858, %v1026
      %v1028 = vpop.f32.mrf.mxu0
      %v1029 = vadd.f32 %v860, %v1028
      %1030 = vmatmul.bf16.gmra.mxu0 %v698
      %v1031 = vpop.f32.mrf.mxu0
      %v1032 = vadd.f32 %v863, %v1031
      %v1033 = vpop.f32.mrf.mxu0
      %v1034 = vadd.f32 %v865, %v1033
      %1035 = vmatmul.bf16.gmra.mxu0 %v701
      %v1036 = vpop.f32.mrf.mxu0
      %v1037 = vadd.f32 %v868, %v1036
      %v1038 = vpop.f32.mrf.mxu0
      %v1039 = vadd.f32 %v870, %v1038
      %1040 = vdwg.mxu0
      %1041 = vst.msk [vmem:[%s175] sm:$0xff] %vm606, %v882
      %1042 = vst.msk [vmem:[%s175 + $0x8] sm:$0xff] %vm606, %v884
      %1043 = vst.msk [vmem:[%s175 + $0x10] sm:$0xff] %vm606, %v887
      %1044 = vst.msk [vmem:[%s175 + $0x18] sm:$0xff] %vm606, %v889
      %1045 = vst.msk [vmem:[%s175 + $0x20] sm:$0xff] %vm606, %v892
      %1046 = vst.msk [vmem:[%s175 + $0x28] sm:$0xff] %vm606, %v894
      %1047 = vst.msk [vmem:[%s175 + $0x30] sm:$0xff] %vm606, %v897
      %1048 = vst.msk [vmem:[%s175 + $0x38] sm:$0xff] %vm606, %v899
      %1049 = vst.msk [vmem:[%s175 + $0x40] sm:$0xff] %vm606, %v902
      %1050 = vst.msk [vmem:[%s175 + $0x48] sm:$0xff] %vm606, %v904
      %1051 = vst.msk [vmem:[%s175 + $0x50] sm:$0xff] %vm606, %v907
      %1052 = vst.msk [vmem:[%s175 + $0x58] sm:$0xff] %vm606, %v909
      %1053 = vst.msk [vmem:[%s175 + $0x60] sm:$0xff] %vm606, %v912
      %1054 = vst.msk [vmem:[%s175 + $0x68] sm:$0xff] %vm606, %v914
      %1055 = vst.msk [vmem:[%s175 + $0x70] sm:$0xff] %vm606, %v917
      %1056 = vst.msk [vmem:[%s175 + $0x78] sm:$0xff] %vm606, %v919
      %1057 = vst.msk [vmem:[%s175 + $0x80] sm:$0xff] %vm606, %v922
      %1058 = vst.msk [vmem:[%s175 + $0x88] sm:$0xff] %vm606, %v924
      %1059 = vst.msk [vmem:[%s175 + $0x90] sm:$0xff] %vm606, %v927
      %1060 = vst.msk [vmem:[%s175 + $0x98] sm:$0xff] %vm606, %v929
      %1061 = vst.msk [vmem:[%s175 + $0xa0] sm:$0xff] %vm606, %v932
      %1062 = vst.msk [vmem:[%s175 + $0xa8] sm:$0xff] %vm606, %v934
      %1063 = vst.msk [vmem:[%s175 + $0xb0] sm:$0xff] %vm606, %v937
      %1064 = vst.msk [vmem:[%s175 + $0xb8] sm:$0xff] %vm606, %v939
      %1065 = vst.msk [vmem:[%s175 + $0xc0] sm:$0xff] %vm606, %v942
      %1066 = vst.msk [vmem:[%s175 + $0xc8] sm:$0xff] %vm606, %v944
      %1067 = vst.msk [vmem:[%s175 + $0xd0] sm:$0xff] %vm606, %v947
      %1068 = vst.msk [vmem:[%s175 + $0xd8] sm:$0xff] %vm606, %v949
      %1069 = vst.msk [vmem:[%s175 + $0xe0] sm:$0xff] %vm606, %v952
      %1070 = vst.msk [vmem:[%s175 + $0xe8] sm:$0xff] %vm606, %v954
      %1071 = vst.msk [vmem:[%s175 + $0xf0] sm:$0xff] %vm606, %v957
      %1072 = vst.msk [vmem:[%s175 + $0xf8] sm:$0xff] %vm606, %v959
      %1073 = vst.msk [vmem:[%s175 + $0x100] sm:$0xff] %vm606, %v962
      %1074 = vst.msk [vmem:[%s175 + $0x108] sm:$0xff] %vm606, %v964
      %1075 = vst.msk [vmem:[%s175 + $0x110] sm:$0xff] %vm606, %v967
      %1076 = vst.msk [vmem:[%s175 + $0x118] sm:$0xff] %vm606, %v969
      %1077 = vst.msk [vmem:[%s175 + $0x120] sm:$0xff] %vm606, %v972
      %1078 = vst.msk [vmem:[%s175 + $0x128] sm:$0xff] %vm606, %v974
      %1079 = vst.msk [vmem:[%s175 + $0x130] sm:$0xff] %vm606, %v977
      %1080 = vst.msk [vmem:[%s175 + $0x138] sm:$0xff] %vm606, %v979
      %1081 = vst.msk [vmem:[%s175 + $0x140] sm:$0xff] %vm606, %v982
      %1082 = vst.msk [vmem:[%s175 + $0x148] sm:$0xff] %vm606, %v984
      %1083 = vst.msk [vmem:[%s175 + $0x150] sm:$0xff] %vm606, %v987
      %1084 = vst.msk [vmem:[%s175 + $0x158] sm:$0xff] %vm606, %v989
      %1085 = vst.msk [vmem:[%s175 + $0x160] sm:$0xff] %vm606, %v992
      %1086 = vst.msk [vmem:[%s175 + $0x168] sm:$0xff] %vm606, %v994
      %1087 = vst.msk [vmem:[%s175 + $0x170] sm:$0xff] %vm606, %v997
      %1088 = vst.msk [vmem:[%s175 + $0x178] sm:$0xff] %vm606, %v999
      %1089 = vst.msk [vmem:[%s175 + $0x180] sm:$0xff] %vm606, %v1002
      %1090 = vst.msk [vmem:[%s175 + $0x188] sm:$0xff] %vm606, %v1004
      %1091 = vst.msk [vmem:[%s175 + $0x190] sm:$0xff] %vm606, %v1007
      %1092 = vst.msk [vmem:[%s175 + $0x198] sm:$0xff] %vm606, %v1009
      %1093 = vst.msk [vmem:[%s175 + $0x1a0] sm:$0xff] %vm606, %v1012
      %1094 = vst.msk [vmem:[%s175 + $0x1a8] sm:$0xff] %vm606, %v1014
      %1095 = vst.msk [vmem:[%s175 + $0x1b0] sm:$0xff] %vm606, %v1017
      %1096 = vst.msk [vmem:[%s175 + $0x1b8] sm:$0xff] %vm606, %v1019
      %1097 = vst.msk [vmem:[%s175 + $0x1c0] sm:$0xff] %vm606, %v1022
      %1098 = vst.msk [vmem:[%s175 + $0x1c8] sm:$0xff] %vm606, %v1024
      %1099 = vst.msk [vmem:[%s175 + $0x1d0] sm:$0xff] %vm606, %v1027
      %1100 = vst.msk [vmem:[%s175 + $0x1d8] sm:$0xff] %vm606, %v1029
      %1101 = vst.msk [vmem:[%s175 + $0x1e0] sm:$0xff] %vm606, %v1032
      %1102 = vst.msk [vmem:[%s175 + $0x1e8] sm:$0xff] %vm606, %v1034
      %1103 = vst.msk [vmem:[%s175 + $0x1f0] sm:$0xff] %vm606, %v1037
      %1104 = vst.msk [vmem:[%s175 + $0x1f8] sm:$0xff] %vm606, %v1039
      %s1105 = smul.u32 64, %s14
      %p1106 = scmp.lt.s32.totalorder %s1105, 255
      %s1107 = scalar_select %p1106, %s1105, 255
      %s1108 = smul.addr %s1107, 8
      %s1109 = scalar_lea.vmem %s3, %s1108
      // Predicated region
      $region33: #{_lambda_.23} parent=31 // pred_check
        %p1110 = pneg %p100
      $region34: #{_lambda_.23} parent=31 // pred_check_branch
        %1112 = sbr.rel (%p1110) target = $region36
      $region35: #{_lambda_.23} parent=31 // pred_region
        %s1113 = smul.u32 64, %s14
      $region36: #{_lambda_.23} parent=31 // pred_fallthru
        _
    $region32: #{_lambda_.23} parent=5 // pred_fallthru
      _
    %p1114 = scmp.le.s32.totalorder 2, %s9
    // Predicated region
    $region37: #{_lambda_.23} parent=5 // pred_check
      %p1115 = pneg %p1114
    $region38: #{_lambda_.23} parent=5 // pred_check_branch
      %1117 = sbr.rel (%p1115) target = $region40
    $region39: #{_lambda_.23} parent=5 // pred_region
      %s1118 = ssub.s32 %s9, 2
      // Predicated region
      $region41: #{_lambda_.23} parent=39 // pred_check
        %p1119 = pneg %p106
      $region42: #{_lambda_.23} parent=39 // pred_check_branch
        %1121 = sbr.rel (%p1119) target = $region44
      $region43: #{_lambda_.23} parent=39 // pred_region
        %s1122 = smul.u32 64, %s15
        %p1123 = scmp.lt.s32.totalorder %s1122, 255
        %s1124 = scalar_select %p1123, %s1122, 255
        %s1125 = smul.addr %s1124, 8
        %s1126 = scalar_lea.vmem %s3, %s1125
      $region44: #{_lambda_.23} parent=39 // pred_fallthru
        _
    $region40: #{_lambda_.23} parent=5 // pred_fallthru
      _
  $region6: #{_lambda_.23} parent=0 // loop_footer
    %s13 = sadd.s32 1, %s9
  $region7: #{_lambda_.23} parent=0 // loop_footer_branch
    %8 = sbr.rel target = $region3
  $region8: #{_lambda_.23} parent=0 // loop_exit
    _

// kernel: _lambda_.27
$region0: #{_lambda_.27}
  #allocation0 [shape = 'u32[]', space=smem, size = 0x4, offset = 0x4, fixed_abs, tag = 'smem constant byte address 0x4 - core index']
  #allocation1 [shape = 'u32[72,128]{1,0:T(1,128)}', space=vmem, size = 0x9000, scoped, tag = 'internal scratch']
  %s0 = inlined_call_operand.vmem [shape: bf16[2048,16], index: 0, kind: input, shape index: {}]
  %s1 = inlined_call_operand.vmem [shape: bf16[16,16], index: 1, kind: input, shape index: {}]
  %s2 = inlined_call_operand.vmem [shape: f32[1,16], index: 2, kind: input, shape index: {}]
  %s3 = inlined_call_operand.vmem [shape: f32[2048,16], index: 3, kind: output, shape index: {}]
  %s4 = sld [smem:[#allocation0]]
  $region45: #{_lambda_.27} parent=0
    _
  %s6 = ssub.s32 1, %s4
  %s7 = scalar_select 0, %s6, %s4
  loop: start=0, step=1, limit=6
  $region2: #{_lambda_.27} parent=0 // loop_pre_header
    _
  $region3: #{_lambda_.27} parent=0 // loop_header
    %s9 = sphi 0, %s13
    %p10 = scmp.ge.s32.totalorder %s9, 6
    %s19 = sphi 0, %s21
    %s22 = sphi 0, %s19
    %s23 = sphi 0, %s22
    %s39 = sphi 0, %s23
    %s43 = sphi 0, %s43
    %s45 = sphi 0, %s43
    %s46 = sphi 0, %s45
    %s60 = sphi 0, %s46
    %s64 = sphi 0, %s64
    %s66 = sphi 0, %s64
    %s67 = sphi 0, %s66
    %s81 = sphi 0, %s67
    %s87 = sphi 0, %s89
    %s90 = sphi 0, %s87
    %s91 = sphi 0, %s90
    %s107 = sphi 0, %s91
  $region4: #{_lambda_.27} parent=0 // loop_header_branch
    %12 = sbr.rel (%p10) target = $region8
  $region5: #{_lambda_.27} parent=0 // loop_body
    %s14 = ssub.s32 %s9, 1
    %s15 = ssub.s32 %s9, 2
    %s16 = sadd.s32 %s9, 1
    %s17 = ssub.s32 %s9, %s16
    %p18 = scmp.eq.s32.totalorder %s17, 0
    %s20 = sadd.s32 %s19, 1
    %s21 = scalar_select %p18, %s19, %s20
    %p24 = pneg %p18
    %p25 = scmp.eq.s32.totalorder %s9, 3
    %p26 = por %p24, %p25
    %p27 = scmp.ne.s32.totalorder %s19, %s22
    %p28 = scmp.eq.s32.totalorder %s9, 0
    %p29 = por %p27, %p28
    %p30 = scmp.ne.s32.totalorder %s19, %s22
    %p31 = scmp.eq.s32.totalorder %s14, 3
    %p32 = por %p30, %p31
    %p33 = scmp.ne.s32.totalorder %s22, %s23
    %p34 = scmp.eq.s32.totalorder %s14, 0
    %p35 = por %p33, %p34
    %p36 = scmp.ne.s32.totalorder %s22, %s23
    %p37 = scmp.eq.s32.totalorder %s15, 3
    %p38 = por %p36, %p37
    %p40 = scmp.ne.s32.totalorder %s23, %s39
    %p41 = scmp.eq.s32.totalorder %s15, 0
    %p42 = por %p40, %p41
    %s44 = sadd.s32 %s43, 1
    %p47 = scmp.eq.s32.totalorder %s9, 3
    %p48 = scmp.ne.s32.totalorder %s43, %s45
    %p49 = scmp.eq.s32.totalorder %s9, 0
    %p50 = por %p48, %p49
    %p51 = scmp.ne.s32.totalorder %s43, %s45
    %p52 = scmp.eq.s32.totalorder %s14, 3
    %p53 = por %p51, %p52
    %p54 = scmp.ne.s32.totalorder %s45, %s46
    %p55 = scmp.eq.s32.totalorder %s14, 0
    %p56 = por %p54, %p55
    %p57 = scmp.ne.s32.totalorder %s45, %s46
    %p58 = scmp.eq.s32.totalorder %s15, 3
    %p59 = por %p57, %p58
    %p61 = scmp.ne.s32.totalorder %s46, %s60
    %p62 = scmp.eq.s32.totalorder %s15, 0
    %p63 = por %p61, %p62
    %s65 = sadd.s32 %s64, 1
    %p68 = scmp.eq.s32.totalorder %s9, 3
    %p69 = scmp.ne.s32.totalorder %s64, %s66
    %p70 = scmp.eq.s32.totalorder %s9, 0
    %p71 = por %p69, %p70
    %p72 = scmp.ne.s32.totalorder %s64, %s66
    %p73 = scmp.eq.s32.totalorder %s14, 3
    %p74 = por %p72, %p73
    %p75 = scmp.ne.s32.totalorder %s66, %s67
    %p76 = scmp.eq.s32.totalorder %s14, 0
    %p77 = por %p75, %p76
    %p78 = scmp.ne.s32.totalorder %s66, %s67
    %p79 = scmp.eq.s32.totalorder %s15, 3
    %p80 = por %p78, %p79
    %p82 = scmp.ne.s32.totalorder %s67, %s81
    %p83 = scmp.eq.s32.totalorder %s15, 0
    %p84 = por %p82, %p83
    %s85 = ssub.s32 %s9, %s16
    %p86 = scmp.eq.s32.totalorder %s85, 0
    %s88 = sadd.s32 %s87, 1
    %s89 = scalar_select %p86, %s87, %s88
    %p92 = pneg %p86
    %p93 = scmp.eq.s32.totalorder %s9, 3
    %p94 = por %p92, %p93
    %p95 = scmp.ne.s32.totalorder %s87, %s90
    %p96 = scmp.eq.s32.totalorder %s9, 0
    %p97 = por %p95, %p96
    %p98 = scmp.ne.s32.totalorder %s87, %s90
    %p99 = scmp.eq.s32.totalorder %s14, 3
    %p100 = por %p98, %p99
    %p101 = scmp.ne.s32.totalorder %s90, %s91
    %p102 = scmp.eq.s32.totalorder %s14, 0
    %p103 = por %p101, %p102
    %p104 = scmp.ne.s32.totalorder %s90, %s91
    %p105 = scmp.eq.s32.totalorder %s15, 3
    %p106 = por %p104, %p105
    %p108 = scmp.ne.s32.totalorder %s91, %s107
    %p109 = scmp.eq.s32.totalorder %s15, 0
    %p110 = por %p108, %p109
    %p111 = scmp.le.s32.totalorder 1, %s9
    %p112 = scmp.lt.s32.totalorder %s9, 5
    %p113 = pnand %p111, %p112
    %p114 = pneg %p113
    // Predicated region
    $region9: #{_lambda_.27} parent=5 // pred_check
      _
    $region10: #{_lambda_.27} parent=5 // pred_check_branch
      %116 = sbr.rel (%p113) target = $region12
    $region11: #{_lambda_.27} parent=5 // pred_region
      %s117 = ssub.s32 %s9, 1
      // Predicated region
      $region13: #{_lambda_.27} parent=11 // pred_check
        %p118 = pneg %p56
      $region14: #{_lambda_.27} parent=11 // pred_check_branch
        %120 = sbr.rel (%p118) target = $region16
      $region15: #{_lambda_.27} parent=11 // pred_region
        _
      $region16: #{_lambda_.27} parent=11 // pred_fallthru
        _
      // Predicated region
      $region17: #{_lambda_.27} parent=11 // pred_check
        %p121 = pneg %p77
      $region18: #{_lambda_.27} parent=11 // pred_check_branch
        %123 = sbr.rel (%p121) target = $region20
      $region19: #{_lambda_.27} parent=11 // pred_region
        _
      $region20: #{_lambda_.27} parent=11 // pred_fallthru
        _
    $region12: #{_lambda_.27} parent=5 // pred_fallthru
      _
    %p124 = scmp.lt.s32.totalorder %s9, 4
    // Predicated region
    $region21: #{_lambda_.27} parent=5 // pred_check
      %p125 = pneg %p124
    $region22: #{_lambda_.27} parent=5 // pred_check_branch
      %127 = sbr.rel (%p125) target = $region24
    $region23: #{_lambda_.27} parent=5 // pred_region
      // Predicated region
      $region25: #{_lambda_.27} parent=23 // pred_check
        %p128 = pneg %p29
      $region26: #{_lambda_.27} parent=23 // pred_check_branch
        %130 = sbr.rel (%p128) target = $region28
      $region27: #{_lambda_.27} parent=23 // pred_region
        %s131 = smul.u32 64, %s9
        %p132 = scmp.lt.s32.totalorder %s131, 255
        %s133 = scalar_select %p132, %s131, 255
        %s134 = smul.addr %s133, 4
        %s135 = scalar_lea.vmem %s0, %s134
        %s136 = smul.u32 64, %s9
      $region28: #{_lambda_.27} parent=23 // pred_fallthru
        _
    $region24: #{_lambda_.27} parent=5 // pred_fallthru
      _
    %p137 = scmp.le.s32.totalorder 1, %s9
    %p138 = scmp.lt.s32.totalorder %s9, 5
    %p139 = pnand %p137, %p138
    %p140 = pneg %p139
    // Predicated region
    $region29: #{_lambda_.27} parent=5 // pred_check
      _
    $region30: #{_lambda_.27} parent=5 // pred_check_branch
      %142 = sbr.rel (%p139) target = $region32
    $region31: #{_lambda_.27} parent=5 // pred_region
      %s143 = ssub.s32 %s9, 1
      %s144 = smul.u32 64, %s14
      %p145 = scmp.lt.s32.totalorder %s144, 255
      %s146 = scalar_select %p145, %s144, 255
      %s147 = smul.addr %s146, 4
      %s148 = scalar_lea.vmem %s0, %s147
      %p149 = pneg %p35
      %p150 = pneg %p32
      %p151 = pneg %p56
      %p152 = pneg %p53
      %p153 = pneg %p77
      %p154 = pneg %p74
      %p155 = pneg %p103
      %p156 = pneg %p100
      %s157 = smul.u32 64, %s14
      %p158 = scmp.lt.s32.totalorder %s157, 255
      %s159 = scalar_select %p158, %s157, 255
      %s160 = smul.addr %s159, 8
      %s161 = scalar_lea.vmem %s3, %s160
      %s162 = smul.u32 64, %s14
      %p163 = scmp.lt.s32.totalorder %s162, 255
      %s164 = scalar_select %p163, %s162, 255
      %s165 = smul.addr %s164, 4
      %s166 = scalar_lea.vmem %s0, %s165
      %s167 = smul.u32 64, %s14
      %s168 = smul.u32 64, %s14
      %p169 = scmp.lt.s32.totalorder %s168, 255
      %s170 = scalar_select %p169, %s168, 255
      %s171 = smul.addr %s170, 8
      %s172 = scalar_lea.vmem %s3, %s171
      %s173 = smul.u32 64, %s14
      %v175 = vld [vmem:[%s166] sm:$0xf]
      %v176 = vld [vmem:[%s166 + $0x4] sm:$0xf]
      %v177 = vld [vmem:[%s166 + $0x8] sm:$0xf]
      %v178 = vld [vmem:[%s166 + $0xc] sm:$0xf]
      %v179 = vld [vmem:[%s166 + $0x10] sm:$0xf]
      %v180 = vld [vmem:[%s166 + $0x14] sm:$0xf]
      %v181 = vld [vmem:[%s166 + $0x18] sm:$0xf]
      %v182 = vld [vmem:[%s166 + $0x1c] sm:$0xf]
      %v183 = vld [vmem:[%s166 + $0x20] sm:$0xf]
      %v184 = vld [vmem:[%s166 + $0x24] sm:$0xf]
      %v185 = vld [vmem:[%s166 + $0x28] sm:$0xf]
      %v186 = vld [vmem:[%s166 + $0x2c] sm:$0xf]
      %v187 = vld [vmem:[%s166 + $0x30] sm:$0xf]
      %v188 = vld [vmem:[%s166 + $0x34] sm:$0xf]
      %v189 = vld [vmem:[%s166 + $0x38] sm:$0xf]
      %v190 = vld [vmem:[%s166 + $0x3c] sm:$0xf]
      %v191 = vld [vmem:[%s166 + $0x40] sm:$0xf]
      %v192 = vld [vmem:[%s166 + $0x44] sm:$0xf]
      %v193 = vld [vmem:[%s166 + $0x48] sm:$0xf]
      %v194 = vld [vmem:[%s166 + $0x4c] sm:$0xf]
      %v195 = vld [vmem:[%s166 + $0x50] sm:$0xf]
      %v196 = vld [vmem:[%s166 + $0x54] sm:$0xf]
      %v197 = vld [vmem:[%s166 + $0x58] sm:$0xf]
      %v198 = vld [vmem:[%s166 + $0x5c] sm:$0xf]
      %v199 = vld [vmem:[%s166 + $0x60] sm:$0xf]
      %v200 = vld [vmem:[%s166 + $0x64] sm:$0xf]
      %v201 = vld [vmem:[%s166 + $0x68] sm:$0xf]
      %v202 = vld [vmem:[%s166 + $0x6c] sm:$0xf]
      %v203 = vld [vmem:[%s166 + $0x70] sm:$0xf]
      %v204 = vld [vmem:[%s166 + $0x74] sm:$0xf]
      %v205 = vld [vmem:[%s166 + $0x78] sm:$0xf]
      %v206 = vld [vmem:[%s166 + $0x7c] sm:$0xf]
      %v207 = vld [vmem:[%s166 + $0x80] sm:$0xf]
      %v208 = vld [vmem:[%s166 + $0x84] sm:$0xf]
      %v209 = vld [vmem:[%s166 + $0x88] sm:$0xf]
      %v210 = vld [vmem:[%s166 + $0x8c] sm:$0xf]
      %v211 = vld [vmem:[%s166 + $0x90] sm:$0xf]
      %v212 = vld [vmem:[%s166 + $0x94] sm:$0xf]
      %v213 = vld [vmem:[%s166 + $0x98] sm:$0xf]
      %v214 = vld [vmem:[%s166 + $0x9c] sm:$0xf]
      %v215 = vld [vmem:[%s166 + $0xa0] sm:$0xf]
      %v216 = vld [vmem:[%s166 + $0xa4] sm:$0xf]
      %v217 = vld [vmem:[%s166 + $0xa8] sm:$0xf]
      %v218 = vld [vmem:[%s166 + $0xac] sm:$0xf]
      %v219 = vld [vmem:[%s166 + $0xb0] sm:$0xf]
      %v220 = vld [vmem:[%s166 + $0xb4] sm:$0xf]
      %v221 = vld [vmem:[%s166 + $0xb8] sm:$0xf]
      %v222 = vld [vmem:[%s166 + $0xbc] sm:$0xf]
      %v223 = vld [vmem:[%s166 + $0xc0] sm:$0xf]
      %v224 = vld [vmem:[%s166 + $0xc4] sm:$0xf]
      %v225 = vld [vmem:[%s166 + $0xc8] sm:$0xf]
      %v226 = vld [vmem:[%s166 + $0xcc] sm:$0xf]
      %v227 = vld [vmem:[%s166 + $0xd0] sm:$0xf]
      %v228 = vld [vmem:[%s166 + $0xd4] sm:$0xf]
      %v229 = vld [vmem:[%s166 + $0xd8] sm:$0xf]
      %v230 = vld [vmem:[%s166 + $0xdc] sm:$0xf]
      %v231 = vld [vmem:[%s166 + $0xe0] sm:$0xf]
      %v232 = vld [vmem:[%s166 + $0xe4] sm:$0xf]
      %v233 = vld [vmem:[%s166 + $0xe8] sm:$0xf]
      %v234 = vld [vmem:[%s166 + $0xec] sm:$0xf]
      %v235 = vld [vmem:[%s166 + $0xf0] sm:$0xf]
      %v236 = vld [vmem:[%s166 + $0xf4] sm:$0xf]
      %v237 = vld [vmem:[%s166 + $0xf8] sm:$0xf]
      %v238 = vld [vmem:[%s166 + $0xfc] sm:$0xf]
      %v239 = vld [vmem:[%s1] sm:$0xf]
      %v240 = vld [vmem:[%s1 + $0x4] sm:$0xf]
      %v241 = vld [vmem:[%s2] sm:$0x1]
      %v243 = vperm.slane %v241, 0
      %v309 = vunpack.c.l.b16 %v175
      %v310 = vunpack.c.l.b16 %v176
      %v311 = vunpack.c.l.b16 %v177
      %v312 = vunpack.c.l.b16 %v178
      %v313 = vunpack.c.l.b16 %v179
      %v314 = vunpack.c.l.b16 %v180
      %v315 = vunpack.c.l.b16 %v181
      %v316 = vunpack.c.l.b16 %v182
      %v317 = vunpack.c.l.b16 %v183
      %v318 = vunpack.c.l.b16 %v184
      %v319 = vunpack.c.l.b16 %v185
      %v320 = vunpack.c.l.b16 %v186
      %v321 = vunpack.c.l.b16 %v187
      %v322 = vunpack.c.l.b16 %v188
      %v323 = vunpack.c.l.b16 %v189
      %v324 = vunpack.c.l.b16 %v190
      %v325 = vunpack.c.l.b16 %v191
      %v326 = vunpack.c.l.b16 %v192
      %v327 = vunpack.c.l.b16 %v193
      %v328 = vunpack.c.l.b16 %v194
      %v329 = vunpack.c.l.b16 %v195
      %v330 = vunpack.c.l.b16 %v196
      %v331 = vunpack.c.l.b16 %v197
      %v332 = vunpack.c.l.b16 %v198
      %v333 = vunpack.c.l.b16 %v199
      %v334 = vunpack.c.l.b16 %v200
      %v335 = vunpack.c.l.b16 %v201
      %v336 = vunpack.c.l.b16 %v202
      %v337 = vunpack.c.l.b16 %v203
      %v338 = vunpack.c.l.b16 %v204
      %v339 = vunpack.c.l.b16 %v205
      %v340 = vunpack.c.l.b16 %v206
      %v341 = vunpack.c.l.b16 %v207
      %v342 = vunpack.c.l.b16 %v208
      %v343 = vunpack.c.l.b16 %v209
      %v344 = vunpack.c.l.b16 %v210
      %v345 = vunpack.c.l.b16 %v211
      %v346 = vunpack.c.l.b16 %v212
      %v347 = vunpack.c.l.b16 %v213
      %v348 = vunpack.c.l.b16 %v214
      %v349 = vunpack.c.l.b16 %v215
      %v350 = vunpack.c.l.b16 %v216
      %v351 = vunpack.c.l.b16 %v217
      %v352 = vunpack.c.l.b16 %v218
      %v353 = vunpack.c.l.b16 %v219
      %v354 = vunpack.c.l.b16 %v220
      %v355 = vunpack.c.l.b16 %v221
      %v356 = vunpack.c.l.b16 %v222
      %v357 = vunpack.c.l.b16 %v223
      %v358 = vunpack.c.l.b16 %v224
      %v359 = vunpack.c.l.b16 %v225
      %v360 = vunpack.c.l.b16 %v226
      %v361 = vunpack.c.l.b16 %v227
      %v362 = vunpack.c.l.b16 %v228
      %v363 = vunpack.c.l.b16 %v229
      %v364 = vunpack.c.l.b16 %v230
      %v365 = vunpack.c.l.b16 %v231
      %v366 = vunpack.c.l.b16 %v232
      %v367 = vunpack.c.l.b16 %v233
      %v368 = vunpack.c.l.b16 %v234
      %v369 = vunpack.c.l.b16 %v235
      %v370 = vunpack.c.l.b16 %v236
      %v371 = vunpack.c.l.b16 %v237
      %v372 = vunpack.c.l.b16 %v238
      %v373 = vpack.c.b16 %v310, %v309
      %v374 = vpack.c.b16 %v312, %v311
      %v375 = vpack.c.b16 %v314, %v313
      %v376 = vpack.c.b16 %v316, %v315
      %v377 = vpack.c.b16 %v318, %v317
      %v378 = vpack.c.b16 %v320, %v319
      %v379 = vpack.c.b16 %v322, %v321
      %v380 = vpack.c.b16 %v324, %v323
      %v381 = vpack.c.b16 %v326, %v325
      %v382 = vpack.c.b16 %v328, %v327
      %v383 = vpack.c.b16 %v330, %v329
      %v384 = vpack.c.b16 %v332, %v331
      %v385 = vpack.c.b16 %v334, %v333
      %v386 = vpack.c.b16 %v336, %v335
      %v387 = vpack.c.b16 %v338, %v337
      %v388 = vpack.c.b16 %v340, %v339
      %v389 = vpack.c.b16 %v342, %v341
      %v390 = vpack.c.b16 %v344, %v343
      %v391 = vpack.c.b16 %v346, %v345
      %v392 = vpack.c.b16 %v348, %v347
      %v393 = vpack.c.b16 %v350, %v349
      %v394 = vpack.c.b16 %v352, %v351
      %v395 = vpack.c.b16 %v354, %v353
      %v396 = vpack.c.b16 %v356, %v355
      %v397 = vpack.c.b16 %v358, %v357
      %v398 = vpack.c.b16 %v360, %v359
      %v399 = vpack.c.b16 %v362, %v361
      %v400 = vpack.c.b16 %v364, %v363
      %v401 = vpack.c.b16 %v366, %v365
      %v402 = vpack.c.b16 %v368, %v367
      %v403 = vpack.c.b16 %v370, %v369
      %v404 = vpack.c.b16 %v372, %v371
      %v407 = vunpack.c.l.b16 %v239
      %v408 = vunpack.c.l.b16 %v240
      %v409 = vpack.c.b16 %v408, %v407
      %vm411 = vcmask 130048
      %v413 = vsel %vm411, %v373, 0
      %v416 = vsel %vm411, %v374, 0
      %v419 = vsel %vm411, %v375, 0
      %v422 = vsel %vm411, %v376, 0
      %v425 = vsel %vm411, %v377, 0
      %v428 = vsel %vm411, %v378, 0
      %v431 = vsel %vm411, %v379, 0
      %v434 = vsel %vm411, %v380, 0
      %v437 = vsel %vm411, %v381, 0
      %v440 = vsel %vm411, %v382, 0
      %v443 = vsel %vm411, %v383, 0
      %v446 = vsel %vm411, %v384, 0
      %v449 = vsel %vm411, %v385, 0
      %v452 = vsel %vm411, %v386, 0
      %v455 = vsel %vm411, %v387, 0
      %v458 = vsel %vm411, %v388, 0
      %v461 = vsel %vm411, %v389, 0
      %v464 = vsel %vm411, %v390, 0
      %v467 = vsel %vm411, %v391, 0
      %v470 = vsel %vm411, %v392, 0
      %v473 = vsel %vm411, %v393, 0
      %v476 = vsel %vm411, %v394, 0
      %v479 = vsel %vm411, %v395, 0
      %v482 = vsel %vm411, %v396, 0
      %v485 = vsel %vm411, %v397, 0
      %v488 = vsel %vm411, %v398, 0
      %v491 = vsel %vm411, %v399, 0
      %v494 = vsel %vm411, %v400, 0
      %v497 = vsel %vm411, %v401, 0
      %v500 = vsel %vm411, %v402, 0
      %v503 = vsel %vm411, %v403, 0
      %v506 = vsel %vm411, %v404, 0
      %508 = vmatpush.bf16.msra.mxu0 0
      %509 = vmatpush.bf16.msra.mxu0 0
      %510 = vmatpush.bf16.msra.mxu0 0
      %511 = vmatpush.bf16.msra.mxu0 0
      %512 = vmatpush.bf16.msra.mxu0 0
      %513 = vmatpush.bf16.msra.mxu0 0
      %514 = vmatpush.bf16.msra.mxu0 0
      %515 = vmatpush.bf16.msra.mxu0 %v409
      %516 = vmatmul.bf16.gmra.mxu0 %v413
      %v517 = vpop.f32.mrf.mxu0
      %v518 = vadd.f32 %v243, %v517
      %v519 = vpop.f32.mrf.mxu0
      %v520 = vadd.f32 %v243, %v519
      %521 = vmatmul.bf16.gmra.mxu0 %v416
      %v522 = vpop.f32.mrf.mxu0
      %v523 = vadd.f32 %v243, %v522
      %v524 = vpop.f32.mrf.mxu0
      %v525 = vadd.f32 %v243, %v524
      %526 = vmatmul.bf16.gmra.mxu0 %v419
      %v527 = vpop.f32.mrf.mxu0
      %v528 = vadd.f32 %v243, %v527
      %v529 = vpop.f32.mrf.mxu0
      %v530 = vadd.f32 %v243, %v529
      %531 = vmatmul.bf16.gmra.mxu0 %v422
      %v532 = vpop.f32.mrf.mxu0
      %v533 = vadd.f32 %v243, %v532
      %v534 = vpop.f32.mrf.mxu0
      %v535 = vadd.f32 %v243, %v534
      %536 = vmatmul.bf16.gmra.mxu0 %v425
      %v537 = vpop.f32.mrf.mxu0
      %v538 = vadd.f32 %v243, %v537
      %v539 = vpop.f32.mrf.mxu0
      %v540 = vadd.f32 %v243, %v539
      %541 = vmatmul.bf16.gmra.mxu0 %v428
      %v542 = vpop.f32.mrf.mxu0
      %v543 = vadd.f32 %v243, %v542
      %v544 = vpop.f32.mrf.mxu0
      %v545 = vadd.f32 %v243, %v544
      %546 = vmatmul.bf16.gmra.mxu0 %v431
      %v547 = vpop.f32.mrf.mxu0
      %v548 = vadd.f32 %v243, %v547
      %v549 = vpop.f32.mrf.mxu0
      %v550 = vadd.f32 %v243, %v549
      %551 = vmatmul.bf16.gmra.mxu0 %v434
      %v552 = vpop.f32.mrf.mxu0
      %v553 = vadd.f32 %v243, %v552
      %v554 = vpop.f32.mrf.mxu0
      %v555 = vadd.f32 %v243, %v554
      %556 = vmatmul.bf16.gmra.mxu0 %v437
      %v557 = vpop.f32.mrf.mxu0
      %v558 = vadd.f32 %v243, %v557
      %v559 = vpop.f32.mrf.mxu0
      %v560 = vadd.f32 %v243, %v559
      %561 = vmatmul.bf16.gmra.mxu0 %v440
      %v562 = vpop.f32.mrf.mxu0
      %v563 = vadd.f32 %v243, %v562
      %v564 = vpop.f32.mrf.mxu0
      %v565 = vadd.f32 %v243, %v564
      %566 = vmatmul.bf16.gmra.mxu0 %v443
      %v567 = vpop.f32.mrf.mxu0
      %v568 = vadd.f32 %v243, %v567
      %v569 = vpop.f32.mrf.mxu0
      %v570 = vadd.f32 %v243, %v569
      %571 = vmatmul.bf16.gmra.mxu0 %v446
      %v572 = vpop.f32.mrf.mxu0
      %v573 = vadd.f32 %v243, %v572
      %v574 = vpop.f32.mrf.mxu0
      %v575 = vadd.f32 %v243, %v574
      %576 = vmatmul.bf16.gmra.mxu0 %v449
      %v577 = vpop.f32.mrf.mxu0
      %v578 = vadd.f32 %v243, %v577
      %v579 = vpop.f32.mrf.mxu0
      %v580 = vadd.f32 %v243, %v579
      %581 = vmatmul.bf16.gmra.mxu0 %v452
      %v582 = vpop.f32.mrf.mxu0
      %v583 = vadd.f32 %v243, %v582
      %v584 = vpop.f32.mrf.mxu0
      %v585 = vadd.f32 %v243, %v584
      %586 = vmatmul.bf16.gmra.mxu0 %v455
      %v587 = vpop.f32.mrf.mxu0
      %v588 = vadd.f32 %v243, %v587
      %v589 = vpop.f32.mrf.mxu0
      %v590 = vadd.f32 %v243, %v589
      %591 = vmatmul.bf16.gmra.mxu0 %v458
      %v592 = vpop.f32.mrf.mxu0
      %v593 = vadd.f32 %v243, %v592
      %v594 = vpop.f32.mrf.mxu0
      %v595 = vadd.f32 %v243, %v594
      %596 = vmatmul.bf16.gmra.mxu0 %v461
      %v597 = vpop.f32.mrf.mxu0
      %v598 = vadd.f32 %v243, %v597
      %v599 = vpop.f32.mrf.mxu0
      %v600 = vadd.f32 %v243, %v599
      %601 = vmatmul.bf16.gmra.mxu0 %v464
      %v602 = vpop.f32.mrf.mxu0
      %v603 = vadd.f32 %v243, %v602
      %v604 = vpop.f32.mrf.mxu0
      %v605 = vadd.f32 %v243, %v604
      %606 = vmatmul.bf16.gmra.mxu0 %v467
      %v607 = vpop.f32.mrf.mxu0
      %v608 = vadd.f32 %v243, %v607
      %v609 = vpop.f32.mrf.mxu0
      %v610 = vadd.f32 %v243, %v609
      %611 = vmatmul.bf16.gmra.mxu0 %v470
      %v612 = vpop.f32.mrf.mxu0
      %v613 = vadd.f32 %v243, %v612
      %v614 = vpop.f32.mrf.mxu0
      %v615 = vadd.f32 %v243, %v614
      %616 = vmatmul.bf16.gmra.mxu0 %v473
      %v617 = vpop.f32.mrf.mxu0
      %v618 = vadd.f32 %v243, %v617
      %v619 = vpop.f32.mrf.mxu0
      %v620 = vadd.f32 %v243, %v619
      %621 = vmatmul.bf16.gmra.mxu0 %v476
      %v622 = vpop.f32.mrf.mxu0
      %v623 = vadd.f32 %v243, %v622
      %v624 = vpop.f32.mrf.mxu0
      %v625 = vadd.f32 %v243, %v624
      %626 = vmatmul.bf16.gmra.mxu0 %v479
      %v627 = vpop.f32.mrf.mxu0
      %v628 = vadd.f32 %v243, %v627
      %v629 = vpop.f32.mrf.mxu0
      %v630 = vadd.f32 %v243, %v629
      %631 = vmatmul.bf16.gmra.mxu0 %v482
      %v632 = vpop.f32.mrf.mxu0
      %v633 = vadd.f32 %v243, %v632
      %v634 = vpop.f32.mrf.mxu0
      %v635 = vadd.f32 %v243, %v634
      %636 = vmatmul.bf16.gmra.mxu0 %v485
      %v637 = vpop.f32.mrf.mxu0
      %v638 = vadd.f32 %v243, %v637
      %v639 = vpop.f32.mrf.mxu0
      %v640 = vadd.f32 %v243, %v639
      %641 = vmatmul.bf16.gmra.mxu0 %v488
      %v642 = vpop.f32.mrf.mxu0
      %v643 = vadd.f32 %v243, %v642
      %v644 = vpop.f32.mrf.mxu0
      %v645 = vadd.f32 %v243, %v644
      %646 = vmatmul.bf16.gmra.mxu0 %v491
      %v647 = vpop.f32.mrf.mxu0
      %v648 = vadd.f32 %v243, %v647
      %v649 = vpop.f32.mrf.mxu0
      %v650 = vadd.f32 %v243, %v649
      %651 = vmatmul.bf16.gmra.mxu0 %v494
      %v652 = vpop.f32.mrf.mxu0
      %v653 = vadd.f32 %v243, %v652
      %v654 = vpop.f32.mrf.mxu0
      %v655 = vadd.f32 %v243, %v654
      %656 = vmatmul.bf16.gmra.mxu0 %v497
      %v657 = vpop.f32.mrf.mxu0
      %v658 = vadd.f32 %v243, %v657
      %v659 = vpop.f32.mrf.mxu0
      %v660 = vadd.f32 %v243, %v659
      %661 = vmatmul.bf16.gmra.mxu0 %v500
      %v662 = vpop.f32.mrf.mxu0
      %v663 = vadd.f32 %v243, %v662
      %v664 = vpop.f32.mrf.mxu0
      %v665 = vadd.f32 %v243, %v664
      %666 = vmatmul.bf16.gmra.mxu0 %v503
      %v667 = vpop.f32.mrf.mxu0
      %v668 = vadd.f32 %v243, %v667
      %v669 = vpop.f32.mrf.mxu0
      %v670 = vadd.f32 %v243, %v669
      %671 = vmatmul.bf16.gmra.mxu0 %v506
      %v672 = vpop.f32.mrf.mxu0
      %v673 = vadd.f32 %v243, %v672
      %v674 = vpop.f32.mrf.mxu0
      %v675 = vadd.f32 %v243, %v674
      %676 = vdwg.mxu0
      %677 = vst.msk [vmem:[%s172] sm:$0xff] %vm411, %v518
      %678 = vst.msk [vmem:[%s172 + $0x8] sm:$0xff] %vm411, %v520
      %679 = vst.msk [vmem:[%s172 + $0x10] sm:$0xff] %vm411, %v523
      %680 = vst.msk [vmem:[%s172 + $0x18] sm:$0xff] %vm411, %v525
      %681 = vst.msk [vmem:[%s172 + $0x20] sm:$0xff] %vm411, %v528
      %682 = vst.msk [vmem:[%s172 + $0x28] sm:$0xff] %vm411, %v530
      %683 = vst.msk [vmem:[%s172 + $0x30] sm:$0xff] %vm411, %v533
      %684 = vst.msk [vmem:[%s172 + $0x38] sm:$0xff] %vm411, %v535
      %685 = vst.msk [vmem:[%s172 + $0x40] sm:$0xff] %vm411, %v538
      %686 = vst.msk [vmem:[%s172 + $0x48] sm:$0xff] %vm411, %v540
      %687 = vst.msk [vmem:[%s172 + $0x50] sm:$0xff] %vm411, %v543
      %688 = vst.msk [vmem:[%s172 + $0x58] sm:$0xff] %vm411, %v545
      %689 = vst.msk [vmem:[%s172 + $0x60] sm:$0xff] %vm411, %v548
      %690 = vst.msk [vmem:[%s172 + $0x68] sm:$0xff] %vm411, %v550
      %691 = vst.msk [vmem:[%s172 + $0x70] sm:$0xff] %vm411, %v553
      %692 = vst.msk [vmem:[%s172 + $0x78] sm:$0xff] %vm411, %v555
      %693 = vst.msk [vmem:[%s172 + $0x80] sm:$0xff] %vm411, %v558
      %694 = vst.msk [vmem:[%s172 + $0x88] sm:$0xff] %vm411, %v560
      %695 = vst.msk [vmem:[%s172 + $0x90] sm:$0xff] %vm411, %v563
      %696 = vst.msk [vmem:[%s172 + $0x98] sm:$0xff] %vm411, %v565
      %697 = vst.msk [vmem:[%s172 + $0xa0] sm:$0xff] %vm411, %v568
      %698 = vst.msk [vmem:[%s172 + $0xa8] sm:$0xff] %vm411, %v570
      %699 = vst.msk [vmem:[%s172 + $0xb0] sm:$0xff] %vm411, %v573
      %700 = vst.msk [vmem:[%s172 + $0xb8] sm:$0xff] %vm411, %v575
      %701 = vst.msk [vmem:[%s172 + $0xc0] sm:$0xff] %vm411, %v578
      %702 = vst.msk [vmem:[%s172 + $0xc8] sm:$0xff] %vm411, %v580
      %703 = vst.msk [vmem:[%s172 + $0xd0] sm:$0xff] %vm411, %v583
      %704 = vst.msk [vmem:[%s172 + $0xd8] sm:$0xff] %vm411, %v585
      %705 = vst.msk [vmem:[%s172 + $0xe0] sm:$0xff] %vm411, %v588
      %706 = vst.msk [vmem:[%s172 + $0xe8] sm:$0xff] %vm411, %v590
      %707 = vst.msk [vmem:[%s172 + $0xf0] sm:$0xff] %vm411, %v593
      %708 = vst.msk [vmem:[%s172 + $0xf8] sm:$0xff] %vm411, %v595
      %709 = vst.msk [vmem:[%s172 + $0x100] sm:$0xff] %vm411, %v598
      %710 = vst.msk [vmem:[%s172 + $0x108] sm:$0xff] %vm411, %v600
      %711 = vst.msk [vmem:[%s172 + $0x110] sm:$0xff] %vm411, %v603
      %712 = vst.msk [vmem:[%s172 + $0x118] sm:$0xff] %vm411, %v605
      %713 = vst.msk [vmem:[%s172 + $0x120] sm:$0xff] %vm411, %v608
      %714 = vst.msk [vmem:[%s172 + $0x128] sm:$0xff] %vm411, %v610
      %715 = vst.msk [vmem:[%s172 + $0x130] sm:$0xff] %vm411, %v613
      %716 = vst.msk [vmem:[%s172 + $0x138] sm:$0xff] %vm411, %v615
      %717 = vst.msk [vmem:[%s172 + $0x140] sm:$0xff] %vm411, %v618
      %718 = vst.msk [vmem:[%s172 + $0x148] sm:$0xff] %vm411, %v620
      %719 = vst.msk [vmem:[%s172 + $0x150] sm:$0xff] %vm411, %v623
      %720 = vst.msk [vmem:[%s172 + $0x158] sm:$0xff] %vm411, %v625
      %721 = vst.msk [vmem:[%s172 + $0x160] sm:$0xff] %vm411, %v628
      %722 = vst.msk [vmem:[%s172 + $0x168] sm:$0xff] %vm411, %v630
      %723 = vst.msk [vmem:[%s172 + $0x170] sm:$0xff] %vm411, %v633
      %724 = vst.msk [vmem:[%s172 + $0x178] sm:$0xff] %vm411, %v635
      %725 = vst.msk [vmem:[%s172 + $0x180] sm:$0xff] %vm411, %v638
      %726 = vst.msk [vmem:[%s172 + $0x188] sm:$0xff] %vm411, %v640
      %727 = vst.msk [vmem:[%s172 + $0x190] sm:$0xff] %vm411, %v643
      %728 = vst.msk [vmem:[%s172 + $0x198] sm:$0xff] %vm411, %v645
      %729 = vst.msk [vmem:[%s172 + $0x1a0] sm:$0xff] %vm411, %v648
      %730 = vst.msk [vmem:[%s172 + $0x1a8] sm:$0xff] %vm411, %v650
      %731 = vst.msk [vmem:[%s172 + $0x1b0] sm:$0xff] %vm411, %v653
      %732 = vst.msk [vmem:[%s172 + $0x1b8] sm:$0xff] %vm411, %v655
      %733 = vst.msk [vmem:[%s172 + $0x1c0] sm:$0xff] %vm411, %v658
      %734 = vst.msk [vmem:[%s172 + $0x1c8] sm:$0xff] %vm411, %v660
      %735 = vst.msk [vmem:[%s172 + $0x1d0] sm:$0xff] %vm411, %v663
      %736 = vst.msk [vmem:[%s172 + $0x1d8] sm:$0xff] %vm411, %v665
      %737 = vst.msk [vmem:[%s172 + $0x1e0] sm:$0xff] %vm411, %v668
      %738 = vst.msk [vmem:[%s172 + $0x1e8] sm:$0xff] %vm411, %v670
      %739 = vst.msk [vmem:[%s172 + $0x1f0] sm:$0xff] %vm411, %v673
      %740 = vst.msk [vmem:[%s172 + $0x1f8] sm:$0xff] %vm411, %v675
      %s741 = smul.u32 64, %s14
      %p742 = scmp.lt.s32.totalorder %s741, 255
      %s743 = scalar_select %p742, %s741, 255
      %s744 = smul.addr %s743, 8
      %s745 = scalar_lea.vmem %s3, %s744
      // Predicated region
      $region33: #{_lambda_.27} parent=31 // pred_check
        %p746 = pneg %p100
      $region34: #{_lambda_.27} parent=31 // pred_check_branch
        %748 = sbr.rel (%p746) target = $region36
      $region35: #{_lambda_.27} parent=31 // pred_region
        %s749 = smul.u32 64, %s14
      $region36: #{_lambda_.27} parent=31 // pred_fallthru
        _
    $region32: #{_lambda_.27} parent=5 // pred_fallthru
      _
    %p750 = scmp.le.s32.totalorder 2, %s9
    // Predicated region
    $region37: #{_lambda_.27} parent=5 // pred_check
      %p751 = pneg %p750
    $region38: #{_lambda_.27} parent=5 // pred_check_branch
      %753 = sbr.rel (%p751) target = $region40
    $region39: #{_lambda_.27} parent=5 // pred_region
      %s754 = ssub.s32 %s9, 2
      // Predicated region
      $region41: #{_lambda_.27} parent=39 // pred_check
        %p755 = pneg %p106
      $region42: #{_lambda_.27} parent=39 // pred_check_branch
        %757 = sbr.rel (%p755) target = $region44
      $region43: #{_lambda_.27} parent=39 // pred_region
        %s758 = smul.u32 64, %s15
        %p759 = scmp.lt.s32.totalorder %s758, 255
        %s760 = scalar_select %p759, %s758, 255
        %s761 = smul.addr %s760, 8
        %s762 = scalar_lea.vmem %s3, %s761
      $region44: #{_lambda_.27} parent=39 // pred_fallthru
        _
    $region40: #{_lambda_.27} parent=5 // pred_fallthru
      _
  $region6: #{_lambda_.27} parent=0 // loop_footer
    %s13 = sadd.s32 1, %s9
  $region7: #{_lambda_.27} parent=0 // loop_footer_branch
    %8 = sbr.rel target = $region3
  $region8: #{_lambda_.27} parent=0 // loop_exit
    _

// kernel: _lambda_.28
$region0: #{_lambda_.28}
  #allocation0 [shape = 'u32[]', space=smem, size = 0x4, offset = 0x4, fixed_abs, tag = 'smem constant byte address 0x4 - core index']
  #allocation1 [shape = 'u32[72,128]{1,0:T(1,128)}', space=vmem, size = 0x9000, scoped, tag = 'internal scratch']
  %s0 = inlined_call_operand.vmem [shape: bf16[512,16], index: 0, kind: input, shape index: {}]
  %s1 = inlined_call_operand.vmem [shape: bf16[16,32], index: 1, kind: input, shape index: {}]
  %s2 = inlined_call_operand.vmem [shape: f32[1,32], index: 2, kind: input, shape index: {}]
  %s3 = inlined_call_operand.vmem [shape: f32[512,32], index: 3, kind: output, shape index: {}]
  %s4 = sld [smem:[#allocation0]]
  $region45: #{_lambda_.28} parent=0
    _
  %s6 = ssub.s32 1, %s4
  %s7 = scalar_select 0, %s6, %s4
  loop: start=0, step=1, limit=4
  $region2: #{_lambda_.28} parent=0 // loop_pre_header
    _
  $region3: #{_lambda_.28} parent=0 // loop_header
    %s9 = sphi 0, %s13
    %p10 = scmp.ge.s32.totalorder %s9, 4
    %s19 = sphi 0, %s21
    %s22 = sphi 0, %s19
    %s23 = sphi 0, %s22
    %s39 = sphi 0, %s23
    %s43 = sphi 0, %s43
    %s45 = sphi 0, %s43
    %s46 = sphi 0, %s45
    %s60 = sphi 0, %s46
    %s64 = sphi 0, %s64
    %s66 = sphi 0, %s64
    %s67 = sphi 0, %s66
    %s81 = sphi 0, %s67
    %s87 = sphi 0, %s89
    %s90 = sphi 0, %s87
    %s91 = sphi 0, %s90
    %s107 = sphi 0, %s91
  $region4: #{_lambda_.28} parent=0 // loop_header_branch
    %12 = sbr.rel (%p10) target = $region8
  $region5: #{_lambda_.28} parent=0 // loop_body
    %s14 = ssub.s32 %s9, 1
    %s15 = ssub.s32 %s9, 2
    %s16 = sadd.s32 %s9, 1
    %s17 = ssub.s32 %s9, %s16
    %p18 = scmp.eq.s32.totalorder %s17, 0
    %s20 = sadd.s32 %s19, 1
    %s21 = scalar_select %p18, %s19, %s20
    %p24 = pneg %p18
    %p25 = scmp.eq.s32.totalorder %s9, 1
    %p26 = por %p24, %p25
    %p27 = scmp.ne.s32.totalorder %s19, %s22
    %p28 = scmp.eq.s32.totalorder %s9, 0
    %p29 = por %p27, %p28
    %p30 = scmp.ne.s32.totalorder %s19, %s22
    %p31 = scmp.eq.s32.totalorder %s14, 1
    %p32 = por %p30, %p31
    %p33 = scmp.ne.s32.totalorder %s22, %s23
    %p34 = scmp.eq.s32.totalorder %s14, 0
    %p35 = por %p33, %p34
    %p36 = scmp.ne.s32.totalorder %s22, %s23
    %p37 = scmp.eq.s32.totalorder %s15, 1
    %p38 = por %p36, %p37
    %p40 = scmp.ne.s32.totalorder %s23, %s39
    %p41 = scmp.eq.s32.totalorder %s15, 0
    %p42 = por %p40, %p41
    %s44 = sadd.s32 %s43, 1
    %p47 = scmp.eq.s32.totalorder %s9, 1
    %p48 = scmp.ne.s32.totalorder %s43, %s45
    %p49 = scmp.eq.s32.totalorder %s9, 0
    %p50 = por %p48, %p49
    %p51 = scmp.ne.s32.totalorder %s43, %s45
    %p52 = scmp.eq.s32.totalorder %s14, 1
    %p53 = por %p51, %p52
    %p54 = scmp.ne.s32.totalorder %s45, %s46
    %p55 = scmp.eq.s32.totalorder %s14, 0
    %p56 = por %p54, %p55
    %p57 = scmp.ne.s32.totalorder %s45, %s46
    %p58 = scmp.eq.s32.totalorder %s15, 1
    %p59 = por %p57, %p58
    %p61 = scmp.ne.s32.totalorder %s46, %s60
    %p62 = scmp.eq.s32.totalorder %s15, 0
    %p63 = por %p61, %p62
    %s65 = sadd.s32 %s64, 1
    %p68 = scmp.eq.s32.totalorder %s9, 1
    %p69 = scmp.ne.s32.totalorder %s64, %s66
    %p70 = scmp.eq.s32.totalorder %s9, 0
    %p71 = por %p69, %p70
    %p72 = scmp.ne.s32.totalorder %s64, %s66
    %p73 = scmp.eq.s32.totalorder %s14, 1
    %p74 = por %p72, %p73
    %p75 = scmp.ne.s32.totalorder %s66, %s67
    %p76 = scmp.eq.s32.totalorder %s14, 0
    %p77 = por %p75, %p76
    %p78 = scmp.ne.s32.totalorder %s66, %s67
    %p79 = scmp.eq.s32.totalorder %s15, 1
    %p80 = por %p78, %p79
    %p82 = scmp.ne.s32.totalorder %s67, %s81
    %p83 = scmp.eq.s32.totalorder %s15, 0
    %p84 = por %p82, %p83
    %s85 = ssub.s32 %s9, %s16
    %p86 = scmp.eq.s32.totalorder %s85, 0
    %s88 = sadd.s32 %s87, 1
    %s89 = scalar_select %p86, %s87, %s88
    %p92 = pneg %p86
    %p93 = scmp.eq.s32.totalorder %s9, 1
    %p94 = por %p92, %p93
    %p95 = scmp.ne.s32.totalorder %s87, %s90
    %p96 = scmp.eq.s32.totalorder %s9, 0
    %p97 = por %p95, %p96
    %p98 = scmp.ne.s32.totalorder %s87, %s90
    %p99 = scmp.eq.s32.totalorder %s14, 1
    %p100 = por %p98, %p99
    %p101 = scmp.ne.s32.totalorder %s90, %s91
    %p102 = scmp.eq.s32.totalorder %s14, 0
    %p103 = por %p101, %p102
    %p104 = scmp.ne.s32.totalorder %s90, %s91
    %p105 = scmp.eq.s32.totalorder %s15, 1
    %p106 = por %p104, %p105
    %p108 = scmp.ne.s32.totalorder %s91, %s107
    %p109 = scmp.eq.s32.totalorder %s15, 0
    %p110 = por %p108, %p109
    %p111 = scmp.le.s32.totalorder 1, %s9
    %p112 = scmp.lt.s32.totalorder %s9, 3
    %p113 = pnand %p111, %p112
    %p114 = pneg %p113
    // Predicated region
    $region9: #{_lambda_.28} parent=5 // pred_check
      _
    $region10: #{_lambda_.28} parent=5 // pred_check_branch
      %116 = sbr.rel (%p113) target = $region12
    $region11: #{_lambda_.28} parent=5 // pred_region
      %s117 = ssub.s32 %s9, 1
      // Predicated region
      $region13: #{_lambda_.28} parent=11 // pred_check
        %p118 = pneg %p56
      $region14: #{_lambda_.28} parent=11 // pred_check_branch
        %120 = sbr.rel (%p118) target = $region16
      $region15: #{_lambda_.28} parent=11 // pred_region
        _
      $region16: #{_lambda_.28} parent=11 // pred_fallthru
        _
      // Predicated region
      $region17: #{_lambda_.28} parent=11 // pred_check
        %p121 = pneg %p77
      $region18: #{_lambda_.28} parent=11 // pred_check_branch
        %123 = sbr.rel (%p121) target = $region20
      $region19: #{_lambda_.28} parent=11 // pred_region
        _
      $region20: #{_lambda_.28} parent=11 // pred_fallthru
        _
    $region12: #{_lambda_.28} parent=5 // pred_fallthru
      _
    %p124 = scmp.lt.s32.totalorder %s9, 2
    // Predicated region
    $region21: #{_lambda_.28} parent=5 // pred_check
      %p125 = pneg %p124
    $region22: #{_lambda_.28} parent=5 // pred_check_branch
      %127 = sbr.rel (%p125) target = $region24
    $region23: #{_lambda_.28} parent=5 // pred_region
      // Predicated region
      $region25: #{_lambda_.28} parent=23 // pred_check
        %p128 = pneg %p29
      $region26: #{_lambda_.28} parent=23 // pred_check_branch
        %130 = sbr.rel (%p128) target = $region28
      $region27: #{_lambda_.28} parent=23 // pred_region
        %s131 = smul.u32 32, %s9
        %p132 = scmp.lt.s32.totalorder %s131, 63
        %s133 = scalar_select %p132, %s131, 63
        %s134 = smul.addr %s133, 4
        %s135 = scalar_lea.vmem %s0, %s134
        %s136 = smul.u32 32, %s9
      $region28: #{_lambda_.28} parent=23 // pred_fallthru
        _
    $region24: #{_lambda_.28} parent=5 // pred_fallthru
      _
    %p137 = scmp.le.s32.totalorder 1, %s9
    %p138 = scmp.lt.s32.totalorder %s9, 3
    %p139 = pnand %p137, %p138
    %p140 = pneg %p139
    // Predicated region
    $region29: #{_lambda_.28} parent=5 // pred_check
      _
    $region30: #{_lambda_.28} parent=5 // pred_check_branch
      %142 = sbr.rel (%p139) target = $region32
    $region31: #{_lambda_.28} parent=5 // pred_region
      %s143 = ssub.s32 %s9, 1
      %s144 = smul.u32 32, %s14
      %p145 = scmp.lt.s32.totalorder %s144, 63
      %s146 = scalar_select %p145, %s144, 63
      %s147 = smul.addr %s146, 4
      %s148 = scalar_lea.vmem %s0, %s147
      %p149 = pneg %p35
      %p150 = pneg %p32
      %p151 = pneg %p56
      %p152 = pneg %p53
      %p153 = pneg %p77
      %p154 = pneg %p74
      %p155 = pneg %p103
      %p156 = pneg %p100
      %s157 = smul.u32 32, %s14
      %p158 = scmp.lt.s32.totalorder %s157, 63
      %s159 = scalar_select %p158, %s157, 63
      %s160 = smul.addr %s159, 8
      %s161 = scalar_lea.vmem %s3, %s160
      %s162 = smul.u32 32, %s14
      %p163 = scmp.lt.s32.totalorder %s162, 63
      %s164 = scalar_select %p163, %s162, 63
      %s165 = smul.addr %s164, 4
      %s166 = scalar_lea.vmem %s0, %s165
      %s167 = smul.u32 32, %s14
      %s168 = smul.u32 32, %s14
      %p169 = scmp.lt.s32.totalorder %s168, 63
      %s170 = scalar_select %p169, %s168, 63
      %s171 = smul.addr %s170, 8
      %s172 = scalar_lea.vmem %s3, %s171
      %s173 = smul.u32 32, %s14
      %v175 = vld [vmem:[%s166] sm:$0xf]
      %v176 = vld [vmem:[%s166 + $0x4] sm:$0xf]
      %v177 = vld [vmem:[%s166 + $0x8] sm:$0xf]
      %v178 = vld [vmem:[%s166 + $0xc] sm:$0xf]
      %v179 = vld [vmem:[%s166 + $0x10] sm:$0xf]
      %v180 = vld [vmem:[%s166 + $0x14] sm:$0xf]
      %v181 = vld [vmem:[%s166 + $0x18] sm:$0xf]
      %v182 = vld [vmem:[%s166 + $0x1c] sm:$0xf]
      %v183 = vld [vmem:[%s166 + $0x20] sm:$0xf]
      %v184 = vld [vmem:[%s166 + $0x24] sm:$0xf]
      %v185 = vld [vmem:[%s166 + $0x28] sm:$0xf]
      %v186 = vld [vmem:[%s166 + $0x2c] sm:$0xf]
      %v187 = vld [vmem:[%s166 + $0x30] sm:$0xf]
      %v188 = vld [vmem:[%s166 + $0x34] sm:$0xf]
      %v189 = vld [vmem:[%s166 + $0x38] sm:$0xf]
      %v190 = vld [vmem:[%s166 + $0x3c] sm:$0xf]
      %v191 = vld [vmem:[%s166 + $0x40] sm:$0xf]
      %v192 = vld [vmem:[%s166 + $0x44] sm:$0xf]
      %v193 = vld [vmem:[%s166 + $0x48] sm:$0xf]
      %v194 = vld [vmem:[%s166 + $0x4c] sm:$0xf]
      %v195 = vld [vmem:[%s166 + $0x50] sm:$0xf]
      %v196 = vld [vmem:[%s166 + $0x54] sm:$0xf]
      %v197 = vld [vmem:[%s166 + $0x58] sm:$0xf]
      %v198 = vld [vmem:[%s166 + $0x5c] sm:$0xf]
      %v199 = vld [vmem:[%s166 + $0x60] sm:$0xf]
      %v200 = vld [vmem:[%s166 + $0x64] sm:$0xf]
      %v201 = vld [vmem:[%s166 + $0x68] sm:$0xf]
      %v202 = vld [vmem:[%s166 + $0x6c] sm:$0xf]
      %v203 = vld [vmem:[%s166 + $0x70] sm:$0xf]
      %v204 = vld [vmem:[%s166 + $0x74] sm:$0xf]
      %v205 = vld [vmem:[%s166 + $0x78] sm:$0xf]
      %v206 = vld [vmem:[%s166 + $0x7c] sm:$0xf]
      %v207 = vld [vmem:[%s1] sm:$0xf]
      %v208 = vld [vmem:[%s1 + $0x4] sm:$0xf]
      %v209 = vld [vmem:[%s2] sm:$0x1]
      %v211 = vperm.slane %v209, 0
      %v245 = vunpack.c.l.b16 %v175
      %v246 = vunpack.c.l.b16 %v176
      %v247 = vunpack.c.l.b16 %v177
      %v248 = vunpack.c.l.b16 %v178
      %v249 = vunpack.c.l.b16 %v179
      %v250 = vunpack.c.l.b16 %v180
      %v251 = vunpack.c.l.b16 %v181
      %v252 = vunpack.c.l.b16 %v182
      %v253 = vunpack.c.l.b16 %v183
      %v254 = vunpack.c.l.b16 %v184
      %v255 = vunpack.c.l.b16 %v185
      %v256 = vunpack.c.l.b16 %v186
      %v257 = vunpack.c.l.b16 %v187
      %v258 = vunpack.c.l.b16 %v188
      %v259 = vunpack.c.l.b16 %v189
      %v260 = vunpack.c.l.b16 %v190
      %v261 = vunpack.c.l.b16 %v191
      %v262 = vunpack.c.l.b16 %v192
      %v263 = vunpack.c.l.b16 %v193
      %v264 = vunpack.c.l.b16 %v194
      %v265 = vunpack.c.l.b16 %v195
      %v266 = vunpack.c.l.b16 %v196
      %v267 = vunpack.c.l.b16 %v197
      %v268 = vunpack.c.l.b16 %v198
      %v269 = vunpack.c.l.b16 %v199
      %v270 = vunpack.c.l.b16 %v200
      %v271 = vunpack.c.l.b16 %v201
      %v272 = vunpack.c.l.b16 %v202
      %v273 = vunpack.c.l.b16 %v203
      %v274 = vunpack.c.l.b16 %v204
      %v275 = vunpack.c.l.b16 %v205
      %v276 = vunpack.c.l.b16 %v206
      %v277 = vpack.c.b16 %v246, %v245
      %v278 = vpack.c.b16 %v248, %v247
      %v279 = vpack.c.b16 %v250, %v249
      %v280 = vpack.c.b16 %v252, %v251
      %v281 = vpack.c.b16 %v254, %v253
      %v282 = vpack.c.b16 %v256, %v255
      %v283 = vpack.c.b16 %v258, %v257
      %v284 = vpack.c.b16 %v260, %v259
      %v285 = vpack.c.b16 %v262, %v261
      %v286 = vpack.c.b16 %v264, %v263
      %v287 = vpack.c.b16 %v266, %v265
      %v288 = vpack.c.b16 %v268, %v267
      %v289 = vpack.c.b16 %v270, %v269
      %v290 = vpack.c.b16 %v272, %v271
      %v291 = vpack.c.b16 %v274, %v273
      %v292 = vpack.c.b16 %v276, %v275
      %v295 = vunpack.c.l.b16 %v207
      %v296 = vunpack.c.l.b16 %v208
      %v297 = vpack.c.b16 %v296, %v295
      %vm299 = vcmask 130048
      %v301 = vsel %vm299, %v277, 0
      %v304 = vsel %vm299, %v278, 0
      %v307 = vsel %vm299, %v279, 0
      %v310 = vsel %vm299, %v280, 0
      %v313 = vsel %vm299, %v281, 0
      %v316 = vsel %vm299, %v282, 0
      %v319 = vsel %vm299, %v283, 0
      %v322 = vsel %vm299, %v284, 0
      %v325 = vsel %vm299, %v285, 0
      %v328 = vsel %vm299, %v286, 0
      %v331 = vsel %vm299, %v287, 0
      %v334 = vsel %vm299, %v288, 0
      %v337 = vsel %vm299, %v289, 0
      %v340 = vsel %vm299, %v290, 0
      %v343 = vsel %vm299, %v291, 0
      %v346 = vsel %vm299, %v292, 0
      %348 = vmatpush.bf16.msra.mxu0 0
      %349 = vmatpush.bf16.msra.mxu0 0
      %350 = vmatpush.bf16.msra.mxu0 0
      %351 = vmatpush.bf16.msra.mxu0 0
      %352 = vmatpush.bf16.msra.mxu0 0
      %353 = vmatpush.bf16.msra.mxu0 0
      %354 = vmatpush.bf16.msra.mxu0 0
      %355 = vmatpush.bf16.msra.mxu0 %v297
      %356 = vmatmul.bf16.gmra.mxu0 %v301
      %v357 = vpop.f32.mrf.mxu0
      %v358 = vadd.f32 %v211, %v357
      %v359 = vpop.f32.mrf.mxu0
      %v360 = vadd.f32 %v211, %v359
      %361 = vmatmul.bf16.gmra.mxu0 %v304
      %v362 = vpop.f32.mrf.mxu0
      %v363 = vadd.f32 %v211, %v362
      %v364 = vpop.f32.mrf.mxu0
      %v365 = vadd.f32 %v211, %v364
      %366 = vmatmul.bf16.gmra.mxu0 %v307
      %v367 = vpop.f32.mrf.mxu0
      %v368 = vadd.f32 %v211, %v367
      %v369 = vpop.f32.mrf.mxu0
      %v370 = vadd.f32 %v211, %v369
      %371 = vmatmul.bf16.gmra.mxu0 %v310
      %v372 = vpop.f32.mrf.mxu0
      %v373 = vadd.f32 %v211, %v372
      %v374 = vpop.f32.mrf.mxu0
      %v375 = vadd.f32 %v211, %v374
      %376 = vmatmul.bf16.gmra.mxu0 %v313
      %v377 = vpop.f32.mrf.mxu0
      %v378 = vadd.f32 %v211, %v377
      %v379 = vpop.f32.mrf.mxu0
      %v380 = vadd.f32 %v211, %v379
      %381 = vmatmul.bf16.gmra.mxu0 %v316
      %v382 = vpop.f32.mrf.mxu0
      %v383 = vadd.f32 %v211, %v382
      %v384 = vpop.f32.mrf.mxu0
      %v385 = vadd.f32 %v211, %v384
      %386 = vmatmul.bf16.gmra.mxu0 %v319
      %v387 = vpop.f32.mrf.mxu0
      %v388 = vadd.f32 %v211, %v387
      %v389 = vpop.f32.mrf.mxu0
      %v390 = vadd.f32 %v211, %v389
      %391 = vmatmul.bf16.gmra.mxu0 %v322
      %v392 = vpop.f32.mrf.mxu0
      %v393 = vadd.f32 %v211, %v392
      %v394 = vpop.f32.mrf.mxu0
      %v395 = vadd.f32 %v211, %v394
      %396 = vmatmul.bf16.gmra.mxu0 %v325
      %v397 = vpop.f32.mrf.mxu0
      %v398 = vadd.f32 %v211, %v397
      %v399 = vpop.f32.mrf.mxu0
      %v400 = vadd.f32 %v211, %v399
      %401 = vmatmul.bf16.gmra.mxu0 %v328
      %v402 = vpop.f32.mrf.mxu0
      %v403 = vadd.f32 %v211, %v402
      %v404 = vpop.f32.mrf.mxu0
      %v405 = vadd.f32 %v211, %v404
      %406 = vmatmul.bf16.gmra.mxu0 %v331
      %v407 = vpop.f32.mrf.mxu0
      %v408 = vadd.f32 %v211, %v407
      %v409 = vpop.f32.mrf.mxu0
      %v410 = vadd.f32 %v211, %v409
      %411 = vmatmul.bf16.gmra.mxu0 %v334
      %v412 = vpop.f32.mrf.mxu0
      %v413 = vadd.f32 %v211, %v412
      %v414 = vpop.f32.mrf.mxu0
      %v415 = vadd.f32 %v211, %v414
      %416 = vmatmul.bf16.gmra.mxu0 %v337
      %v417 = vpop.f32.mrf.mxu0
      %v418 = vadd.f32 %v211, %v417
      %v419 = vpop.f32.mrf.mxu0
      %v420 = vadd.f32 %v211, %v419
      %421 = vmatmul.bf16.gmra.mxu0 %v340
      %v422 = vpop.f32.mrf.mxu0
      %v423 = vadd.f32 %v211, %v422
      %v424 = vpop.f32.mrf.mxu0
      %v425 = vadd.f32 %v211, %v424
      %426 = vmatmul.bf16.gmra.mxu0 %v343
      %v427 = vpop.f32.mrf.mxu0
      %v428 = vadd.f32 %v211, %v427
      %v429 = vpop.f32.mrf.mxu0
      %v430 = vadd.f32 %v211, %v429
      %431 = vmatmul.bf16.gmra.mxu0 %v346
      %v432 = vpop.f32.mrf.mxu0
      %v433 = vadd.f32 %v211, %v432
      %v434 = vpop.f32.mrf.mxu0
      %v435 = vadd.f32 %v211, %v434
      %436 = vdwg.mxu0
      %vm437 = vcmask 261120
      %438 = vst.msk [vmem:[%s172] sm:$0xff] %vm437, %v358
      %439 = vst.msk [vmem:[%s172 + $0x8] sm:$0xff] %vm437, %v360
      %440 = vst.msk [vmem:[%s172 + $0x10] sm:$0xff] %vm437, %v363
      %441 = vst.msk [vmem:[%s172 + $0x18] sm:$0xff] %vm437, %v365
      %442 = vst.msk [vmem:[%s172 + $0x20] sm:$0xff] %vm437, %v368
      %443 = vst.msk [vmem:[%s172 + $0x28] sm:$0xff] %vm437, %v370
      %444 = vst.msk [vmem:[%s172 + $0x30] sm:$0xff] %vm437, %v373
      %445 = vst.msk [vmem:[%s172 + $0x38] sm:$0xff] %vm437, %v375
      %446 = vst.msk [vmem:[%s172 + $0x40] sm:$0xff] %vm437, %v378
      %447 = vst.msk [vmem:[%s172 + $0x48] sm:$0xff] %vm437, %v380
      %448 = vst.msk [vmem:[%s172 + $0x50] sm:$0xff] %vm437, %v383
      %449 = vst.msk [vmem:[%s172 + $0x58] sm:$0xff] %vm437, %v385
      %450 = vst.msk [vmem:[%s172 + $0x60] sm:$0xff] %vm437, %v388
      %451 = vst.msk [vmem:[%s172 + $0x68] sm:$0xff] %vm437, %v390
      %452 = vst.msk [vmem:[%s172 + $0x70] sm:$0xff] %vm437, %v393
      %453 = vst.msk [vmem:[%s172 + $0x78] sm:$0xff] %vm437, %v395
      %454 = vst.msk [vmem:[%s172 + $0x80] sm:$0xff] %vm437, %v398
      %455 = vst.msk [vmem:[%s172 + $0x88] sm:$0xff] %vm437, %v400
      %456 = vst.msk [vmem:[%s172 + $0x90] sm:$0xff] %vm437, %v403
      %457 = vst.msk [vmem:[%s172 + $0x98] sm:$0xff] %vm437, %v405
      %458 = vst.msk [vmem:[%s172 + $0xa0] sm:$0xff] %vm437, %v408
      %459 = vst.msk [vmem:[%s172 + $0xa8] sm:$0xff] %vm437, %v410
      %460 = vst.msk [vmem:[%s172 + $0xb0] sm:$0xff] %vm437, %v413
      %461 = vst.msk [vmem:[%s172 + $0xb8] sm:$0xff] %vm437, %v415
      %462 = vst.msk [vmem:[%s172 + $0xc0] sm:$0xff] %vm437, %v418
      %463 = vst.msk [vmem:[%s172 + $0xc8] sm:$0xff] %vm437, %v420
      %464 = vst.msk [vmem:[%s172 + $0xd0] sm:$0xff] %vm437, %v423
      %465 = vst.msk [vmem:[%s172 + $0xd8] sm:$0xff] %vm437, %v425
      %466 = vst.msk [vmem:[%s172 + $0xe0] sm:$0xff] %vm437, %v428
      %467 = vst.msk [vmem:[%s172 + $0xe8] sm:$0xff] %vm437, %v430
      %468 = vst.msk [vmem:[%s172 + $0xf0] sm:$0xff] %vm437, %v433
      %469 = vst.msk [vmem:[%s172 + $0xf8] sm:$0xff] %vm437, %v435
      %s470 = smul.u32 32, %s14
      %p471 = scmp.lt.s32.totalorder %s470, 63
      %s472 = scalar_select %p471, %s470, 63
      %s473 = smul.addr %s472, 8
      %s474 = scalar_lea.vmem %s3, %s473
      // Predicated region
      $region33: #{_lambda_.28} parent=31 // pred_check
        %p475 = pneg %p100
      $region34: #{_lambda_.28} parent=31 // pred_check_branch
        %477 = sbr.rel (%p475) target = $region36
      $region35: #{_lambda_.28} parent=31 // pred_region
        %s478 = smul.u32 32, %s14
      $region36: #{_lambda_.28} parent=31 // pred_fallthru
        _
    $region32: #{_lambda_.28} parent=5 // pred_fallthru
      _
    %p479 = scmp.le.s32.totalorder 2, %s9
    // Predicated region
    $region37: #{_lambda_.28} parent=5 // pred_check
      %p480 = pneg %p479
    $region38: #{_lambda_.28} parent=5 // pred_check_branch
      %482 = sbr.rel (%p480) target = $region40
    $region39: #{_lambda_.28} parent=5 // pred_region
      %s483 = ssub.s32 %s9, 2
      // Predicated region
      $region41: #{_lambda_.28} parent=39 // pred_check
        %p484 = pneg %p106
      $region42: #{_lambda_.28} parent=39 // pred_check_branch
        %486 = sbr.rel (%p484) target = $region44
      $region43: #{_lambda_.28} parent=39 // pred_region
        %s487 = smul.u32 32, %s15
        %p488 = scmp.lt.s32.totalorder %s487, 63
        %s489 = scalar_select %p488, %s487, 63
        %s490 = smul.addr %s489, 8
        %s491 = scalar_lea.vmem %s3, %s490
      $region44: #{_lambda_.28} parent=39 // pred_fallthru
        _
    $region40: #{_lambda_.28} parent=5 // pred_fallthru
      _
  $region6: #{_lambda_.28} parent=0 // loop_footer
    %s13 = sadd.s32 1, %s9
  $region7: #{_lambda_.28} parent=0 // loop_footer_branch
    %8 = sbr.rel target = $region3
  $region8: #{_lambda_.28} parent=0 // loop_exit
    _

// kernel: _lambda_.29
$region0: #{_lambda_.29}
  #allocation0 [shape = 'u32[]', space=smem, size = 0x4, offset = 0x4, fixed_abs, tag = 'smem constant byte address 0x4 - core index']
  #allocation1 [shape = 'u32[72,128]{1,0:T(1,128)}', space=vmem, size = 0x9000, scoped, tag = 'internal scratch']
  %s0 = inlined_call_operand.vmem [shape: bf16[512,288], index: 0, kind: input, shape index: {}]
  %s1 = inlined_call_operand.vmem [shape: bf16[288,32], index: 1, kind: input, shape index: {}]
  %s2 = inlined_call_operand.vmem [shape: f32[1,32], index: 2, kind: input, shape index: {}]
  %s3 = inlined_call_operand.vmem [shape: f32[512,32], index: 3, kind: output, shape index: {}]
  %s4 = sld [smem:[#allocation0]]
  $region45: #{_lambda_.29} parent=0
    _
  %s6 = ssub.s32 1, %s4
  %s7 = scalar_select 0, %s6, %s4
  loop: start=0, step=1, limit=4
  $region2: #{_lambda_.29} parent=0 // loop_pre_header
    _
  $region3: #{_lambda_.29} parent=0 // loop_header
    %s9 = sphi 0, %s13
    %p10 = scmp.ge.s32.totalorder %s9, 4
    %s19 = sphi 0, %s21
    %s22 = sphi 0, %s19
    %s23 = sphi 0, %s22
    %s39 = sphi 0, %s23
    %s43 = sphi 0, %s43
    %s45 = sphi 0, %s43
    %s46 = sphi 0, %s45
    %s60 = sphi 0, %s46
    %s64 = sphi 0, %s64
    %s66 = sphi 0, %s64
    %s67 = sphi 0, %s66
    %s81 = sphi 0, %s67
    %s87 = sphi 0, %s89
    %s90 = sphi 0, %s87
    %s91 = sphi 0, %s90
    %s107 = sphi 0, %s91
  $region4: #{_lambda_.29} parent=0 // loop_header_branch
    %12 = sbr.rel (%p10) target = $region8
  $region5: #{_lambda_.29} parent=0 // loop_body
    %s14 = ssub.s32 %s9, 1
    %s15 = ssub.s32 %s9, 2
    %s16 = sadd.s32 %s9, 1
    %s17 = ssub.s32 %s9, %s16
    %p18 = scmp.eq.s32.totalorder %s17, 0
    %s20 = sadd.s32 %s19, 1
    %s21 = scalar_select %p18, %s19, %s20
    %p24 = pneg %p18
    %p25 = scmp.eq.s32.totalorder %s9, 1
    %p26 = por %p24, %p25
    %p27 = scmp.ne.s32.totalorder %s19, %s22
    %p28 = scmp.eq.s32.totalorder %s9, 0
    %p29 = por %p27, %p28
    %p30 = scmp.ne.s32.totalorder %s19, %s22
    %p31 = scmp.eq.s32.totalorder %s14, 1
    %p32 = por %p30, %p31
    %p33 = scmp.ne.s32.totalorder %s22, %s23
    %p34 = scmp.eq.s32.totalorder %s14, 0
    %p35 = por %p33, %p34
    %p36 = scmp.ne.s32.totalorder %s22, %s23
    %p37 = scmp.eq.s32.totalorder %s15, 1
    %p38 = por %p36, %p37
    %p40 = scmp.ne.s32.totalorder %s23, %s39
    %p41 = scmp.eq.s32.totalorder %s15, 0
    %p42 = por %p40, %p41
    %s44 = sadd.s32 %s43, 1
    %p47 = scmp.eq.s32.totalorder %s9, 1
    %p48 = scmp.ne.s32.totalorder %s43, %s45
    %p49 = scmp.eq.s32.totalorder %s9, 0
    %p50 = por %p48, %p49
    %p51 = scmp.ne.s32.totalorder %s43, %s45
    %p52 = scmp.eq.s32.totalorder %s14, 1
    %p53 = por %p51, %p52
    %p54 = scmp.ne.s32.totalorder %s45, %s46
    %p55 = scmp.eq.s32.totalorder %s14, 0
    %p56 = por %p54, %p55
    %p57 = scmp.ne.s32.totalorder %s45, %s46
    %p58 = scmp.eq.s32.totalorder %s15, 1
    %p59 = por %p57, %p58
    %p61 = scmp.ne.s32.totalorder %s46, %s60
    %p62 = scmp.eq.s32.totalorder %s15, 0
    %p63 = por %p61, %p62
    %s65 = sadd.s32 %s64, 1
    %p68 = scmp.eq.s32.totalorder %s9, 1
    %p69 = scmp.ne.s32.totalorder %s64, %s66
    %p70 = scmp.eq.s32.totalorder %s9, 0
    %p71 = por %p69, %p70
    %p72 = scmp.ne.s32.totalorder %s64, %s66
    %p73 = scmp.eq.s32.totalorder %s14, 1
    %p74 = por %p72, %p73
    %p75 = scmp.ne.s32.totalorder %s66, %s67
    %p76 = scmp.eq.s32.totalorder %s14, 0
    %p77 = por %p75, %p76
    %p78 = scmp.ne.s32.totalorder %s66, %s67
    %p79 = scmp.eq.s32.totalorder %s15, 1
    %p80 = por %p78, %p79
    %p82 = scmp.ne.s32.totalorder %s67, %s81
    %p83 = scmp.eq.s32.totalorder %s15, 0
    %p84 = por %p82, %p83
    %s85 = ssub.s32 %s9, %s16
    %p86 = scmp.eq.s32.totalorder %s85, 0
    %s88 = sadd.s32 %s87, 1
    %s89 = scalar_select %p86, %s87, %s88
    %p92 = pneg %p86
    %p93 = scmp.eq.s32.totalorder %s9, 1
    %p94 = por %p92, %p93
    %p95 = scmp.ne.s32.totalorder %s87, %s90
    %p96 = scmp.eq.s32.totalorder %s9, 0
    %p97 = por %p95, %p96
    %p98 = scmp.ne.s32.totalorder %s87, %s90
    %p99 = scmp.eq.s32.totalorder %s14, 1
    %p100 = por %p98, %p99
    %p101 = scmp.ne.s32.totalorder %s90, %s91
    %p102 = scmp.eq.s32.totalorder %s14, 0
    %p103 = por %p101, %p102
    %p104 = scmp.ne.s32.totalorder %s90, %s91
    %p105 = scmp.eq.s32.totalorder %s15, 1
    %p106 = por %p104, %p105
    %p108 = scmp.ne.s32.totalorder %s91, %s107
    %p109 = scmp.eq.s32.totalorder %s15, 0
    %p110 = por %p108, %p109
    %p111 = scmp.le.s32.totalorder 1, %s9
    %p112 = scmp.lt.s32.totalorder %s9, 3
    %p113 = pnand %p111, %p112
    %p114 = pneg %p113
    // Predicated region
    $region9: #{_lambda_.29} parent=5 // pred_check
      _
    $region10: #{_lambda_.29} parent=5 // pred_check_branch
      %116 = sbr.rel (%p113) target = $region12
    $region11: #{_lambda_.29} parent=5 // pred_region
      %s117 = ssub.s32 %s9, 1
      // Predicated region
      $region13: #{_lambda_.29} parent=11 // pred_check
        %p118 = pneg %p56
      $region14: #{_lambda_.29} parent=11 // pred_check_branch
        %120 = sbr.rel (%p118) target = $region16
      $region15: #{_lambda_.29} parent=11 // pred_region
        _
      $region16: #{_lambda_.29} parent=11 // pred_fallthru
        _
      // Predicated region
      $region17: #{_lambda_.29} parent=11 // pred_check
        %p121 = pneg %p77
      $region18: #{_lambda_.29} parent=11 // pred_check_branch
        %123 = sbr.rel (%p121) target = $region20
      $region19: #{_lambda_.29} parent=11 // pred_region
        _
      $region20: #{_lambda_.29} parent=11 // pred_fallthru
        _
    $region12: #{_lambda_.29} parent=5 // pred_fallthru
      _
    %p124 = scmp.lt.s32.totalorder %s9, 2
    // Predicated region
    $region21: #{_lambda_.29} parent=5 // pred_check
      %p125 = pneg %p124
    $region22: #{_lambda_.29} parent=5 // pred_check_branch
      %127 = sbr.rel (%p125) target = $region24
    $region23: #{_lambda_.29} parent=5 // pred_region
      // Predicated region
      $region25: #{_lambda_.29} parent=23 // pred_check
        %p128 = pneg %p29
      $region26: #{_lambda_.29} parent=23 // pred_check_branch
        %130 = sbr.rel (%p128) target = $region28
      $region27: #{_lambda_.29} parent=23 // pred_region
        %s131 = smul.u32 32, %s9
        %p132 = scmp.lt.s32.totalorder %s131, 63
        %s133 = scalar_select %p132, %s131, 63
        %s134 = smul.addr %s133, 3
        %s135 = smul.addr %s134, 4
        %s136 = scalar_lea.vmem %s0, %s135
        %s137 = smul.u32 32, %s9
      $region28: #{_lambda_.29} parent=23 // pred_fallthru
        _
    $region24: #{_lambda_.29} parent=5 // pred_fallthru
      _
    %p138 = scmp.le.s32.totalorder 1, %s9
    %p139 = scmp.lt.s32.totalorder %s9, 3
    %p140 = pnand %p138, %p139
    %p141 = pneg %p140
    // Predicated region
    $region29: #{_lambda_.29} parent=5 // pred_check
      _
    $region30: #{_lambda_.29} parent=5 // pred_check_branch
      %143 = sbr.rel (%p140) target = $region32
    $region31: #{_lambda_.29} parent=5 // pred_region
      %s144 = ssub.s32 %s9, 1
      %s145 = smul.u32 32, %s14
      %p146 = scmp.lt.s32.totalorder %s145, 63
      %s147 = scalar_select %p146, %s145, 63
      %s148 = smul.addr %s147, 3
      %s149 = smul.addr %s148, 4
      %s150 = scalar_lea.vmem %s0, %s149
      %p151 = pneg %p35
      %p152 = pneg %p32
      %p153 = pneg %p56
      %p154 = pneg %p53
      %p155 = pneg %p77
      %p156 = pneg %p74
      %p157 = pneg %p103
      %p158 = pneg %p100
      %s159 = smul.u32 32, %s14
      %p160 = scmp.lt.s32.totalorder %s159, 63
      %s161 = scalar_select %p160, %s159, 63
      %s162 = smul.addr %s161, 8
      %s163 = scalar_lea.vmem %s3, %s162
      %s164 = smul.u32 32, %s14
      %p165 = scmp.lt.s32.totalorder %s164, 63
      %s166 = scalar_select %p165, %s164, 63
      %s167 = smul.addr %s166, 3
      %s168 = smul.addr %s167, 4
      %s169 = scalar_lea.vmem %s0, %s168
      %s170 = smul.u32 32, %s14
      %s171 = smul.u32 32, %s14
      %p172 = scmp.lt.s32.totalorder %s171, 63
      %s173 = scalar_select %p172, %s171, 63
      %s174 = smul.addr %s173, 8
      %s175 = scalar_lea.vmem %s3, %s174
      %s176 = smul.u32 32, %s14
      %v178 = vld [vmem:[%s169] sm:$0xff]
      %v179 = vld [vmem:[%s169 + $0x8] sm:$0xf]
      %v180 = vld [vmem:[%s169 + $0xc] sm:$0xff]
      %v181 = vld [vmem:[%s169 + $0x14] sm:$0xf]
      %v182 = vld [vmem:[%s169 + $0x18] sm:$0xff]
      %v183 = vld [vmem:[%s169 + $0x20] sm:$0xf]
      %v184 = vld [vmem:[%s169 + $0x24] sm:$0xff]
      %v185 = vld [vmem:[%s169 + $0x2c] sm:$0xf]
      %v186 = vld [vmem:[%s169 + $0x30] sm:$0xff]
      %v187 = vld [vmem:[%s169 + $0x38] sm:$0xf]
      %v188 = vld [vmem:[%s169 + $0x3c] sm:$0xff]
      %v189 = vld [vmem:[%s169 + $0x44] sm:$0xf]
      %v190 = vld [vmem:[%s169 + $0x48] sm:$0xff]
      %v191 = vld [vmem:[%s169 + $0x50] sm:$0xf]
      %v192 = vld [vmem:[%s169 + $0x54] sm:$0xff]
      %v193 = vld [vmem:[%s169 + $0x5c] sm:$0xf]
      %v194 = vld [vmem:[%s169 + $0x60] sm:$0xff]
      %v195 = vld [vmem:[%s169 + $0x68] sm:$0xf]
      %v196 = vld [vmem:[%s169 + $0x6c] sm:$0xff]
      %v197 = vld [vmem:[%s169 + $0x74] sm:$0xf]
      %v198 = vld [vmem:[%s169 + $0x78] sm:$0xff]
      %v199 = vld [vmem:[%s169 + $0x80] sm:$0xf]
      %v200 = vld [vmem:[%s169 + $0x84] sm:$0xff]
      %v201 = vld [vmem:[%s169 + $0x8c] sm:$0xf]
      %v202 = vld [vmem:[%s169 + $0x90] sm:$0xff]
      %v203 = vld [vmem:[%s169 + $0x98] sm:$0xf]
      %v204 = vld [vmem:[%s169 + $0x9c] sm:$0xff]
      %v205 = vld [vmem:[%s169 + $0xa4] sm:$0xf]
      %v206 = vld [vmem:[%s169 + $0xa8] sm:$0xff]
      %v207 = vld [vmem:[%s169 + $0xb0] sm:$0xf]
      %v208 = vld [vmem:[%s169 + $0xb4] sm:$0xff]
      %v209 = vld [vmem:[%s169 + $0xbc] sm:$0xf]
      %v210 = vld [vmem:[%s169 + $0xc0] sm:$0xff]
      %v211 = vld [vmem:[%s169 + $0xc8] sm:$0xf]
      %v212 = vld [vmem:[%s169 + $0xcc] sm:$0xff]
      %v213 = vld [vmem:[%s169 + $0xd4] sm:$0xf]
      %v214 = vld [vmem:[%s169 + $0xd8] sm:$0xff]
      %v215 = vld [vmem:[%s169 + $0xe0] sm:$0xf]
      %v216 = vld [vmem:[%s169 + $0xe4] sm:$0xff]
      %v217 = vld [vmem:[%s169 + $0xec] sm:$0xf]
      %v218 = vld [vmem:[%s169 + $0xf0] sm:$0xff]
      %v219 = vld [vmem:[%s169 + $0xf8] sm:$0xf]
      %v220 = vld [vmem:[%s169 + $0xfc] sm:$0xff]
      %v221 = vld [vmem:[%s169 + $0x104] sm:$0xf]
      %v222 = vld [vmem:[%s169 + $0x108] sm:$0xff]
      %v223 = vld [vmem:[%s169 + $0x110] sm:$0xf]
      %v224 = vld [vmem:[%s169 + $0x114] sm:$0xff]
      %v225 = vld [vmem:[%s169 + $0x11c] sm:$0xf]
      %v226 = vld [vmem:[%s169 + $0x120] sm:$0xff]
      %v227 = vld [vmem:[%s169 + $0x128] sm:$0xf]
      %v228 = vld [vmem:[%s169 + $0x12c] sm:$0xff]
      %v229 = vld [vmem:[%s169 + $0x134] sm:$0xf]
      %v230 = vld [vmem:[%s169 + $0x138] sm:$0xff]
      %v231 = vld [vmem:[%s169 + $0x140] sm:$0xf]
      %v232 = vld [vmem:[%s169 + $0x144] sm:$0xff]
      %v233 = vld [vmem:[%s169 + $0x14c] sm:$0xf]
      %v234 = vld [vmem:[%s169 + $0x150] sm:$0xff]
      %v235 = vld [vmem:[%s169 + $0x158] sm:$0xf]
      %v236 = vld [vmem:[%s169 + $0x15c] sm:$0xff]
      %v237 = vld [vmem:[%s169 + $0x164] sm:$0xf]
      %v238 = vld [vmem:[%s169 + $0x168] sm:$0xff]
      %v239 = vld [vmem:[%s169 + $0x170] sm:$0xf]
      %v240 = vld [vmem:[%s169 + $0x174] sm:$0xff]
      %v241 = vld [vmem:[%s169 + $0x17c] sm:$0xf]
      %v242 = vld [vmem:[%s1] sm:$0xf]
      %v243 = vld [vmem:[%s1 + $0x4] sm:$0xf]
      %v244 = vld [vmem:[%s1 + $0x8] sm:$0xf]
      %v245 = vld [vmem:[%s1 + $0xc] sm:$0xf]
      %v246 = vld [vmem:[%s1 + $0x10] sm:$0xf]
      %v247 = vld [vmem:[%s1 + $0x14] sm:$0xf]
      %v248 = vld [vmem:[%s1 + $0x18] sm:$0xf]
      %v249 = vld [vmem:[%s1 + $0x1c] sm:$0xf]
      %v250 = vld [vmem:[%s1 + $0x20] sm:$0xf]
      %v251 = vld [vmem:[%s1 + $0x24] sm:$0xf]
      %v252 = vld [vmem:[%s1 + $0x28] sm:$0xf]
      %v253 = vld [vmem:[%s1 + $0x2c] sm:$0xf]
      %v254 = vld [vmem:[%s1 + $0x30] sm:$0xf]
      %v255 = vld [vmem:[%s1 + $0x34] sm:$0xf]
      %v256 = vld [vmem:[%s1 + $0x38] sm:$0xf]
      %v257 = vld [vmem:[%s1 + $0x3c] sm:$0xf]
      %v258 = vld [vmem:[%s1 + $0x40] sm:$0xf]
      %v259 = vld [vmem:[%s1 + $0x44] sm:$0xf]
      %v260 = vld [vmem:[%s1 + $0x48] sm:$0xf]
      %v261 = vld [vmem:[%s1 + $0x4c] sm:$0xf]
      %v262 = vld [vmem:[%s1 + $0x50] sm:$0xf]
      %v263 = vld [vmem:[%s1 + $0x54] sm:$0xf]
      %v264 = vld [vmem:[%s1 + $0x58] sm:$0xf]
      %v265 = vld [vmem:[%s1 + $0x5c] sm:$0xf]
      %v266 = vld [vmem:[%s1 + $0x60] sm:$0xf]
      %v267 = vld [vmem:[%s1 + $0x64] sm:$0xf]
      %v268 = vld [vmem:[%s1 + $0x68] sm:$0xf]
      %v269 = vld [vmem:[%s1 + $0x6c] sm:$0xf]
      %v270 = vld [vmem:[%s1 + $0x70] sm:$0xf]
      %v271 = vld [vmem:[%s1 + $0x74] sm:$0xf]
      %v272 = vld [vmem:[%s1 + $0x78] sm:$0xf]
      %v273 = vld [vmem:[%s1 + $0x7c] sm:$0xf]
      %v274 = vld [vmem:[%s1 + $0x80] sm:$0xf]
      %v275 = vld [vmem:[%s1 + $0x84] sm:$0xf]
      %v276 = vld [vmem:[%s1 + $0x88] sm:$0xf]
      %v277 = vld [vmem:[%s1 + $0x8c] sm:$0xf]
      %v278 = vld [vmem:[%s2] sm:$0x1]
      %v280 = vperm.slane %v278, 0
      %v346 = vunpack.c.l.b16 %v178
      %v347 = vunpack.c.h.b16 %v178
      %v348 = vunpack.c.l.b16 %v179
      %v349 = vunpack.c.l.b16 %v180
      %v350 = vunpack.c.h.b16 %v180
      %v351 = vunpack.c.l.b16 %v181
      %v352 = vunpack.c.l.b16 %v182
      %v353 = vunpack.c.h.b16 %v182
      %v354 = vunpack.c.l.b16 %v183
      %v355 = vunpack.c.l.b16 %v184
      %v356 = vunpack.c.h.b16 %v184
      %v357 = vunpack.c.l.b16 %v185
      %v358 = vunpack.c.l.b16 %v186
      %v359 = vunpack.c.h.b16 %v186
      %v360 = vunpack.c.l.b16 %v187
      %v361 = vunpack.c.l.b16 %v188
      %v362 = vunpack.c.h.b16 %v188
      %v363 = vunpack.c.l.b16 %v189
      %v364 = vunpack.c.l.b16 %v190
      %v365 = vunpack.c.h.b16 %v190
      %v366 = vunpack.c.l.b16 %v191
      %v367 = vunpack.c.l.b16 %v192
      %v368 = vunpack.c.h.b16 %v192
      %v369 = vunpack.c.l.b16 %v193
      %v370 = vunpack.c.l.b16 %v194
      %v371 = vunpack.c.h.b16 %v194
      %v372 = vunpack.c.l.b16 %v195
      %v373 = vunpack.c.l.b16 %v196
      %v374 = vunpack.c.h.b16 %v196
      %v375 = vunpack.c.l.b16 %v197
      %v376 = vunpack.c.l.b16 %v198
      %v377 = vunpack.c.h.b16 %v198
      %v378 = vunpack.c.l.b16 %v199
      %v379 = vunpack.c.l.b16 %v200
      %v380 = vunpack.c.h.b16 %v200
      %v381 = vunpack.c.l.b16 %v201
      %v382 = vunpack.c.l.b16 %v202
      %v383 = vunpack.c.h.b16 %v202
      %v384 = vunpack.c.l.b16 %v203
      %v385 = vunpack.c.l.b16 %v204
      %v386 = vunpack.c.h.b16 %v204
      %v387 = vunpack.c.l.b16 %v205
      %v388 = vunpack.c.l.b16 %v206
      %v389 = vunpack.c.h.b16 %v206
      %v390 = vunpack.c.l.b16 %v207
      %v391 = vunpack.c.l.b16 %v208
      %v392 = vunpack.c.h.b16 %v208
      %v393 = vunpack.c.l.b16 %v209
      %v394 = vunpack.c.l.b16 %v210
      %v395 = vunpack.c.h.b16 %v210
      %v396 = vunpack.c.l.b16 %v211
      %v397 = vunpack.c.l.b16 %v212
      %v398 = vunpack.c.h.b16 %v212
      %v399 = vunpack.c.l.b16 %v213
      %v400 = vunpack.c.l.b16 %v214
      %v401 = vunpack.c.h.b16 %v214
      %v402 = vunpack.c.l.b16 %v215
      %v403 = vunpack.c.l.b16 %v216
      %v404 = vunpack.c.h.b16 %v216
      %v405 = vunpack.c.l.b16 %v217
      %v406 = vunpack.c.l.b16 %v218
      %v407 = vunpack.c.h.b16 %v218
      %v408 = vunpack.c.l.b16 %v219
      %v409 = vunpack.c.l.b16 %v220
      %v410 = vunpack.c.h.b16 %v220
      %v411 = vunpack.c.l.b16 %v221
      %v412 = vunpack.c.l.b16 %v222
      %v413 = vunpack.c.h.b16 %v222
      %v414 = vunpack.c.l.b16 %v223
      %v415 = vunpack.c.l.b16 %v224
      %v416 = vunpack.c.h.b16 %v224
      %v417 = vunpack.c.l.b16 %v225
      %v418 = vunpack.c.l.b16 %v226
      %v419 = vunpack.c.h.b16 %v226
      %v420 = vunpack.c.l.b16 %v227
      %v421 = vunpack.c.l.b16 %v228
      %v422 = vunpack.c.h.b16 %v228
      %v423 = vunpack.c.l.b16 %v229
      %v424 = vunpack.c.l.b16 %v230
      %v425 = vunpack.c.h.b16 %v230
      %v426 = vunpack.c.l.b16 %v231
      %v427 = vunpack.c.l.b16 %v232
      %v428 = vunpack.c.h.b16 %v232
      %v429 = vunpack.c.l.b16 %v233
      %v430 = vunpack.c.l.b16 %v234
      %v431 = vunpack.c.h.b16 %v234
      %v432 = vunpack.c.l.b16 %v235
      %v433 = vunpack.c.l.b16 %v236
      %v434 = vunpack.c.h.b16 %v236
      %v435 = vunpack.c.l.b16 %v237
      %v436 = vunpack.c.l.b16 %v238
      %v437 = vunpack.c.h.b16 %v238
      %v438 = vunpack.c.l.b16 %v239
      %v439 = vunpack.c.l.b16 %v240
      %v440 = vunpack.c.h.b16 %v240
      %v441 = vunpack.c.l.b16 %v241
      %v442 = vpack.c.b16 %v349, %v346
      %v443 = vpack.c.b16 %v350, %v347
      %v444 = vpack.c.b16 %v351, %v348
      %v445 = vpack.c.b16 %v355, %v352
      %v446 = vpack.c.b16 %v356, %v353
      %v447 = vpack.c.b16 %v357, %v354
      %v448 = vpack.c.b16 %v361, %v358
      %v449 = vpack.c.b16 %v362, %v359
      %v450 = vpack.c.b16 %v363, %v360
      %v451 = vpack.c.b16 %v367, %v364
      %v452 = vpack.c.b16 %v368, %v365
      %v453 = vpack.c.b16 %v369, %v366
      %v454 = vpack.c.b16 %v373, %v370
      %v455 = vpack.c.b16 %v374, %v371
      %v456 = vpack.c.b16 %v375, %v372
      %v457 = vpack.c.b16 %v379, %v376
      %v458 = vpack.c.b16 %v380, %v377
      %v459 = vpack.c.b16 %v381, %v378
      %v460 = vpack.c.b16 %v385, %v382
      %v461 = vpack.c.b16 %v386, %v383
      %v462 = vpack.c.b16 %v387, %v384
      %v463 = vpack.c.b16 %v391, %v388
      %v464 = vpack.c.b16 %v392, %v389
      %v465 = vpack.c.b16 %v393, %v390
      %v466 = vpack.c.b16 %v397, %v394
      %v467 = vpack.c.b16 %v398, %v395
      %v468 = vpack.c.b16 %v399, %v396
      %v469 = vpack.c.b16 %v403, %v400
      %v470 = vpack.c.b16 %v404, %v401
      %v471 = vpack.c.b16 %v405, %v402
      %v472 = vpack.c.b16 %v409, %v406
      %v473 = vpack.c.b16 %v410, %v407
      %v474 = vpack.c.b16 %v411, %v408
      %v475 = vpack.c.b16 %v415, %v412
      %v476 = vpack.c.b16 %v416, %v413
      %v477 = vpack.c.b16 %v417, %v414
      %v478 = vpack.c.b16 %v421, %v418
      %v479 = vpack.c.b16 %v422, %v419
      %v480 = vpack.c.b16 %v423, %v420
      %v481 = vpack.c.b16 %v427, %v424
      %v482 = vpack.c.b16 %v428, %v425
      %v483 = vpack.c.b16 %v429, %v426
      %v484 = vpack.c.b16 %v433, %v430
      %v485 = vpack.c.b16 %v434, %v431
      %v486 = vpack.c.b16 %v435, %v432
      %v487 = vpack.c.b16 %v439, %v436
      %v488 = vpack.c.b16 %v440, %v437
      %v489 = vpack.c.b16 %v441, %v438
      %v558 = vunpack.c.l.b16 %v242
      %v559 = vunpack.c.l.b16 %v243
      %v560 = vunpack.c.l.b16 %v244
      %v561 = vunpack.c.l.b16 %v245
      %v562 = vunpack.c.l.b16 %v246
      %v563 = vunpack.c.l.b16 %v247
      %v564 = vunpack.c.l.b16 %v248
      %v565 = vunpack.c.l.b16 %v249
      %v566 = vunpack.c.l.b16 %v250
      %v567 = vunpack.c.l.b16 %v251
      %v568 = vunpack.c.l.b16 %v252
      %v569 = vunpack.c.l.b16 %v253
      %v570 = vunpack.c.l.b16 %v254
      %v571 = vunpack.c.l.b16 %v255
      %v572 = vunpack.c.l.b16 %v256
      %v573 = vunpack.c.l.b16 %v257
      %v574 = vunpack.c.l.b16 %v258
      %v575 = vunpack.c.l.b16 %v259
      %v576 = vunpack.c.l.b16 %v260
      %v577 = vunpack.c.l.b16 %v261
      %v578 = vunpack.c.l.b16 %v262
      %v579 = vunpack.c.l.b16 %v263
      %v580 = vunpack.c.l.b16 %v264
      %v581 = vunpack.c.l.b16 %v265
      %v582 = vunpack.c.l.b16 %v266
      %v583 = vunpack.c.l.b16 %v267
      %v584 = vunpack.c.l.b16 %v268
      %v585 = vunpack.c.l.b16 %v269
      %v586 = vunpack.c.l.b16 %v270
      %v587 = vunpack.c.l.b16 %v271
      %v588 = vunpack.c.l.b16 %v272
      %v589 = vunpack.c.l.b16 %v273
      %v590 = vunpack.c.l.b16 %v274
      %v591 = vunpack.c.l.b16 %v275
      %v592 = vunpack.c.l.b16 %v276
      %v593 = vunpack.c.l.b16 %v277
      %v594 = vpack.c.b16 %v559, %v558
      %v595 = vpack.c.b16 %v561, %v560
      %v596 = vpack.c.b16 %v563, %v562
      %v597 = vpack.c.b16 %v565, %v564
      %v598 = vpack.c.b16 %v567, %v566
      %v599 = vpack.c.b16 %v569, %v568
      %v600 = vpack.c.b16 %v571, %v570
      %v601 = vpack.c.b16 %v573, %v572
      %v602 = vpack.c.b16 %v575, %v574
      %v603 = vpack.c.b16 %v577, %v576
      %v604 = vpack.c.b16 %v579, %v578
      %v605 = vpack.c.b16 %v581, %v580
      %v606 = vpack.c.b16 %v583, %v582
      %v607 = vpack.c.b16 %v585, %v584
      %v608 = vpack.c.b16 %v587, %v586
      %v609 = vpack.c.b16 %v589, %v588
      %v610 = vpack.c.b16 %v591, %v590
      %v611 = vpack.c.b16 %v593, %v592
      %vm630 = vcmask 261120
      %v632 = vsel %vm630, %v444, 0
      %v635 = vsel %vm630, %v447, 0
      %v638 = vsel %vm630, %v450, 0
      %v641 = vsel %vm630, %v453, 0
      %v644 = vsel %vm630, %v456, 0
      %v647 = vsel %vm630, %v459, 0
      %v650 = vsel %vm630, %v462, 0
      %v653 = vsel %vm630, %v465, 0
      %v656 = vsel %vm630, %v468, 0
      %v659 = vsel %vm630, %v471, 0
      %v662 = vsel %vm630, %v474, 0
      %v665 = vsel %vm630, %v477, 0
      %v668 = vsel %vm630, %v480, 0
      %v671 = vsel %vm630, %v483, 0
      %v674 = vsel %vm630, %v486, 0
      %v677 = vsel %vm630, %v489, 0
      %679 = vmatpush.bf16.msra.mxu0 %v601
      %680 = vmatpush.bf16.msra.mxu0 %v600
      %681 = vmatpush.bf16.msra.mxu0 %v599
      %682 = vmatpush.bf16.msra.mxu0 %v598
      %683 = vmatpush.bf16.msra.mxu0 %v597
      %684 = vmatpush.bf16.msra.mxu0 %v596
      %685 = vmatpush.bf16.msra.mxu0 %v595
      %686 = vmatpush.bf16.msra.mxu0 %v594
      %687 = vmatmul.bf16.gmra.mxu0 %v442
      %v688 = vpop.f32.mrf.mxu0
      %v689 = vadd.f32 %v280, %v688
      %v690 = vpop.f32.mrf.mxu0
      %v691 = vadd.f32 %v280, %v690
      %692 = vmatmul.bf16.gmra.mxu0 %v445
      %v693 = vpop.f32.mrf.mxu0
      %v694 = vadd.f32 %v280, %v693
      %v695 = vpop.f32.mrf.mxu0
      %v696 = vadd.f32 %v280, %v695
      %697 = vmatmul.bf16.gmra.mxu0 %v448
      %v698 = vpop.f32.mrf.mxu0
      %v699 = vadd.f32 %v280, %v698
      %v700 = vpop.f32.mrf.mxu0
      %v701 = vadd.f32 %v280, %v700
      %702 = vmatmul.bf16.gmra.mxu0 %v451
      %v703 = vpop.f32.mrf.mxu0
      %v704 = vadd.f32 %v280, %v703
      %v705 = vpop.f32.mrf.mxu0
      %v706 = vadd.f32 %v280, %v705
      %707 = vmatmul.bf16.gmra.mxu0 %v454
      %v708 = vpop.f32.mrf.mxu0
      %v709 = vadd.f32 %v280, %v708
      %v710 = vpop.f32.mrf.mxu0
      %v711 = vadd.f32 %v280, %v710
      %712 = vmatmul.bf16.gmra.mxu0 %v457
      %v713 = vpop.f32.mrf.mxu0
      %v714 = vadd.f32 %v280, %v713
      %v715 = vpop.f32.mrf.mxu0
      %v716 = vadd.f32 %v280, %v715
      %717 = vmatmul.bf16.gmra.mxu0 %v460
      %v718 = vpop.f32.mrf.mxu0
      %v719 = vadd.f32 %v280, %v718
      %v720 = vpop.f32.mrf.mxu0
      %v721 = vadd.f32 %v280, %v720
      %722 = vmatmul.bf16.gmra.mxu0 %v463
      %v723 = vpop.f32.mrf.mxu0
      %v724 = vadd.f32 %v280, %v723
      %v725 = vpop.f32.mrf.mxu0
      %v726 = vadd.f32 %v280, %v725
      %727 = vmatmul.bf16.gmra.mxu0 %v466
      %v728 = vpop.f32.mrf.mxu0
      %v729 = vadd.f32 %v280, %v728
      %v730 = vpop.f32.mrf.mxu0
      %v731 = vadd.f32 %v280, %v730
      %732 = vmatmul.bf16.gmra.mxu0 %v469
      %v733 = vpop.f32.mrf.mxu0
      %v734 = vadd.f32 %v280, %v733
      %v735 = vpop.f32.mrf.mxu0
      %v736 = vadd.f32 %v280, %v735
      %737 = vmatmul.bf16.gmra.mxu0 %v472
      %v738 = vpop.f32.mrf.mxu0
      %v739 = vadd.f32 %v280, %v738
      %v740 = vpop.f32.mrf.mxu0
      %v741 = vadd.f32 %v280, %v740
      %742 = vmatmul.bf16.gmra.mxu0 %v475
      %v743 = vpop.f32.mrf.mxu0
      %v744 = vadd.f32 %v280, %v743
      %v745 = vpop.f32.mrf.mxu0
      %v746 = vadd.f32 %v280, %v745
      %747 = vmatmul.bf16.gmra.mxu0 %v478
      %v748 = vpop.f32.mrf.mxu0
      %v749 = vadd.f32 %v280, %v748
      %v750 = vpop.f32.mrf.mxu0
      %v751 = vadd.f32 %v280, %v750
      %752 = vmatmul.bf16.gmra.mxu0 %v481
      %v753 = vpop.f32.mrf.mxu0
      %v754 = vadd.f32 %v280, %v753
      %v755 = vpop.f32.mrf.mxu0
      %v756 = vadd.f32 %v280, %v755
      %757 = vmatmul.bf16.gmra.mxu0 %v484
      %v758 = vpop.f32.mrf.mxu0
      %v759 = vadd.f32 %v280, %v758
      %v760 = vpop.f32.mrf.mxu0
      %v761 = vadd.f32 %v280, %v760
      %762 = vmatmul.bf16.gmra.mxu0 %v487
      %v763 = vpop.f32.mrf.mxu0
      %v764 = vadd.f32 %v280, %v763
      %v765 = vpop.f32.mrf.mxu0
      %v766 = vadd.f32 %v280, %v765
      %767 = vdwg.mxu0
      %768 = vmatpush.bf16.msra.mxu0 %v609
      %769 = vmatpush.bf16.msra.mxu0 %v608
      %770 = vmatpush.bf16.msra.mxu0 %v607
      %771 = vmatpush.bf16.msra.mxu0 %v606
      %772 = vmatpush.bf16.msra.mxu0 %v605
      %773 = vmatpush.bf16.msra.mxu0 %v604
      %774 = vmatpush.bf16.msra.mxu0 %v603
      %775 = vmatpush.bf16.msra.mxu0 %v602
      %776 = vmatmul.bf16.gmra.mxu0 %v443
      %v777 = vpop.f32.mrf.mxu0
      %v778 = vadd.f32 %v689, %v777
      %v779 = vpop.f32.mrf.mxu0
      %v780 = vadd.f32 %v691, %v779
      %781 = vmatmul.bf16.gmra.mxu0 %v446
      %v782 = vpop.f32.mrf.mxu0
      %v783 = vadd.f32 %v694, %v782
      %v784 = vpop.f32.mrf.mxu0
      %v785 = vadd.f32 %v696, %v784
      %786 = vmatmul.bf16.gmra.mxu0 %v449
      %v787 = vpop.f32.mrf.mxu0
      %v788 = vadd.f32 %v699, %v787
      %v789 = vpop.f32.mrf.mxu0
      %v790 = vadd.f32 %v701, %v789
      %791 = vmatmul.bf16.gmra.mxu0 %v452
      %v792 = vpop.f32.mrf.mxu0
      %v793 = vadd.f32 %v704, %v792
      %v794 = vpop.f32.mrf.mxu0
      %v795 = vadd.f32 %v706, %v794
      %796 = vmatmul.bf16.gmra.mxu0 %v455
      %v797 = vpop.f32.mrf.mxu0
      %v798 = vadd.f32 %v709, %v797
      %v799 = vpop.f32.mrf.mxu0
      %v800 = vadd.f32 %v711, %v799
      %801 = vmatmul.bf16.gmra.mxu0 %v458
      %v802 = vpop.f32.mrf.mxu0
      %v803 = vadd.f32 %v714, %v802
      %v804 = vpop.f32.mrf.mxu0
      %v805 = vadd.f32 %v716, %v804
      %806 = vmatmul.bf16.gmra.mxu0 %v461
      %v807 = vpop.f32.mrf.mxu0
      %v808 = vadd.f32 %v719, %v807
      %v809 = vpop.f32.mrf.mxu0
      %v810 = vadd.f32 %v721, %v809
      %811 = vmatmul.bf16.gmra.mxu0 %v464
      %v812 = vpop.f32.mrf.mxu0
      %v813 = vadd.f32 %v724, %v812
      %v814 = vpop.f32.mrf.mxu0
      %v815 = vadd.f32 %v726, %v814
      %816 = vmatmul.bf16.gmra.mxu0 %v467
      %v817 = vpop.f32.mrf.mxu0
      %v818 = vadd.f32 %v729, %v817
      %v819 = vpop.f32.mrf.mxu0
      %v820 = vadd.f32 %v731, %v819
      %821 = vmatmul.bf16.gmra.mxu0 %v470
      %v822 = vpop.f32.mrf.mxu0
      %v823 = vadd.f32 %v734, %v822
      %v824 = vpop.f32.mrf.mxu0
      %v825 = vadd.f32 %v736, %v824
      %826 = vmatmul.bf16.gmra.mxu0 %v473
      %v827 = vpop.f32.mrf.mxu0
      %v828 = vadd.f32 %v739, %v827
      %v829 = vpop.f32.mrf.mxu0
      %v830 = vadd.f32 %v741, %v829
      %831 = vmatmul.bf16.gmra.mxu0 %v476
      %v832 = vpop.f32.mrf.mxu0
      %v833 = vadd.f32 %v744, %v832
      %v834 = vpop.f32.mrf.mxu0
      %v835 = vadd.f32 %v746, %v834
      %836 = vmatmul.bf16.gmra.mxu0 %v479
      %v837 = vpop.f32.mrf.mxu0
      %v838 = vadd.f32 %v749, %v837
      %v839 = vpop.f32.mrf.mxu0
      %v840 = vadd.f32 %v751, %v839
      %841 = vmatmul.bf16.gmra.mxu0 %v482
      %v842 = vpop.f32.mrf.mxu0
      %v843 = vadd.f32 %v754, %v842
      %v844 = vpop.f32.mrf.mxu0
      %v845 = vadd.f32 %v756, %v844
      %846 = vmatmul.bf16.gmra.mxu0 %v485
      %v847 = vpop.f32.mrf.mxu0
      %v848 = vadd.f32 %v759, %v847
      %v849 = vpop.f32.mrf.mxu0
      %v850 = vadd.f32 %v761, %v849
      %851 = vmatmul.bf16.gmra.mxu0 %v488
      %v852 = vpop.f32.mrf.mxu0
      %v853 = vadd.f32 %v764, %v852
      %v854 = vpop.f32.mrf.mxu0
      %v855 = vadd.f32 %v766, %v854
      %856 = vdwg.mxu0
      %857 = vmatpush.bf16.msra.mxu0 0
      %858 = vmatpush.bf16.msra.mxu0 0
      %859 = vmatpush.bf16.msra.mxu0 0
      %860 = vmatpush.bf16.msra.mxu0 0
      %861 = vmatpush.bf16.msra.mxu0 0
      %862 = vmatpush.bf16.msra.mxu0 0
      %863 = vmatpush.bf16.msra.mxu0 %v611
      %864 = vmatpush.bf16.msra.mxu0 %v610
      %865 = vmatmul.bf16.gmra.mxu0 %v632
      %v866 = vpop.f32.mrf.mxu0
      %v867 = vadd.f32 %v778, %v866
      %v868 = vpop.f32.mrf.mxu0
      %v869 = vadd.f32 %v780, %v868
      %870 = vmatmul.bf16.gmra.mxu0 %v635
      %v871 = vpop.f32.mrf.mxu0
      %v872 = vadd.f32 %v783, %v871
      %v873 = vpop.f32.mrf.mxu0
      %v874 = vadd.f32 %v785, %v873
      %875 = vmatmul.bf16.gmra.mxu0 %v638
      %v876 = vpop.f32.mrf.mxu0
      %v877 = vadd.f32 %v788, %v876
      %v878 = vpop.f32.mrf.mxu0
      %v879 = vadd.f32 %v790, %v878
      %880 = vmatmul.bf16.gmra.mxu0 %v641
      %v881 = vpop.f32.mrf.mxu0
      %v882 = vadd.f32 %v793, %v881
      %v883 = vpop.f32.mrf.mxu0
      %v884 = vadd.f32 %v795, %v883
      %885 = vmatmul.bf16.gmra.mxu0 %v644
      %v886 = vpop.f32.mrf.mxu0
      %v887 = vadd.f32 %v798, %v886
      %v888 = vpop.f32.mrf.mxu0
      %v889 = vadd.f32 %v800, %v888
      %890 = vmatmul.bf16.gmra.mxu0 %v647
      %v891 = vpop.f32.mrf.mxu0
      %v892 = vadd.f32 %v803, %v891
      %v893 = vpop.f32.mrf.mxu0
      %v894 = vadd.f32 %v805, %v893
      %895 = vmatmul.bf16.gmra.mxu0 %v650
      %v896 = vpop.f32.mrf.mxu0
      %v897 = vadd.f32 %v808, %v896
      %v898 = vpop.f32.mrf.mxu0
      %v899 = vadd.f32 %v810, %v898
      %900 = vmatmul.bf16.gmra.mxu0 %v653
      %v901 = vpop.f32.mrf.mxu0
      %v902 = vadd.f32 %v813, %v901
      %v903 = vpop.f32.mrf.mxu0
      %v904 = vadd.f32 %v815, %v903
      %905 = vmatmul.bf16.gmra.mxu0 %v656
      %v906 = vpop.f32.mrf.mxu0
      %v907 = vadd.f32 %v818, %v906
      %v908 = vpop.f32.mrf.mxu0
      %v909 = vadd.f32 %v820, %v908
      %910 = vmatmul.bf16.gmra.mxu0 %v659
      %v911 = vpop.f32.mrf.mxu0
      %v912 = vadd.f32 %v823, %v911
      %v913 = vpop.f32.mrf.mxu0
      %v914 = vadd.f32 %v825, %v913
      %915 = vmatmul.bf16.gmra.mxu0 %v662
      %v916 = vpop.f32.mrf.mxu0
      %v917 = vadd.f32 %v828, %v916
      %v918 = vpop.f32.mrf.mxu0
      %v919 = vadd.f32 %v830, %v918
      %920 = vmatmul.bf16.gmra.mxu0 %v665
      %v921 = vpop.f32.mrf.mxu0
      %v922 = vadd.f32 %v833, %v921
      %v923 = vpop.f32.mrf.mxu0
      %v924 = vadd.f32 %v835, %v923
      %925 = vmatmul.bf16.gmra.mxu0 %v668
      %v926 = vpop.f32.mrf.mxu0
      %v927 = vadd.f32 %v838, %v926
      %v928 = vpop.f32.mrf.mxu0
      %v929 = vadd.f32 %v840, %v928
      %930 = vmatmul.bf16.gmra.mxu0 %v671
      %v931 = vpop.f32.mrf.mxu0
      %v932 = vadd.f32 %v843, %v931
      %v933 = vpop.f32.mrf.mxu0
      %v934 = vadd.f32 %v845, %v933
      %935 = vmatmul.bf16.gmra.mxu0 %v674
      %v936 = vpop.f32.mrf.mxu0
      %v937 = vadd.f32 %v848, %v936
      %v938 = vpop.f32.mrf.mxu0
      %v939 = vadd.f32 %v850, %v938
      %940 = vmatmul.bf16.gmra.mxu0 %v677
      %v941 = vpop.f32.mrf.mxu0
      %v942 = vadd.f32 %v853, %v941
      %v943 = vpop.f32.mrf.mxu0
      %v944 = vadd.f32 %v855, %v943
      %945 = vdwg.mxu0
      %946 = vst.msk [vmem:[%s175] sm:$0xff] %vm630, %v867
      %947 = vst.msk [vmem:[%s175 + $0x8] sm:$0xff] %vm630, %v869
      %948 = vst.msk [vmem:[%s175 + $0x10] sm:$0xff] %vm630, %v872
      %949 = vst.msk [vmem:[%s175 + $0x18] sm:$0xff] %vm630, %v874
      %950 = vst.msk [vmem:[%s175 + $0x20] sm:$0xff] %vm630, %v877
      %951 = vst.msk [vmem:[%s175 + $0x28] sm:$0xff] %vm630, %v879
      %952 = vst.msk [vmem:[%s175 + $0x30] sm:$0xff] %vm630, %v882
      %953 = vst.msk [vmem:[%s175 + $0x38] sm:$0xff] %vm630, %v884
      %954 = vst.msk [vmem:[%s175 + $0x40] sm:$0xff] %vm630, %v887
      %955 = vst.msk [vmem:[%s175 + $0x48] sm:$0xff] %vm630, %v889
      %956 = vst.msk [vmem:[%s175 + $0x50] sm:$0xff] %vm630, %v892
      %957 = vst.msk [vmem:[%s175 + $0x58] sm:$0xff] %vm630, %v894
      %958 = vst.msk [vmem:[%s175 + $0x60] sm:$0xff] %vm630, %v897
      %959 = vst.msk [vmem:[%s175 + $0x68] sm:$0xff] %vm630, %v899
      %960 = vst.msk [vmem:[%s175 + $0x70] sm:$0xff] %vm630, %v902
      %961 = vst.msk [vmem:[%s175 + $0x78] sm:$0xff] %vm630, %v904
      %962 = vst.msk [vmem:[%s175 + $0x80] sm:$0xff] %vm630, %v907
      %963 = vst.msk [vmem:[%s175 + $0x88] sm:$0xff] %vm630, %v909
      %964 = vst.msk [vmem:[%s175 + $0x90] sm:$0xff] %vm630, %v912
      %965 = vst.msk [vmem:[%s175 + $0x98] sm:$0xff] %vm630, %v914
      %966 = vst.msk [vmem:[%s175 + $0xa0] sm:$0xff] %vm630, %v917
      %967 = vst.msk [vmem:[%s175 + $0xa8] sm:$0xff] %vm630, %v919
      %968 = vst.msk [vmem:[%s175 + $0xb0] sm:$0xff] %vm630, %v922
      %969 = vst.msk [vmem:[%s175 + $0xb8] sm:$0xff] %vm630, %v924
      %970 = vst.msk [vmem:[%s175 + $0xc0] sm:$0xff] %vm630, %v927
      %971 = vst.msk [vmem:[%s175 + $0xc8] sm:$0xff] %vm630, %v929
      %972 = vst.msk [vmem:[%s175 + $0xd0] sm:$0xff] %vm630, %v932
      %973 = vst.msk [vmem:[%s175 + $0xd8] sm:$0xff] %vm630, %v934
      %974 = vst.msk [vmem:[%s175 + $0xe0] sm:$0xff] %vm630, %v937
      %975 = vst.msk [vmem:[%s175 + $0xe8] sm:$0xff] %vm630, %v939
      %976 = vst.msk [vmem:[%s175 + $0xf0] sm:$0xff] %vm630, %v942
      %977 = vst.msk [vmem:[%s175 + $0xf8] sm:$0xff] %vm630, %v944
      %s978 = smul.u32 32, %s14
      %p979 = scmp.lt.s32.totalorder %s978, 63
      %s980 = scalar_select %p979, %s978, 63
      %s981 = smul.addr %s980, 8
      %s982 = scalar_lea.vmem %s3, %s981
      // Predicated region
      $region33: #{_lambda_.29} parent=31 // pred_check
        %p983 = pneg %p100
      $region34: #{_lambda_.29} parent=31 // pred_check_branch
        %985 = sbr.rel (%p983) target = $region36
      $region35: #{_lambda_.29} parent=31 // pred_region
        %s986 = smul.u32 32, %s14
      $region36: #{_lambda_.29} parent=31 // pred_fallthru
        _
    $region32: #{_lambda_.29} parent=5 // pred_fallthru
      _
    %p987 = scmp.le.s32.totalorder 2, %s9
    // Predicated region
    $region37: #{_lambda_.29} parent=5 // pred_check
      %p988 = pneg %p987
    $region38: #{_lambda_.29} parent=5 // pred_check_branch
      %990 = sbr.rel (%p988) target = $region40
    $region39: #{_lambda_.29} parent=5 // pred_region
      %s991 = ssub.s32 %s9, 2
      // Predicated region
      $region41: #{_lambda_.29} parent=39 // pred_check
        %p992 = pneg %p106
      $region42: #{_lambda_.29} parent=39 // pred_check_branch
        %994 = sbr.rel (%p992) target = $region44
      $region43: #{_lambda_.29} parent=39 // pred_region
        %s995 = smul.u32 32, %s15
        %p996 = scmp.lt.s32.totalorder %s995, 63
        %s997 = scalar_select %p996, %s995, 63
        %s998 = smul.addr %s997, 8
        %s999 = scalar_lea.vmem %s3, %s998
      $region44: #{_lambda_.29} parent=39 // pred_fallthru
        _
    $region40: #{_lambda_.29} parent=5 // pred_fallthru
      _
  $region6: #{_lambda_.29} parent=0 // loop_footer
    %s13 = sadd.s32 1, %s9
  $region7: #{_lambda_.29} parent=0 // loop_footer_branch
    %8 = sbr.rel target = $region3
  $region8: #{_lambda_.29} parent=0 // loop_exit
    _

// kernel: _lambda_.33
$region0: #{_lambda_.33}
  #allocation0 [shape = 'u32[]', space=smem, size = 0x4, offset = 0x4, fixed_abs, tag = 'smem constant byte address 0x4 - core index']
  #allocation1 [shape = 'u32[72,128]{1,0:T(1,128)}', space=vmem, size = 0x9000, scoped, tag = 'internal scratch']
  %s0 = inlined_call_operand.vmem [shape: bf16[512,32], index: 0, kind: input, shape index: {}]
  %s1 = inlined_call_operand.vmem [shape: bf16[32,32], index: 1, kind: input, shape index: {}]
  %s2 = inlined_call_operand.vmem [shape: f32[1,32], index: 2, kind: input, shape index: {}]
  %s3 = inlined_call_operand.vmem [shape: f32[512,32], index: 3, kind: output, shape index: {}]
  %s4 = sld [smem:[#allocation0]]
  $region45: #{_lambda_.33} parent=0
    _
  %s6 = ssub.s32 1, %s4
  %s7 = scalar_select 0, %s6, %s4
  loop: start=0, step=1, limit=4
  $region2: #{_lambda_.33} parent=0 // loop_pre_header
    _
  $region3: #{_lambda_.33} parent=0 // loop_header
    %s9 = sphi 0, %s13
    %p10 = scmp.ge.s32.totalorder %s9, 4
    %s19 = sphi 0, %s21
    %s22 = sphi 0, %s19
    %s23 = sphi 0, %s22
    %s39 = sphi 0, %s23
    %s43 = sphi 0, %s43
    %s45 = sphi 0, %s43
    %s46 = sphi 0, %s45
    %s60 = sphi 0, %s46
    %s64 = sphi 0, %s64
    %s66 = sphi 0, %s64
    %s67 = sphi 0, %s66
    %s81 = sphi 0, %s67
    %s87 = sphi 0, %s89
    %s90 = sphi 0, %s87
    %s91 = sphi 0, %s90
    %s107 = sphi 0, %s91
  $region4: #{_lambda_.33} parent=0 // loop_header_branch
    %12 = sbr.rel (%p10) target = $region8
  $region5: #{_lambda_.33} parent=0 // loop_body
    %s14 = ssub.s32 %s9, 1
    %s15 = ssub.s32 %s9, 2
    %s16 = sadd.s32 %s9, 1
    %s17 = ssub.s32 %s9, %s16
    %p18 = scmp.eq.s32.totalorder %s17, 0
    %s20 = sadd.s32 %s19, 1
    %s21 = scalar_select %p18, %s19, %s20
    %p24 = pneg %p18
    %p25 = scmp.eq.s32.totalorder %s9, 1
    %p26 = por %p24, %p25
    %p27 = scmp.ne.s32.totalorder %s19, %s22
    %p28 = scmp.eq.s32.totalorder %s9, 0
    %p29 = por %p27, %p28
    %p30 = scmp.ne.s32.totalorder %s19, %s22
    %p31 = scmp.eq.s32.totalorder %s14, 1
    %p32 = por %p30, %p31
    %p33 = scmp.ne.s32.totalorder %s22, %s23
    %p34 = scmp.eq.s32.totalorder %s14, 0
    %p35 = por %p33, %p34
    %p36 = scmp.ne.s32.totalorder %s22, %s23
    %p37 = scmp.eq.s32.totalorder %s15, 1
    %p38 = por %p36, %p37
    %p40 = scmp.ne.s32.totalorder %s23, %s39
    %p41 = scmp.eq.s32.totalorder %s15, 0
    %p42 = por %p40, %p41
    %s44 = sadd.s32 %s43, 1
    %p47 = scmp.eq.s32.totalorder %s9, 1
    %p48 = scmp.ne.s32.totalorder %s43, %s45
    %p49 = scmp.eq.s32.totalorder %s9, 0
    %p50 = por %p48, %p49
    %p51 = scmp.ne.s32.totalorder %s43, %s45
    %p52 = scmp.eq.s32.totalorder %s14, 1
    %p53 = por %p51, %p52
    %p54 = scmp.ne.s32.totalorder %s45, %s46
    %p55 = scmp.eq.s32.totalorder %s14, 0
    %p56 = por %p54, %p55
    %p57 = scmp.ne.s32.totalorder %s45, %s46
    %p58 = scmp.eq.s32.totalorder %s15, 1
    %p59 = por %p57, %p58
    %p61 = scmp.ne.s32.totalorder %s46, %s60
    %p62 = scmp.eq.s32.totalorder %s15, 0
    %p63 = por %p61, %p62
    %s65 = sadd.s32 %s64, 1
    %p68 = scmp.eq.s32.totalorder %s9, 1
    %p69 = scmp.ne.s32.totalorder %s64, %s66
    %p70 = scmp.eq.s32.totalorder %s9, 0
    %p71 = por %p69, %p70
    %p72 = scmp.ne.s32.totalorder %s64, %s66
    %p73 = scmp.eq.s32.totalorder %s14, 1
    %p74 = por %p72, %p73
    %p75 = scmp.ne.s32.totalorder %s66, %s67
    %p76 = scmp.eq.s32.totalorder %s14, 0
    %p77 = por %p75, %p76
    %p78 = scmp.ne.s32.totalorder %s66, %s67
    %p79 = scmp.eq.s32.totalorder %s15, 1
    %p80 = por %p78, %p79
    %p82 = scmp.ne.s32.totalorder %s67, %s81
    %p83 = scmp.eq.s32.totalorder %s15, 0
    %p84 = por %p82, %p83
    %s85 = ssub.s32 %s9, %s16
    %p86 = scmp.eq.s32.totalorder %s85, 0
    %s88 = sadd.s32 %s87, 1
    %s89 = scalar_select %p86, %s87, %s88
    %p92 = pneg %p86
    %p93 = scmp.eq.s32.totalorder %s9, 1
    %p94 = por %p92, %p93
    %p95 = scmp.ne.s32.totalorder %s87, %s90
    %p96 = scmp.eq.s32.totalorder %s9, 0
    %p97 = por %p95, %p96
    %p98 = scmp.ne.s32.totalorder %s87, %s90
    %p99 = scmp.eq.s32.totalorder %s14, 1
    %p100 = por %p98, %p99
    %p101 = scmp.ne.s32.totalorder %s90, %s91
    %p102 = scmp.eq.s32.totalorder %s14, 0
    %p103 = por %p101, %p102
    %p104 = scmp.ne.s32.totalorder %s90, %s91
    %p105 = scmp.eq.s32.totalorder %s15, 1
    %p106 = por %p104, %p105
    %p108 = scmp.ne.s32.totalorder %s91, %s107
    %p109 = scmp.eq.s32.totalorder %s15, 0
    %p110 = por %p108, %p109
    %p111 = scmp.le.s32.totalorder 1, %s9
    %p112 = scmp.lt.s32.totalorder %s9, 3
    %p113 = pnand %p111, %p112
    %p114 = pneg %p113
    // Predicated region
    $region9: #{_lambda_.33} parent=5 // pred_check
      _
    $region10: #{_lambda_.33} parent=5 // pred_check_branch
      %116 = sbr.rel (%p113) target = $region12
    $region11: #{_lambda_.33} parent=5 // pred_region
      %s117 = ssub.s32 %s9, 1
      // Predicated region
      $region13: #{_lambda_.33} parent=11 // pred_check
        %p118 = pneg %p56
      $region14: #{_lambda_.33} parent=11 // pred_check_branch
        %120 = sbr.rel (%p118) target = $region16
      $region15: #{_lambda_.33} parent=11 // pred_region
        _
      $region16: #{_lambda_.33} parent=11 // pred_fallthru
        _
      // Predicated region
      $region17: #{_lambda_.33} parent=11 // pred_check
        %p121 = pneg %p77
      $region18: #{_lambda_.33} parent=11 // pred_check_branch
        %123 = sbr.rel (%p121) target = $region20
      $region19: #{_lambda_.33} parent=11 // pred_region
        _
      $region20: #{_lambda_.33} parent=11 // pred_fallthru
        _
    $region12: #{_lambda_.33} parent=5 // pred_fallthru
      _
    %p124 = scmp.lt.s32.totalorder %s9, 2
    // Predicated region
    $region21: #{_lambda_.33} parent=5 // pred_check
      %p125 = pneg %p124
    $region22: #{_lambda_.33} parent=5 // pred_check_branch
      %127 = sbr.rel (%p125) target = $region24
    $region23: #{_lambda_.33} parent=5 // pred_region
      // Predicated region
      $region25: #{_lambda_.33} parent=23 // pred_check
        %p128 = pneg %p29
      $region26: #{_lambda_.33} parent=23 // pred_check_branch
        %130 = sbr.rel (%p128) target = $region28
      $region27: #{_lambda_.33} parent=23 // pred_region
        %s131 = smul.u32 32, %s9
        %p132 = scmp.lt.s32.totalorder %s131, 63
        %s133 = scalar_select %p132, %s131, 63
        %s134 = smul.addr %s133, 4
        %s135 = scalar_lea.vmem %s0, %s134
        %s136 = smul.u32 32, %s9
      $region28: #{_lambda_.33} parent=23 // pred_fallthru
        _
    $region24: #{_lambda_.33} parent=5 // pred_fallthru
      _
    %p137 = scmp.le.s32.totalorder 1, %s9
    %p138 = scmp.lt.s32.totalorder %s9, 3
    %p139 = pnand %p137, %p138
    %p140 = pneg %p139
    // Predicated region
    $region29: #{_lambda_.33} parent=5 // pred_check
      _
    $region30: #{_lambda_.33} parent=5 // pred_check_branch
      %142 = sbr.rel (%p139) target = $region32
    $region31: #{_lambda_.33} parent=5 // pred_region
      %s143 = ssub.s32 %s9, 1
      %s144 = smul.u32 32, %s14
      %p145 = scmp.lt.s32.totalorder %s144, 63
      %s146 = scalar_select %p145, %s144, 63
      %s147 = smul.addr %s146, 4
      %s148 = scalar_lea.vmem %s0, %s147
      %p149 = pneg %p35
      %p150 = pneg %p32
      %p151 = pneg %p56
      %p152 = pneg %p53
      %p153 = pneg %p77
      %p154 = pneg %p74
      %p155 = pneg %p103
      %p156 = pneg %p100
      %s157 = smul.u32 32, %s14
      %p158 = scmp.lt.s32.totalorder %s157, 63
      %s159 = scalar_select %p158, %s157, 63
      %s160 = smul.addr %s159, 8
      %s161 = scalar_lea.vmem %s3, %s160
      %s162 = smul.u32 32, %s14
      %p163 = scmp.lt.s32.totalorder %s162, 63
      %s164 = scalar_select %p163, %s162, 63
      %s165 = smul.addr %s164, 4
      %s166 = scalar_lea.vmem %s0, %s165
      %s167 = smul.u32 32, %s14
      %s168 = smul.u32 32, %s14
      %p169 = scmp.lt.s32.totalorder %s168, 63
      %s170 = scalar_select %p169, %s168, 63
      %s171 = smul.addr %s170, 8
      %s172 = scalar_lea.vmem %s3, %s171
      %s173 = smul.u32 32, %s14
      %v175 = vld [vmem:[%s166] sm:$0xf]
      %v176 = vld [vmem:[%s166 + $0x4] sm:$0xf]
      %v177 = vld [vmem:[%s166 + $0x8] sm:$0xf]
      %v178 = vld [vmem:[%s166 + $0xc] sm:$0xf]
      %v179 = vld [vmem:[%s166 + $0x10] sm:$0xf]
      %v180 = vld [vmem:[%s166 + $0x14] sm:$0xf]
      %v181 = vld [vmem:[%s166 + $0x18] sm:$0xf]
      %v182 = vld [vmem:[%s166 + $0x1c] sm:$0xf]
      %v183 = vld [vmem:[%s166 + $0x20] sm:$0xf]
      %v184 = vld [vmem:[%s166 + $0x24] sm:$0xf]
      %v185 = vld [vmem:[%s166 + $0x28] sm:$0xf]
      %v186 = vld [vmem:[%s166 + $0x2c] sm:$0xf]
      %v187 = vld [vmem:[%s166 + $0x30] sm:$0xf]
      %v188 = vld [vmem:[%s166 + $0x34] sm:$0xf]
      %v189 = vld [vmem:[%s166 + $0x38] sm:$0xf]
      %v190 = vld [vmem:[%s166 + $0x3c] sm:$0xf]
      %v191 = vld [vmem:[%s166 + $0x40] sm:$0xf]
      %v192 = vld [vmem:[%s166 + $0x44] sm:$0xf]
      %v193 = vld [vmem:[%s166 + $0x48] sm:$0xf]
      %v194 = vld [vmem:[%s166 + $0x4c] sm:$0xf]
      %v195 = vld [vmem:[%s166 + $0x50] sm:$0xf]
      %v196 = vld [vmem:[%s166 + $0x54] sm:$0xf]
      %v197 = vld [vmem:[%s166 + $0x58] sm:$0xf]
      %v198 = vld [vmem:[%s166 + $0x5c] sm:$0xf]
      %v199 = vld [vmem:[%s166 + $0x60] sm:$0xf]
      %v200 = vld [vmem:[%s166 + $0x64] sm:$0xf]
      %v201 = vld [vmem:[%s166 + $0x68] sm:$0xf]
      %v202 = vld [vmem:[%s166 + $0x6c] sm:$0xf]
      %v203 = vld [vmem:[%s166 + $0x70] sm:$0xf]
      %v204 = vld [vmem:[%s166 + $0x74] sm:$0xf]
      %v205 = vld [vmem:[%s166 + $0x78] sm:$0xf]
      %v206 = vld [vmem:[%s166 + $0x7c] sm:$0xf]
      %v207 = vld [vmem:[%s1] sm:$0xf]
      %v208 = vld [vmem:[%s1 + $0x4] sm:$0xf]
      %v209 = vld [vmem:[%s1 + $0x8] sm:$0xf]
      %v210 = vld [vmem:[%s1 + $0xc] sm:$0xf]
      %v211 = vld [vmem:[%s2] sm:$0x1]
      %v213 = vperm.slane %v211, 0
      %v247 = vunpack.c.l.b16 %v175
      %v248 = vunpack.c.l.b16 %v176
      %v249 = vunpack.c.l.b16 %v177
      %v250 = vunpack.c.l.b16 %v178
      %v251 = vunpack.c.l.b16 %v179
      %v252 = vunpack.c.l.b16 %v180
      %v253 = vunpack.c.l.b16 %v181
      %v254 = vunpack.c.l.b16 %v182
      %v255 = vunpack.c.l.b16 %v183
      %v256 = vunpack.c.l.b16 %v184
      %v257 = vunpack.c.l.b16 %v185
      %v258 = vunpack.c.l.b16 %v186
      %v259 = vunpack.c.l.b16 %v187
      %v260 = vunpack.c.l.b16 %v188
      %v261 = vunpack.c.l.b16 %v189
      %v262 = vunpack.c.l.b16 %v190
      %v263 = vunpack.c.l.b16 %v191
      %v264 = vunpack.c.l.b16 %v192
      %v265 = vunpack.c.l.b16 %v193
      %v266 = vunpack.c.l.b16 %v194
      %v267 = vunpack.c.l.b16 %v195
      %v268 = vunpack.c.l.b16 %v196
      %v269 = vunpack.c.l.b16 %v197
      %v270 = vunpack.c.l.b16 %v198
      %v271 = vunpack.c.l.b16 %v199
      %v272 = vunpack.c.l.b16 %v200
      %v273 = vunpack.c.l.b16 %v201
      %v274 = vunpack.c.l.b16 %v202
      %v275 = vunpack.c.l.b16 %v203
      %v276 = vunpack.c.l.b16 %v204
      %v277 = vunpack.c.l.b16 %v205
      %v278 = vunpack.c.l.b16 %v206
      %v279 = vpack.c.b16 %v248, %v247
      %v280 = vpack.c.b16 %v250, %v249
      %v281 = vpack.c.b16 %v252, %v251
      %v282 = vpack.c.b16 %v254, %v253
      %v283 = vpack.c.b16 %v256, %v255
      %v284 = vpack.c.b16 %v258, %v257
      %v285 = vpack.c.b16 %v260, %v259
      %v286 = vpack.c.b16 %v262, %v261
      %v287 = vpack.c.b16 %v264, %v263
      %v288 = vpack.c.b16 %v266, %v265
      %v289 = vpack.c.b16 %v268, %v267
      %v290 = vpack.c.b16 %v270, %v269
      %v291 = vpack.c.b16 %v272, %v271
      %v292 = vpack.c.b16 %v274, %v273
      %v293 = vpack.c.b16 %v276, %v275
      %v294 = vpack.c.b16 %v278, %v277
      %v299 = vunpack.c.l.b16 %v207
      %v300 = vunpack.c.l.b16 %v208
      %v301 = vunpack.c.l.b16 %v209
      %v302 = vunpack.c.l.b16 %v210
      %v303 = vpack.c.b16 %v300, %v299
      %v304 = vpack.c.b16 %v302, %v301
      %vm307 = vcmask 261120
      %v309 = vsel %vm307, %v279, 0
      %v312 = vsel %vm307, %v280, 0
      %v315 = vsel %vm307, %v281, 0
      %v318 = vsel %vm307, %v282, 0
      %v321 = vsel %vm307, %v283, 0
      %v324 = vsel %vm307, %v284, 0
      %v327 = vsel %vm307, %v285, 0
      %v330 = vsel %vm307, %v286, 0
      %v333 = vsel %vm307, %v287, 0
      %v336 = vsel %vm307, %v288, 0
      %v339 = vsel %vm307, %v289, 0
      %v342 = vsel %vm307, %v290, 0
      %v345 = vsel %vm307, %v291, 0
      %v348 = vsel %vm307, %v292, 0
      %v351 = vsel %vm307, %v293, 0
      %v354 = vsel %vm307, %v294, 0
      %356 = vmatpush.bf16.msra.mxu0 0
      %357 = vmatpush.bf16.msra.mxu0 0
      %358 = vmatpush.bf16.msra.mxu0 0
      %359 = vmatpush.bf16.msra.mxu0 0
      %360 = vmatpush.bf16.msra.mxu0 0
      %361 = vmatpush.bf16.msra.mxu0 0
      %362 = vmatpush.bf16.msra.mxu0 %v304
      %363 = vmatpush.bf16.msra.mxu0 %v303
      %364 = vmatmul.bf16.gmra.mxu0 %v309
      %v365 = vpop.f32.mrf.mxu0
      %v366 = vadd.f32 %v213, %v365
      %v367 = vpop.f32.mrf.mxu0
      %v368 = vadd.f32 %v213, %v367
      %369 = vmatmul.bf16.gmra.mxu0 %v312
      %v370 = vpop.f32.mrf.mxu0
      %v371 = vadd.f32 %v213, %v370
      %v372 = vpop.f32.mrf.mxu0
      %v373 = vadd.f32 %v213, %v372
      %374 = vmatmul.bf16.gmra.mxu0 %v315
      %v375 = vpop.f32.mrf.mxu0
      %v376 = vadd.f32 %v213, %v375
      %v377 = vpop.f32.mrf.mxu0
      %v378 = vadd.f32 %v213, %v377
      %379 = vmatmul.bf16.gmra.mxu0 %v318
      %v380 = vpop.f32.mrf.mxu0
      %v381 = vadd.f32 %v213, %v380
      %v382 = vpop.f32.mrf.mxu0
      %v383 = vadd.f32 %v213, %v382
      %384 = vmatmul.bf16.gmra.mxu0 %v321
      %v385 = vpop.f32.mrf.mxu0
      %v386 = vadd.f32 %v213, %v385
      %v387 = vpop.f32.mrf.mxu0
      %v388 = vadd.f32 %v213, %v387
      %389 = vmatmul.bf16.gmra.mxu0 %v324
      %v390 = vpop.f32.mrf.mxu0
      %v391 = vadd.f32 %v213, %v390
      %v392 = vpop.f32.mrf.mxu0
      %v393 = vadd.f32 %v213, %v392
      %394 = vmatmul.bf16.gmra.mxu0 %v327
      %v395 = vpop.f32.mrf.mxu0
      %v396 = vadd.f32 %v213, %v395
      %v397 = vpop.f32.mrf.mxu0
      %v398 = vadd.f32 %v213, %v397
      %399 = vmatmul.bf16.gmra.mxu0 %v330
      %v400 = vpop.f32.mrf.mxu0
      %v401 = vadd.f32 %v213, %v400
      %v402 = vpop.f32.mrf.mxu0
      %v403 = vadd.f32 %v213, %v402
      %404 = vmatmul.bf16.gmra.mxu0 %v333
      %v405 = vpop.f32.mrf.mxu0
      %v406 = vadd.f32 %v213, %v405
      %v407 = vpop.f32.mrf.mxu0
      %v408 = vadd.f32 %v213, %v407
      %409 = vmatmul.bf16.gmra.mxu0 %v336
      %v410 = vpop.f32.mrf.mxu0
      %v411 = vadd.f32 %v213, %v410
      %v412 = vpop.f32.mrf.mxu0
      %v413 = vadd.f32 %v213, %v412
      %414 = vmatmul.bf16.gmra.mxu0 %v339
      %v415 = vpop.f32.mrf.mxu0
      %v416 = vadd.f32 %v213, %v415
      %v417 = vpop.f32.mrf.mxu0
      %v418 = vadd.f32 %v213, %v417
      %419 = vmatmul.bf16.gmra.mxu0 %v342
      %v420 = vpop.f32.mrf.mxu0
      %v421 = vadd.f32 %v213, %v420
      %v422 = vpop.f32.mrf.mxu0
      %v423 = vadd.f32 %v213, %v422
      %424 = vmatmul.bf16.gmra.mxu0 %v345
      %v425 = vpop.f32.mrf.mxu0
      %v426 = vadd.f32 %v213, %v425
      %v427 = vpop.f32.mrf.mxu0
      %v428 = vadd.f32 %v213, %v427
      %429 = vmatmul.bf16.gmra.mxu0 %v348
      %v430 = vpop.f32.mrf.mxu0
      %v431 = vadd.f32 %v213, %v430
      %v432 = vpop.f32.mrf.mxu0
      %v433 = vadd.f32 %v213, %v432
      %434 = vmatmul.bf16.gmra.mxu0 %v351
      %v435 = vpop.f32.mrf.mxu0
      %v436 = vadd.f32 %v213, %v435
      %v437 = vpop.f32.mrf.mxu0
      %v438 = vadd.f32 %v213, %v437
      %439 = vmatmul.bf16.gmra.mxu0 %v354
      %v440 = vpop.f32.mrf.mxu0
      %v441 = vadd.f32 %v213, %v440
      %v442 = vpop.f32.mrf.mxu0
      %v443 = vadd.f32 %v213, %v442
      %444 = vdwg.mxu0
      %445 = vst.msk [vmem:[%s172] sm:$0xff] %vm307, %v366
      %446 = vst.msk [vmem:[%s172 + $0x8] sm:$0xff] %vm307, %v368
      %447 = vst.msk [vmem:[%s172 + $0x10] sm:$0xff] %vm307, %v371
      %448 = vst.msk [vmem:[%s172 + $0x18] sm:$0xff] %vm307, %v373
      %449 = vst.msk [vmem:[%s172 + $0x20] sm:$0xff] %vm307, %v376
      %450 = vst.msk [vmem:[%s172 + $0x28] sm:$0xff] %vm307, %v378
      %451 = vst.msk [vmem:[%s172 + $0x30] sm:$0xff] %vm307, %v381
      %452 = vst.msk [vmem:[%s172 + $0x38] sm:$0xff] %vm307, %v383
      %453 = vst.msk [vmem:[%s172 + $0x40] sm:$0xff] %vm307, %v386
      %454 = vst.msk [vmem:[%s172 + $0x48] sm:$0xff] %vm307, %v388
      %455 = vst.msk [vmem:[%s172 + $0x50] sm:$0xff] %vm307, %v391
      %456 = vst.msk [vmem:[%s172 + $0x58] sm:$0xff] %vm307, %v393
      %457 = vst.msk [vmem:[%s172 + $0x60] sm:$0xff] %vm307, %v396
      %458 = vst.msk [vmem:[%s172 + $0x68] sm:$0xff] %vm307, %v398
      %459 = vst.msk [vmem:[%s172 + $0x70] sm:$0xff] %vm307, %v401
      %460 = vst.msk [vmem:[%s172 + $0x78] sm:$0xff] %vm307, %v403
      %461 = vst.msk [vmem:[%s172 + $0x80] sm:$0xff] %vm307, %v406
      %462 = vst.msk [vmem:[%s172 + $0x88] sm:$0xff] %vm307, %v408
      %463 = vst.msk [vmem:[%s172 + $0x90] sm:$0xff] %vm307, %v411
      %464 = vst.msk [vmem:[%s172 + $0x98] sm:$0xff] %vm307, %v413
      %465 = vst.msk [vmem:[%s172 + $0xa0] sm:$0xff] %vm307, %v416
      %466 = vst.msk [vmem:[%s172 + $0xa8] sm:$0xff] %vm307, %v418
      %467 = vst.msk [vmem:[%s172 + $0xb0] sm:$0xff] %vm307, %v421
      %468 = vst.msk [vmem:[%s172 + $0xb8] sm:$0xff] %vm307, %v423
      %469 = vst.msk [vmem:[%s172 + $0xc0] sm:$0xff] %vm307, %v426
      %470 = vst.msk [vmem:[%s172 + $0xc8] sm:$0xff] %vm307, %v428
      %471 = vst.msk [vmem:[%s172 + $0xd0] sm:$0xff] %vm307, %v431
      %472 = vst.msk [vmem:[%s172 + $0xd8] sm:$0xff] %vm307, %v433
      %473 = vst.msk [vmem:[%s172 + $0xe0] sm:$0xff] %vm307, %v436
      %474 = vst.msk [vmem:[%s172 + $0xe8] sm:$0xff] %vm307, %v438
      %475 = vst.msk [vmem:[%s172 + $0xf0] sm:$0xff] %vm307, %v441
      %476 = vst.msk [vmem:[%s172 + $0xf8] sm:$0xff] %vm307, %v443
      %s477 = smul.u32 32, %s14
      %p478 = scmp.lt.s32.totalorder %s477, 63
      %s479 = scalar_select %p478, %s477, 63
      %s480 = smul.addr %s479, 8
      %s481 = scalar_lea.vmem %s3, %s480
      // Predicated region
      $region33: #{_lambda_.33} parent=31 // pred_check
        %p482 = pneg %p100
      $region34: #{_lambda_.33} parent=31 // pred_check_branch
        %484 = sbr.rel (%p482) target = $region36
      $region35: #{_lambda_.33} parent=31 // pred_region
        %s485 = smul.u32 32, %s14
      $region36: #{_lambda_.33} parent=31 // pred_fallthru
        _
    $region32: #{_lambda_.33} parent=5 // pred_fallthru
      _
    %p486 = scmp.le.s32.totalorder 2, %s9
    // Predicated region
    $region37: #{_lambda_.33} parent=5 // pred_check
      %p487 = pneg %p486
    $region38: #{_lambda_.33} parent=5 // pred_check_branch
      %489 = sbr.rel (%p487) target = $region40
    $region39: #{_lambda_.33} parent=5 // pred_region
      %s490 = ssub.s32 %s9, 2
      // Predicated region
      $region41: #{_lambda_.33} parent=39 // pred_check
        %p491 = pneg %p106
      $region42: #{_lambda_.33} parent=39 // pred_check_branch
        %493 = sbr.rel (%p491) target = $region44
      $region43: #{_lambda_.33} parent=39 // pred_region
        %s494 = smul.u32 32, %s15
        %p495 = scmp.lt.s32.totalorder %s494, 63
        %s496 = scalar_select %p495, %s494, 63
        %s497 = smul.addr %s496, 8
        %s498 = scalar_lea.vmem %s3, %s497
      $region44: #{_lambda_.33} parent=39 // pred_fallthru
        _
    $region40: #{_lambda_.33} parent=5 // pred_fallthru
      _
  $region6: #{_lambda_.33} parent=0 // loop_footer
    %s13 = sadd.s32 1, %s9
  $region7: #{_lambda_.33} parent=0 // loop_footer_branch
    %8 = sbr.rel target = $region3
  $region8: #{_lambda_.33} parent=0 // loop_exit
    _

// kernel: _lambda_.34
$region0: #{_lambda_.34}
  #allocation0 [shape = 'u32[]', space=smem, size = 0x4, offset = 0x4, fixed_abs, tag = 'smem constant byte address 0x4 - core index']
  #allocation1 [shape = 'u32[72,128]{1,0:T(1,128)}', space=vmem, size = 0x9000, scoped, tag = 'internal scratch']
  %s0 = inlined_call_operand.vmem [shape: bf16[512,64], index: 0, kind: input, shape index: {}]
  %s1 = inlined_call_operand.vmem [shape: bf16[64,32], index: 1, kind: input, shape index: {}]
  %s2 = inlined_call_operand.vmem [shape: f32[1,32], index: 2, kind: input, shape index: {}]
  %s3 = inlined_call_operand.vmem [shape: f32[512,32], index: 3, kind: output, shape index: {}]
  %s4 = sld [smem:[#allocation0]]
  $region45: #{_lambda_.34} parent=0
    _
  %s6 = ssub.s32 1, %s4
  %s7 = scalar_select 0, %s6, %s4
  loop: start=0, step=1, limit=4
  $region2: #{_lambda_.34} parent=0 // loop_pre_header
    _
  $region3: #{_lambda_.34} parent=0 // loop_header
    %s9 = sphi 0, %s13
    %p10 = scmp.ge.s32.totalorder %s9, 4
    %s19 = sphi 0, %s21
    %s22 = sphi 0, %s19
    %s23 = sphi 0, %s22
    %s39 = sphi 0, %s23
    %s43 = sphi 0, %s43
    %s45 = sphi 0, %s43
    %s46 = sphi 0, %s45
    %s60 = sphi 0, %s46
    %s64 = sphi 0, %s64
    %s66 = sphi 0, %s64
    %s67 = sphi 0, %s66
    %s81 = sphi 0, %s67
    %s87 = sphi 0, %s89
    %s90 = sphi 0, %s87
    %s91 = sphi 0, %s90
    %s107 = sphi 0, %s91
  $region4: #{_lambda_.34} parent=0 // loop_header_branch
    %12 = sbr.rel (%p10) target = $region8
  $region5: #{_lambda_.34} parent=0 // loop_body
    %s14 = ssub.s32 %s9, 1
    %s15 = ssub.s32 %s9, 2
    %s16 = sadd.s32 %s9, 1
    %s17 = ssub.s32 %s9, %s16
    %p18 = scmp.eq.s32.totalorder %s17, 0
    %s20 = sadd.s32 %s19, 1
    %s21 = scalar_select %p18, %s19, %s20
    %p24 = pneg %p18
    %p25 = scmp.eq.s32.totalorder %s9, 1
    %p26 = por %p24, %p25
    %p27 = scmp.ne.s32.totalorder %s19, %s22
    %p28 = scmp.eq.s32.totalorder %s9, 0
    %p29 = por %p27, %p28
    %p30 = scmp.ne.s32.totalorder %s19, %s22
    %p31 = scmp.eq.s32.totalorder %s14, 1
    %p32 = por %p30, %p31
    %p33 = scmp.ne.s32.totalorder %s22, %s23
    %p34 = scmp.eq.s32.totalorder %s14, 0
    %p35 = por %p33, %p34
    %p36 = scmp.ne.s32.totalorder %s22, %s23
    %p37 = scmp.eq.s32.totalorder %s15, 1
    %p38 = por %p36, %p37
    %p40 = scmp.ne.s32.totalorder %s23, %s39
    %p41 = scmp.eq.s32.totalorder %s15, 0
    %p42 = por %p40, %p41
    %s44 = sadd.s32 %s43, 1
    %p47 = scmp.eq.s32.totalorder %s9, 1
    %p48 = scmp.ne.s32.totalorder %s43, %s45
    %p49 = scmp.eq.s32.totalorder %s9, 0
    %p50 = por %p48, %p49
    %p51 = scmp.ne.s32.totalorder %s43, %s45
    %p52 = scmp.eq.s32.totalorder %s14, 1
    %p53 = por %p51, %p52
    %p54 = scmp.ne.s32.totalorder %s45, %s46
    %p55 = scmp.eq.s32.totalorder %s14, 0
    %p56 = por %p54, %p55
    %p57 = scmp.ne.s32.totalorder %s45, %s46
    %p58 = scmp.eq.s32.totalorder %s15, 1
    %p59 = por %p57, %p58
    %p61 = scmp.ne.s32.totalorder %s46, %s60
    %p62 = scmp.eq.s32.totalorder %s15, 0
    %p63 = por %p61, %p62
    %s65 = sadd.s32 %s64, 1
    %p68 = scmp.eq.s32.totalorder %s9, 1
    %p69 = scmp.ne.s32.totalorder %s64, %s66
    %p70 = scmp.eq.s32.totalorder %s9, 0
    %p71 = por %p69, %p70
    %p72 = scmp.ne.s32.totalorder %s64, %s66
    %p73 = scmp.eq.s32.totalorder %s14, 1
    %p74 = por %p72, %p73
    %p75 = scmp.ne.s32.totalorder %s66, %s67
    %p76 = scmp.eq.s32.totalorder %s14, 0
    %p77 = por %p75, %p76
    %p78 = scmp.ne.s32.totalorder %s66, %s67
    %p79 = scmp.eq.s32.totalorder %s15, 1
    %p80 = por %p78, %p79
    %p82 = scmp.ne.s32.totalorder %s67, %s81
    %p83 = scmp.eq.s32.totalorder %s15, 0
    %p84 = por %p82, %p83
    %s85 = ssub.s32 %s9, %s16
    %p86 = scmp.eq.s32.totalorder %s85, 0
    %s88 = sadd.s32 %s87, 1
    %s89 = scalar_select %p86, %s87, %s88
    %p92 = pneg %p86
    %p93 = scmp.eq.s32.totalorder %s9, 1
    %p94 = por %p92, %p93
    %p95 = scmp.ne.s32.totalorder %s87, %s90
    %p96 = scmp.eq.s32.totalorder %s9, 0
    %p97 = por %p95, %p96
    %p98 = scmp.ne.s32.totalorder %s87, %s90
    %p99 = scmp.eq.s32.totalorder %s14, 1
    %p100 = por %p98, %p99
    %p101 = scmp.ne.s32.totalorder %s90, %s91
    %p102 = scmp.eq.s32.totalorder %s14, 0
    %p103 = por %p101, %p102
    %p104 = scmp.ne.s32.totalorder %s90, %s91
    %p105 = scmp.eq.s32.totalorder %s15, 1
    %p106 = por %p104, %p105
    %p108 = scmp.ne.s32.totalorder %s91, %s107
    %p109 = scmp.eq.s32.totalorder %s15, 0
    %p110 = por %p108, %p109
    %p111 = scmp.le.s32.totalorder 1, %s9
    %p112 = scmp.lt.s32.totalorder %s9, 3
    %p113 = pnand %p111, %p112
    %p114 = pneg %p113
    // Predicated region
    $region9: #{_lambda_.34} parent=5 // pred_check
      _
    $region10: #{_lambda_.34} parent=5 // pred_check_branch
      %116 = sbr.rel (%p113) target = $region12
    $region11: #{_lambda_.34} parent=5 // pred_region
      %s117 = ssub.s32 %s9, 1
      // Predicated region
      $region13: #{_lambda_.34} parent=11 // pred_check
        %p118 = pneg %p56
      $region14: #{_lambda_.34} parent=11 // pred_check_branch
        %120 = sbr.rel (%p118) target = $region16
      $region15: #{_lambda_.34} parent=11 // pred_region
        _
      $region16: #{_lambda_.34} parent=11 // pred_fallthru
        _
      // Predicated region
      $region17: #{_lambda_.34} parent=11 // pred_check
        %p121 = pneg %p77
      $region18: #{_lambda_.34} parent=11 // pred_check_branch
        %123 = sbr.rel (%p121) target = $region20
      $region19: #{_lambda_.34} parent=11 // pred_region
        _
      $region20: #{_lambda_.34} parent=11 // pred_fallthru
        _
    $region12: #{_lambda_.34} parent=5 // pred_fallthru
      _
    %p124 = scmp.lt.s32.totalorder %s9, 2
    // Predicated region
    $region21: #{_lambda_.34} parent=5 // pred_check
      %p125 = pneg %p124
    $region22: #{_lambda_.34} parent=5 // pred_check_branch
      %127 = sbr.rel (%p125) target = $region24
    $region23: #{_lambda_.34} parent=5 // pred_region
      // Predicated region
      $region25: #{_lambda_.34} parent=23 // pred_check
        %p128 = pneg %p29
      $region26: #{_lambda_.34} parent=23 // pred_check_branch
        %130 = sbr.rel (%p128) target = $region28
      $region27: #{_lambda_.34} parent=23 // pred_region
        %s131 = smul.u32 32, %s9
        %p132 = scmp.lt.s32.totalorder %s131, 63
        %s133 = scalar_select %p132, %s131, 63
        %s134 = smul.addr %s133, 4
        %s135 = scalar_lea.vmem %s0, %s134
        %s136 = smul.u32 32, %s9
      $region28: #{_lambda_.34} parent=23 // pred_fallthru
        _
    $region24: #{_lambda_.34} parent=5 // pred_fallthru
      _
    %p137 = scmp.le.s32.totalorder 1, %s9
    %p138 = scmp.lt.s32.totalorder %s9, 3
    %p139 = pnand %p137, %p138
    %p140 = pneg %p139
    // Predicated region
    $region29: #{_lambda_.34} parent=5 // pred_check
      _
    $region30: #{_lambda_.34} parent=5 // pred_check_branch
      %142 = sbr.rel (%p139) target = $region32
    $region31: #{_lambda_.34} parent=5 // pred_region
      %s143 = ssub.s32 %s9, 1
      %s144 = smul.u32 32, %s14
      %p145 = scmp.lt.s32.totalorder %s144, 63
      %s146 = scalar_select %p145, %s144, 63
      %s147 = smul.addr %s146, 4
      %s148 = scalar_lea.vmem %s0, %s147
      %p149 = pneg %p35
      %p150 = pneg %p32
      %p151 = pneg %p56
      %p152 = pneg %p53
      %p153 = pneg %p77
      %p154 = pneg %p74
      %p155 = pneg %p103
      %p156 = pneg %p100
      %s157 = smul.u32 32, %s14
      %p158 = scmp.lt.s32.totalorder %s157, 63
      %s159 = scalar_select %p158, %s157, 63
      %s160 = smul.addr %s159, 8
      %s161 = scalar_lea.vmem %s3, %s160
      %s162 = smul.u32 32, %s14
      %p163 = scmp.lt.s32.totalorder %s162, 63
      %s164 = scalar_select %p163, %s162, 63
      %s165 = smul.addr %s164, 4
      %s166 = scalar_lea.vmem %s0, %s165
      %s167 = smul.u32 32, %s14
      %s168 = smul.u32 32, %s14
      %p169 = scmp.lt.s32.totalorder %s168, 63
      %s170 = scalar_select %p169, %s168, 63
      %s171 = smul.addr %s170, 8
      %s172 = scalar_lea.vmem %s3, %s171
      %s173 = smul.u32 32, %s14
      %v175 = vld [vmem:[%s166] sm:$0xf]
      %v176 = vld [vmem:[%s166 + $0x4] sm:$0xf]
      %v177 = vld [vmem:[%s166 + $0x8] sm:$0xf]
      %v178 = vld [vmem:[%s166 + $0xc] sm:$0xf]
      %v179 = vld [vmem:[%s166 + $0x10] sm:$0xf]
      %v180 = vld [vmem:[%s166 + $0x14] sm:$0xf]
      %v181 = vld [vmem:[%s166 + $0x18] sm:$0xf]
      %v182 = vld [vmem:[%s166 + $0x1c] sm:$0xf]
      %v183 = vld [vmem:[%s166 + $0x20] sm:$0xf]
      %v184 = vld [vmem:[%s166 + $0x24] sm:$0xf]
      %v185 = vld [vmem:[%s166 + $0x28] sm:$0xf]
      %v186 = vld [vmem:[%s166 + $0x2c] sm:$0xf]
      %v187 = vld [vmem:[%s166 + $0x30] sm:$0xf]
      %v188 = vld [vmem:[%s166 + $0x34] sm:$0xf]
      %v189 = vld [vmem:[%s166 + $0x38] sm:$0xf]
      %v190 = vld [vmem:[%s166 + $0x3c] sm:$0xf]
      %v191 = vld [vmem:[%s166 + $0x40] sm:$0xf]
      %v192 = vld [vmem:[%s166 + $0x44] sm:$0xf]
      %v193 = vld [vmem:[%s166 + $0x48] sm:$0xf]
      %v194 = vld [vmem:[%s166 + $0x4c] sm:$0xf]
      %v195 = vld [vmem:[%s166 + $0x50] sm:$0xf]
      %v196 = vld [vmem:[%s166 + $0x54] sm:$0xf]
      %v197 = vld [vmem:[%s166 + $0x58] sm:$0xf]
      %v198 = vld [vmem:[%s166 + $0x5c] sm:$0xf]
      %v199 = vld [vmem:[%s166 + $0x60] sm:$0xf]
      %v200 = vld [vmem:[%s166 + $0x64] sm:$0xf]
      %v201 = vld [vmem:[%s166 + $0x68] sm:$0xf]
      %v202 = vld [vmem:[%s166 + $0x6c] sm:$0xf]
      %v203 = vld [vmem:[%s166 + $0x70] sm:$0xf]
      %v204 = vld [vmem:[%s166 + $0x74] sm:$0xf]
      %v205 = vld [vmem:[%s166 + $0x78] sm:$0xf]
      %v206 = vld [vmem:[%s166 + $0x7c] sm:$0xf]
      %v207 = vld [vmem:[%s1] sm:$0xf]
      %v208 = vld [vmem:[%s1 + $0x4] sm:$0xf]
      %v209 = vld [vmem:[%s1 + $0x8] sm:$0xf]
      %v210 = vld [vmem:[%s1 + $0xc] sm:$0xf]
      %v211 = vld [vmem:[%s1 + $0x10] sm:$0xf]
      %v212 = vld [vmem:[%s1 + $0x14] sm:$0xf]
      %v213 = vld [vmem:[%s1 + $0x18] sm:$0xf]
      %v214 = vld [vmem:[%s1 + $0x1c] sm:$0xf]
      %v215 = vld [vmem:[%s2] sm:$0x1]
      %v217 = vperm.slane %v215, 0
      %v251 = vunpack.c.l.b16 %v175
      %v252 = vunpack.c.l.b16 %v176
      %v253 = vunpack.c.l.b16 %v177
      %v254 = vunpack.c.l.b16 %v178
      %v255 = vunpack.c.l.b16 %v179
      %v256 = vunpack.c.l.b16 %v180
      %v257 = vunpack.c.l.b16 %v181
      %v258 = vunpack.c.l.b16 %v182
      %v259 = vunpack.c.l.b16 %v183
      %v260 = vunpack.c.l.b16 %v184
      %v261 = vunpack.c.l.b16 %v185
      %v262 = vunpack.c.l.b16 %v186
      %v263 = vunpack.c.l.b16 %v187
      %v264 = vunpack.c.l.b16 %v188
      %v265 = vunpack.c.l.b16 %v189
      %v266 = vunpack.c.l.b16 %v190
      %v267 = vunpack.c.l.b16 %v191
      %v268 = vunpack.c.l.b16 %v192
      %v269 = vunpack.c.l.b16 %v193
      %v270 = vunpack.c.l.b16 %v194
      %v271 = vunpack.c.l.b16 %v195
      %v272 = vunpack.c.l.b16 %v196
      %v273 = vunpack.c.l.b16 %v197
      %v274 = vunpack.c.l.b16 %v198
      %v275 = vunpack.c.l.b16 %v199
      %v276 = vunpack.c.l.b16 %v200
      %v277 = vunpack.c.l.b16 %v201
      %v278 = vunpack.c.l.b16 %v202
      %v279 = vunpack.c.l.b16 %v203
      %v280 = vunpack.c.l.b16 %v204
      %v281 = vunpack.c.l.b16 %v205
      %v282 = vunpack.c.l.b16 %v206
      %v283 = vpack.c.b16 %v252, %v251
      %v284 = vpack.c.b16 %v254, %v253
      %v285 = vpack.c.b16 %v256, %v255
      %v286 = vpack.c.b16 %v258, %v257
      %v287 = vpack.c.b16 %v260, %v259
      %v288 = vpack.c.b16 %v262, %v261
      %v289 = vpack.c.b16 %v264, %v263
      %v290 = vpack.c.b16 %v266, %v265
      %v291 = vpack.c.b16 %v268, %v267
      %v292 = vpack.c.b16 %v270, %v269
      %v293 = vpack.c.b16 %v272, %v271
      %v294 = vpack.c.b16 %v274, %v273
      %v295 = vpack.c.b16 %v276, %v275
      %v296 = vpack.c.b16 %v278, %v277
      %v297 = vpack.c.b16 %v280, %v279
      %v298 = vpack.c.b16 %v282, %v281
      %v307 = vunpack.c.l.b16 %v207
      %v308 = vunpack.c.l.b16 %v208
      %v309 = vunpack.c.l.b16 %v209
      %v310 = vunpack.c.l.b16 %v210
      %v311 = vunpack.c.l.b16 %v211
      %v312 = vunpack.c.l.b16 %v212
      %v313 = vunpack.c.l.b16 %v213
      %v314 = vunpack.c.l.b16 %v214
      %v315 = vpack.c.b16 %v308, %v307
      %v316 = vpack.c.b16 %v310, %v309
      %v317 = vpack.c.b16 %v312, %v311
      %v318 = vpack.c.b16 %v314, %v313
      %vm323 = vcmask 523264
      %v325 = vsel %vm323, %v283, 0
      %v328 = vsel %vm323, %v284, 0
      %v331 = vsel %vm323, %v285, 0
      %v334 = vsel %vm323, %v286, 0
      %v337 = vsel %vm323, %v287, 0
      %v340 = vsel %vm323, %v288, 0
      %v343 = vsel %vm323, %v289, 0
      %v346 = vsel %vm323, %v290, 0
      %v349 = vsel %vm323, %v291, 0
      %v352 = vsel %vm323, %v292, 0
      %v355 = vsel %vm323, %v293, 0
      %v358 = vsel %vm323, %v294, 0
      %v361 = vsel %vm323, %v295, 0
      %v364 = vsel %vm323, %v296, 0
      %v367 = vsel %vm323, %v297, 0
      %v370 = vsel %vm323, %v298, 0
      %372 = vmatpush.bf16.msra.mxu0 0
      %373 = vmatpush.bf16.msra.mxu0 0
      %374 = vmatpush.bf16.msra.mxu0 0
      %375 = vmatpush.bf16.msra.mxu0 0
      %376 = vmatpush.bf16.msra.mxu0 %v318
      %377 = vmatpush.bf16.msra.mxu0 %v317
      %378 = vmatpush.bf16.msra.mxu0 %v316
      %379 = vmatpush.bf16.msra.mxu0 %v315
      %380 = vmatmul.bf16.gmra.mxu0 %v325
      %v381 = vpop.f32.mrf.mxu0
      %v382 = vadd.f32 %v217, %v381
      %v383 = vpop.f32.mrf.mxu0
      %v384 = vadd.f32 %v217, %v383
      %385 = vmatmul.bf16.gmra.mxu0 %v328
      %v386 = vpop.f32.mrf.mxu0
      %v387 = vadd.f32 %v217, %v386
      %v388 = vpop.f32.mrf.mxu0
      %v389 = vadd.f32 %v217, %v388
      %390 = vmatmul.bf16.gmra.mxu0 %v331
      %v391 = vpop.f32.mrf.mxu0
      %v392 = vadd.f32 %v217, %v391
      %v393 = vpop.f32.mrf.mxu0
      %v394 = vadd.f32 %v217, %v393
      %395 = vmatmul.bf16.gmra.mxu0 %v334
      %v396 = vpop.f32.mrf.mxu0
      %v397 = vadd.f32 %v217, %v396
      %v398 = vpop.f32.mrf.mxu0
      %v399 = vadd.f32 %v217, %v398
      %400 = vmatmul.bf16.gmra.mxu0 %v337
      %v401 = vpop.f32.mrf.mxu0
      %v402 = vadd.f32 %v217, %v401
      %v403 = vpop.f32.mrf.mxu0
      %v404 = vadd.f32 %v217, %v403
      %405 = vmatmul.bf16.gmra.mxu0 %v340
      %v406 = vpop.f32.mrf.mxu0
      %v407 = vadd.f32 %v217, %v406
      %v408 = vpop.f32.mrf.mxu0
      %v409 = vadd.f32 %v217, %v408
      %410 = vmatmul.bf16.gmra.mxu0 %v343
      %v411 = vpop.f32.mrf.mxu0
      %v412 = vadd.f32 %v217, %v411
      %v413 = vpop.f32.mrf.mxu0
      %v414 = vadd.f32 %v217, %v413
      %415 = vmatmul.bf16.gmra.mxu0 %v346
      %v416 = vpop.f32.mrf.mxu0
      %v417 = vadd.f32 %v217, %v416
      %v418 = vpop.f32.mrf.mxu0
      %v419 = vadd.f32 %v217, %v418
      %420 = vmatmul.bf16.gmra.mxu0 %v349
      %v421 = vpop.f32.mrf.mxu0
      %v422 = vadd.f32 %v217, %v421
      %v423 = vpop.f32.mrf.mxu0
      %v424 = vadd.f32 %v217, %v423
      %425 = vmatmul.bf16.gmra.mxu0 %v352
      %v426 = vpop.f32.mrf.mxu0
      %v427 = vadd.f32 %v217, %v426
      %v428 = vpop.f32.mrf.mxu0
      %v429 = vadd.f32 %v217, %v428
      %430 = vmatmul.bf16.gmra.mxu0 %v355
      %v431 = vpop.f32.mrf.mxu0
      %v432 = vadd.f32 %v217, %v431
      %v433 = vpop.f32.mrf.mxu0
      %v434 = vadd.f32 %v217, %v433
      %435 = vmatmul.bf16.gmra.mxu0 %v358
      %v436 = vpop.f32.mrf.mxu0
      %v437 = vadd.f32 %v217, %v436
      %v438 = vpop.f32.mrf.mxu0
      %v439 = vadd.f32 %v217, %v438
      %440 = vmatmul.bf16.gmra.mxu0 %v361
      %v441 = vpop.f32.mrf.mxu0
      %v442 = vadd.f32 %v217, %v441
      %v443 = vpop.f32.mrf.mxu0
      %v444 = vadd.f32 %v217, %v443
      %445 = vmatmul.bf16.gmra.mxu0 %v364
      %v446 = vpop.f32.mrf.mxu0
      %v447 = vadd.f32 %v217, %v446
      %v448 = vpop.f32.mrf.mxu0
      %v449 = vadd.f32 %v217, %v448
      %450 = vmatmul.bf16.gmra.mxu0 %v367
      %v451 = vpop.f32.mrf.mxu0
      %v452 = vadd.f32 %v217, %v451
      %v453 = vpop.f32.mrf.mxu0
      %v454 = vadd.f32 %v217, %v453
      %455 = vmatmul.bf16.gmra.mxu0 %v370
      %v456 = vpop.f32.mrf.mxu0
      %v457 = vadd.f32 %v217, %v456
      %v458 = vpop.f32.mrf.mxu0
      %v459 = vadd.f32 %v217, %v458
      %460 = vdwg.mxu0
      %vm461 = vcmask 261120
      %462 = vst.msk [vmem:[%s172] sm:$0xff] %vm461, %v382
      %463 = vst.msk [vmem:[%s172 + $0x8] sm:$0xff] %vm461, %v384
      %464 = vst.msk [vmem:[%s172 + $0x10] sm:$0xff] %vm461, %v387
      %465 = vst.msk [vmem:[%s172 + $0x18] sm:$0xff] %vm461, %v389
      %466 = vst.msk [vmem:[%s172 + $0x20] sm:$0xff] %vm461, %v392
      %467 = vst.msk [vmem:[%s172 + $0x28] sm:$0xff] %vm461, %v394
      %468 = vst.msk [vmem:[%s172 + $0x30] sm:$0xff] %vm461, %v397
      %469 = vst.msk [vmem:[%s172 + $0x38] sm:$0xff] %vm461, %v399
      %470 = vst.msk [vmem:[%s172 + $0x40] sm:$0xff] %vm461, %v402
      %471 = vst.msk [vmem:[%s172 + $0x48] sm:$0xff] %vm461, %v404
      %472 = vst.msk [vmem:[%s172 + $0x50] sm:$0xff] %vm461, %v407
      %473 = vst.msk [vmem:[%s172 + $0x58] sm:$0xff] %vm461, %v409
      %474 = vst.msk [vmem:[%s172 + $0x60] sm:$0xff] %vm461, %v412
      %475 = vst.msk [vmem:[%s172 + $0x68] sm:$0xff] %vm461, %v414
      %476 = vst.msk [vmem:[%s172 + $0x70] sm:$0xff] %vm461, %v417
      %477 = vst.msk [vmem:[%s172 + $0x78] sm:$0xff] %vm461, %v419
      %478 = vst.msk [vmem:[%s172 + $0x80] sm:$0xff] %vm461, %v422
      %479 = vst.msk [vmem:[%s172 + $0x88] sm:$0xff] %vm461, %v424
      %480 = vst.msk [vmem:[%s172 + $0x90] sm:$0xff] %vm461, %v427
      %481 = vst.msk [vmem:[%s172 + $0x98] sm:$0xff] %vm461, %v429
      %482 = vst.msk [vmem:[%s172 + $0xa0] sm:$0xff] %vm461, %v432
      %483 = vst.msk [vmem:[%s172 + $0xa8] sm:$0xff] %vm461, %v434
      %484 = vst.msk [vmem:[%s172 + $0xb0] sm:$0xff] %vm461, %v437
      %485 = vst.msk [vmem:[%s172 + $0xb8] sm:$0xff] %vm461, %v439
      %486 = vst.msk [vmem:[%s172 + $0xc0] sm:$0xff] %vm461, %v442
      %487 = vst.msk [vmem:[%s172 + $0xc8] sm:$0xff] %vm461, %v444
      %488 = vst.msk [vmem:[%s172 + $0xd0] sm:$0xff] %vm461, %v447
      %489 = vst.msk [vmem:[%s172 + $0xd8] sm:$0xff] %vm461, %v449
      %490 = vst.msk [vmem:[%s172 + $0xe0] sm:$0xff] %vm461, %v452
      %491 = vst.msk [vmem:[%s172 + $0xe8] sm:$0xff] %vm461, %v454
      %492 = vst.msk [vmem:[%s172 + $0xf0] sm:$0xff] %vm461, %v457
      %493 = vst.msk [vmem:[%s172 + $0xf8] sm:$0xff] %vm461, %v459
      %s494 = smul.u32 32, %s14
      %p495 = scmp.lt.s32.totalorder %s494, 63
      %s496 = scalar_select %p495, %s494, 63
      %s497 = smul.addr %s496, 8
      %s498 = scalar_lea.vmem %s3, %s497
      // Predicated region
      $region33: #{_lambda_.34} parent=31 // pred_check
        %p499 = pneg %p100
      $region34: #{_lambda_.34} parent=31 // pred_check_branch
        %501 = sbr.rel (%p499) target = $region36
      $region35: #{_lambda_.34} parent=31 // pred_region
        %s502 = smul.u32 32, %s14
      $region36: #{_lambda_.34} parent=31 // pred_fallthru
        _
    $region32: #{_lambda_.34} parent=5 // pred_fallthru
      _
    %p503 = scmp.le.s32.totalorder 2, %s9
    // Predicated region
    $region37: #{_lambda_.34} parent=5 // pred_check
      %p504 = pneg %p503
    $region38: #{_lambda_.34} parent=5 // pred_check_branch
      %506 = sbr.rel (%p504) target = $region40
    $region39: #{_lambda_.34} parent=5 // pred_region
      %s507 = ssub.s32 %s9, 2
      // Predicated region
      $region41: #{_lambda_.34} parent=39 // pred_check
        %p508 = pneg %p106
      $region42: #{_lambda_.34} parent=39 // pred_check_branch
        %510 = sbr.rel (%p508) target = $region44
      $region43: #{_lambda_.34} parent=39 // pred_region
        %s511 = smul.u32 32, %s15
        %p512 = scmp.lt.s32.totalorder %s511, 63
        %s513 = scalar_select %p512, %s511, 63
        %s514 = smul.addr %s513, 8
        %s515 = scalar_lea.vmem %s3, %s514
      $region44: #{_lambda_.34} parent=39 // pred_fallthru
        _
    $region40: #{_lambda_.34} parent=5 // pred_fallthru
      _
  $region6: #{_lambda_.34} parent=0 // loop_footer
    %s13 = sadd.s32 1, %s9
  $region7: #{_lambda_.34} parent=0 // loop_footer_branch
    %8 = sbr.rel target = $region3
  $region8: #{_lambda_.34} parent=0 // loop_exit
    _

// kernel: _lambda_.39
$region0: #{_lambda_.39}
  #allocation0 [shape = 'u32[]', space=smem, size = 0x4, offset = 0x4, fixed_abs, tag = 'smem constant byte address 0x4 - core index']
  #allocation1 [shape = 'u32[72,128]{1,0:T(1,128)}', space=vmem, size = 0x9000, scoped, tag = 'internal scratch']
  %s0 = inlined_call_operand.vmem [shape: bf16[512,32], index: 0, kind: input, shape index: {}]
  %s1 = inlined_call_operand.vmem [shape: bf16[32,16], index: 1, kind: input, shape index: {}]
  %s2 = inlined_call_operand.vmem [shape: f32[1,16], index: 2, kind: input, shape index: {}]
  %s3 = inlined_call_operand.vmem [shape: f32[512,16], index: 3, kind: output, shape index: {}]
  %s4 = sld [smem:[#allocation0]]
  $region45: #{_lambda_.39} parent=0
    _
  %s6 = ssub.s32 1, %s4
  %s7 = scalar_select 0, %s6, %s4
  loop: start=0, step=1, limit=4
  $region2: #{_lambda_.39} parent=0 // loop_pre_header
    _
  $region3: #{_lambda_.39} parent=0 // loop_header
    %s9 = sphi 0, %s13
    %p10 = scmp.ge.s32.totalorder %s9, 4
    %s19 = sphi 0, %s21
    %s22 = sphi 0, %s19
    %s23 = sphi 0, %s22
    %s39 = sphi 0, %s23
    %s43 = sphi 0, %s43
    %s45 = sphi 0, %s43
    %s46 = sphi 0, %s45
    %s60 = sphi 0, %s46
    %s64 = sphi 0, %s64
    %s66 = sphi 0, %s64
    %s67 = sphi 0, %s66
    %s81 = sphi 0, %s67
    %s87 = sphi 0, %s89
    %s90 = sphi 0, %s87
    %s91 = sphi 0, %s90
    %s107 = sphi 0, %s91
  $region4: #{_lambda_.39} parent=0 // loop_header_branch
    %12 = sbr.rel (%p10) target = $region8
  $region5: #{_lambda_.39} parent=0 // loop_body
    %s14 = ssub.s32 %s9, 1
    %s15 = ssub.s32 %s9, 2
    %s16 = sadd.s32 %s9, 1
    %s17 = ssub.s32 %s9, %s16
    %p18 = scmp.eq.s32.totalorder %s17, 0
    %s20 = sadd.s32 %s19, 1
    %s21 = scalar_select %p18, %s19, %s20
    %p24 = pneg %p18
    %p25 = scmp.eq.s32.totalorder %s9, 1
    %p26 = por %p24, %p25
    %p27 = scmp.ne.s32.totalorder %s19, %s22
    %p28 = scmp.eq.s32.totalorder %s9, 0
    %p29 = por %p27, %p28
    %p30 = scmp.ne.s32.totalorder %s19, %s22
    %p31 = scmp.eq.s32.totalorder %s14, 1
    %p32 = por %p30, %p31
    %p33 = scmp.ne.s32.totalorder %s22, %s23
    %p34 = scmp.eq.s32.totalorder %s14, 0
    %p35 = por %p33, %p34
    %p36 = scmp.ne.s32.totalorder %s22, %s23
    %p37 = scmp.eq.s32.totalorder %s15, 1
    %p38 = por %p36, %p37
    %p40 = scmp.ne.s32.totalorder %s23, %s39
    %p41 = scmp.eq.s32.totalorder %s15, 0
    %p42 = por %p40, %p41
    %s44 = sadd.s32 %s43, 1
    %p47 = scmp.eq.s32.totalorder %s9, 1
    %p48 = scmp.ne.s32.totalorder %s43, %s45
    %p49 = scmp.eq.s32.totalorder %s9, 0
    %p50 = por %p48, %p49
    %p51 = scmp.ne.s32.totalorder %s43, %s45
    %p52 = scmp.eq.s32.totalorder %s14, 1
    %p53 = por %p51, %p52
    %p54 = scmp.ne.s32.totalorder %s45, %s46
    %p55 = scmp.eq.s32.totalorder %s14, 0
    %p56 = por %p54, %p55
    %p57 = scmp.ne.s32.totalorder %s45, %s46
    %p58 = scmp.eq.s32.totalorder %s15, 1
    %p59 = por %p57, %p58
    %p61 = scmp.ne.s32.totalorder %s46, %s60
    %p62 = scmp.eq.s32.totalorder %s15, 0
    %p63 = por %p61, %p62
    %s65 = sadd.s32 %s64, 1
    %p68 = scmp.eq.s32.totalorder %s9, 1
    %p69 = scmp.ne.s32.totalorder %s64, %s66
    %p70 = scmp.eq.s32.totalorder %s9, 0
    %p71 = por %p69, %p70
    %p72 = scmp.ne.s32.totalorder %s64, %s66
    %p73 = scmp.eq.s32.totalorder %s14, 1
    %p74 = por %p72, %p73
    %p75 = scmp.ne.s32.totalorder %s66, %s67
    %p76 = scmp.eq.s32.totalorder %s14, 0
    %p77 = por %p75, %p76
    %p78 = scmp.ne.s32.totalorder %s66, %s67
    %p79 = scmp.eq.s32.totalorder %s15, 1
    %p80 = por %p78, %p79
    %p82 = scmp.ne.s32.totalorder %s67, %s81
    %p83 = scmp.eq.s32.totalorder %s15, 0
    %p84 = por %p82, %p83
    %s85 = ssub.s32 %s9, %s16
    %p86 = scmp.eq.s32.totalorder %s85, 0
    %s88 = sadd.s32 %s87, 1
    %s89 = scalar_select %p86, %s87, %s88
    %p92 = pneg %p86
    %p93 = scmp.eq.s32.totalorder %s9, 1
    %p94 = por %p92, %p93
    %p95 = scmp.ne.s32.totalorder %s87, %s90
    %p96 = scmp.eq.s32.totalorder %s9, 0
    %p97 = por %p95, %p96
    %p98 = scmp.ne.s32.totalorder %s87, %s90
    %p99 = scmp.eq.s32.totalorder %s14, 1
    %p100 = por %p98, %p99
    %p101 = scmp.ne.s32.totalorder %s90, %s91
    %p102 = scmp.eq.s32.totalorder %s14, 0
    %p103 = por %p101, %p102
    %p104 = scmp.ne.s32.totalorder %s90, %s91
    %p105 = scmp.eq.s32.totalorder %s15, 1
    %p106 = por %p104, %p105
    %p108 = scmp.ne.s32.totalorder %s91, %s107
    %p109 = scmp.eq.s32.totalorder %s15, 0
    %p110 = por %p108, %p109
    %p111 = scmp.le.s32.totalorder 1, %s9
    %p112 = scmp.lt.s32.totalorder %s9, 3
    %p113 = pnand %p111, %p112
    %p114 = pneg %p113
    // Predicated region
    $region9: #{_lambda_.39} parent=5 // pred_check
      _
    $region10: #{_lambda_.39} parent=5 // pred_check_branch
      %116 = sbr.rel (%p113) target = $region12
    $region11: #{_lambda_.39} parent=5 // pred_region
      %s117 = ssub.s32 %s9, 1
      // Predicated region
      $region13: #{_lambda_.39} parent=11 // pred_check
        %p118 = pneg %p56
      $region14: #{_lambda_.39} parent=11 // pred_check_branch
        %120 = sbr.rel (%p118) target = $region16
      $region15: #{_lambda_.39} parent=11 // pred_region
        _
      $region16: #{_lambda_.39} parent=11 // pred_fallthru
        _
      // Predicated region
      $region17: #{_lambda_.39} parent=11 // pred_check
        %p121 = pneg %p77
      $region18: #{_lambda_.39} parent=11 // pred_check_branch
        %123 = sbr.rel (%p121) target = $region20
      $region19: #{_lambda_.39} parent=11 // pred_region
        _
      $region20: #{_lambda_.39} parent=11 // pred_fallthru
        _
    $region12: #{_lambda_.39} parent=5 // pred_fallthru
      _
    %p124 = scmp.lt.s32.totalorder %s9, 2
    // Predicated region
    $region21: #{_lambda_.39} parent=5 // pred_check
      %p125 = pneg %p124
    $region22: #{_lambda_.39} parent=5 // pred_check_branch
      %127 = sbr.rel (%p125) target = $region24
    $region23: #{_lambda_.39} parent=5 // pred_region
      // Predicated region
      $region25: #{_lambda_.39} parent=23 // pred_check
        %p128 = pneg %p29
      $region26: #{_lambda_.39} parent=23 // pred_check_branch
        %130 = sbr.rel (%p128) target = $region28
      $region27: #{_lambda_.39} parent=23 // pred_region
        %s131 = smul.u32 32, %s9
        %p132 = scmp.lt.s32.totalorder %s131, 63
        %s133 = scalar_select %p132, %s131, 63
        %s134 = smul.addr %s133, 4
        %s135 = scalar_lea.vmem %s0, %s134
        %s136 = smul.u32 32, %s9
      $region28: #{_lambda_.39} parent=23 // pred_fallthru
        _
    $region24: #{_lambda_.39} parent=5 // pred_fallthru
      _
    %p137 = scmp.le.s32.totalorder 1, %s9
    %p138 = scmp.lt.s32.totalorder %s9, 3
    %p139 = pnand %p137, %p138
    %p140 = pneg %p139
    // Predicated region
    $region29: #{_lambda_.39} parent=5 // pred_check
      _
    $region30: #{_lambda_.39} parent=5 // pred_check_branch
      %142 = sbr.rel (%p139) target = $region32
    $region31: #{_lambda_.39} parent=5 // pred_region
      %s143 = ssub.s32 %s9, 1
      %s144 = smul.u32 32, %s14
      %p145 = scmp.lt.s32.totalorder %s144, 63
      %s146 = scalar_select %p145, %s144, 63
      %s147 = smul.addr %s146, 4
      %s148 = scalar_lea.vmem %s0, %s147
      %p149 = pneg %p35
      %p150 = pneg %p32
      %p151 = pneg %p56
      %p152 = pneg %p53
      %p153 = pneg %p77
      %p154 = pneg %p74
      %p155 = pneg %p103
      %p156 = pneg %p100
      %s157 = smul.u32 32, %s14
      %p158 = scmp.lt.s32.totalorder %s157, 63
      %s159 = scalar_select %p158, %s157, 63
      %s160 = smul.addr %s159, 8
      %s161 = scalar_lea.vmem %s3, %s160
      %s162 = smul.u32 32, %s14
      %p163 = scmp.lt.s32.totalorder %s162, 63
      %s164 = scalar_select %p163, %s162, 63
      %s165 = smul.addr %s164, 4
      %s166 = scalar_lea.vmem %s0, %s165
      %s167 = smul.u32 32, %s14
      %s168 = smul.u32 32, %s14
      %p169 = scmp.lt.s32.totalorder %s168, 63
      %s170 = scalar_select %p169, %s168, 63
      %s171 = smul.addr %s170, 8
      %s172 = scalar_lea.vmem %s3, %s171
      %s173 = smul.u32 32, %s14
      %v175 = vld [vmem:[%s166] sm:$0xf]
      %v176 = vld [vmem:[%s166 + $0x4] sm:$0xf]
      %v177 = vld [vmem:[%s166 + $0x8] sm:$0xf]
      %v178 = vld [vmem:[%s166 + $0xc] sm:$0xf]
      %v179 = vld [vmem:[%s166 + $0x10] sm:$0xf]
      %v180 = vld [vmem:[%s166 + $0x14] sm:$0xf]
      %v181 = vld [vmem:[%s166 + $0x18] sm:$0xf]
      %v182 = vld [vmem:[%s166 + $0x1c] sm:$0xf]
      %v183 = vld [vmem:[%s166 + $0x20] sm:$0xf]
      %v184 = vld [vmem:[%s166 + $0x24] sm:$0xf]
      %v185 = vld [vmem:[%s166 + $0x28] sm:$0xf]
      %v186 = vld [vmem:[%s166 + $0x2c] sm:$0xf]
      %v187 = vld [vmem:[%s166 + $0x30] sm:$0xf]
      %v188 = vld [vmem:[%s166 + $0x34] sm:$0xf]
      %v189 = vld [vmem:[%s166 + $0x38] sm:$0xf]
      %v190 = vld [vmem:[%s166 + $0x3c] sm:$0xf]
      %v191 = vld [vmem:[%s166 + $0x40] sm:$0xf]
      %v192 = vld [vmem:[%s166 + $0x44] sm:$0xf]
      %v193 = vld [vmem:[%s166 + $0x48] sm:$0xf]
      %v194 = vld [vmem:[%s166 + $0x4c] sm:$0xf]
      %v195 = vld [vmem:[%s166 + $0x50] sm:$0xf]
      %v196 = vld [vmem:[%s166 + $0x54] sm:$0xf]
      %v197 = vld [vmem:[%s166 + $0x58] sm:$0xf]
      %v198 = vld [vmem:[%s166 + $0x5c] sm:$0xf]
      %v199 = vld [vmem:[%s166 + $0x60] sm:$0xf]
      %v200 = vld [vmem:[%s166 + $0x64] sm:$0xf]
      %v201 = vld [vmem:[%s166 + $0x68] sm:$0xf]
      %v202 = vld [vmem:[%s166 + $0x6c] sm:$0xf]
      %v203 = vld [vmem:[%s166 + $0x70] sm:$0xf]
      %v204 = vld [vmem:[%s166 + $0x74] sm:$0xf]
      %v205 = vld [vmem:[%s166 + $0x78] sm:$0xf]
      %v206 = vld [vmem:[%s166 + $0x7c] sm:$0xf]
      %v207 = vld [vmem:[%s1] sm:$0xf]
      %v208 = vld [vmem:[%s1 + $0x4] sm:$0xf]
      %v209 = vld [vmem:[%s1 + $0x8] sm:$0xf]
      %v210 = vld [vmem:[%s1 + $0xc] sm:$0xf]
      %v211 = vld [vmem:[%s2] sm:$0x1]
      %v213 = vperm.slane %v211, 0
      %v247 = vunpack.c.l.b16 %v175
      %v248 = vunpack.c.l.b16 %v176
      %v249 = vunpack.c.l.b16 %v177
      %v250 = vunpack.c.l.b16 %v178
      %v251 = vunpack.c.l.b16 %v179
      %v252 = vunpack.c.l.b16 %v180
      %v253 = vunpack.c.l.b16 %v181
      %v254 = vunpack.c.l.b16 %v182
      %v255 = vunpack.c.l.b16 %v183
      %v256 = vunpack.c.l.b16 %v184
      %v257 = vunpack.c.l.b16 %v185
      %v258 = vunpack.c.l.b16 %v186
      %v259 = vunpack.c.l.b16 %v187
      %v260 = vunpack.c.l.b16 %v188
      %v261 = vunpack.c.l.b16 %v189
      %v262 = vunpack.c.l.b16 %v190
      %v263 = vunpack.c.l.b16 %v191
      %v264 = vunpack.c.l.b16 %v192
      %v265 = vunpack.c.l.b16 %v193
      %v266 = vunpack.c.l.b16 %v194
      %v267 = vunpack.c.l.b16 %v195
      %v268 = vunpack.c.l.b16 %v196
      %v269 = vunpack.c.l.b16 %v197
      %v270 = vunpack.c.l.b16 %v198
      %v271 = vunpack.c.l.b16 %v199
      %v272 = vunpack.c.l.b16 %v200
      %v273 = vunpack.c.l.b16 %v201
      %v274 = vunpack.c.l.b16 %v202
      %v275 = vunpack.c.l.b16 %v203
      %v276 = vunpack.c.l.b16 %v204
      %v277 = vunpack.c.l.b16 %v205
      %v278 = vunpack.c.l.b16 %v206
      %v279 = vpack.c.b16 %v248, %v247
      %v280 = vpack.c.b16 %v250, %v249
      %v281 = vpack.c.b16 %v252, %v251
      %v282 = vpack.c.b16 %v254, %v253
      %v283 = vpack.c.b16 %v256, %v255
      %v284 = vpack.c.b16 %v258, %v257
      %v285 = vpack.c.b16 %v260, %v259
      %v286 = vpack.c.b16 %v262, %v261
      %v287 = vpack.c.b16 %v264, %v263
      %v288 = vpack.c.b16 %v266, %v265
      %v289 = vpack.c.b16 %v268, %v267
      %v290 = vpack.c.b16 %v270, %v269
      %v291 = vpack.c.b16 %v272, %v271
      %v292 = vpack.c.b16 %v274, %v273
      %v293 = vpack.c.b16 %v276, %v275
      %v294 = vpack.c.b16 %v278, %v277
      %v299 = vunpack.c.l.b16 %v207
      %v300 = vunpack.c.l.b16 %v208
      %v301 = vunpack.c.l.b16 %v209
      %v302 = vunpack.c.l.b16 %v210
      %v303 = vpack.c.b16 %v300, %v299
      %v304 = vpack.c.b16 %v302, %v301
      %vm307 = vcmask 261120
      %v309 = vsel %vm307, %v279, 0
      %v312 = vsel %vm307, %v280, 0
      %v315 = vsel %vm307, %v281, 0
      %v318 = vsel %vm307, %v282, 0
      %v321 = vsel %vm307, %v283, 0
      %v324 = vsel %vm307, %v284, 0
      %v327 = vsel %vm307, %v285, 0
      %v330 = vsel %vm307, %v286, 0
      %v333 = vsel %vm307, %v287, 0
      %v336 = vsel %vm307, %v288, 0
      %v339 = vsel %vm307, %v289, 0
      %v342 = vsel %vm307, %v290, 0
      %v345 = vsel %vm307, %v291, 0
      %v348 = vsel %vm307, %v292, 0
      %v351 = vsel %vm307, %v293, 0
      %v354 = vsel %vm307, %v294, 0
      %356 = vmatpush.bf16.msra.mxu0 0
      %357 = vmatpush.bf16.msra.mxu0 0
      %358 = vmatpush.bf16.msra.mxu0 0
      %359 = vmatpush.bf16.msra.mxu0 0
      %360 = vmatpush.bf16.msra.mxu0 0
      %361 = vmatpush.bf16.msra.mxu0 0
      %362 = vmatpush.bf16.msra.mxu0 %v304
      %363 = vmatpush.bf16.msra.mxu0 %v303
      %364 = vmatmul.bf16.gmra.mxu0 %v309
      %v365 = vpop.f32.mrf.mxu0
      %v366 = vadd.f32 %v213, %v365
      %v367 = vpop.f32.mrf.mxu0
      %v368 = vadd.f32 %v213, %v367
      %369 = vmatmul.bf16.gmra.mxu0 %v312
      %v370 = vpop.f32.mrf.mxu0
      %v371 = vadd.f32 %v213, %v370
      %v372 = vpop.f32.mrf.mxu0
      %v373 = vadd.f32 %v213, %v372
      %374 = vmatmul.bf16.gmra.mxu0 %v315
      %v375 = vpop.f32.mrf.mxu0
      %v376 = vadd.f32 %v213, %v375
      %v377 = vpop.f32.mrf.mxu0
      %v378 = vadd.f32 %v213, %v377
      %379 = vmatmul.bf16.gmra.mxu0 %v318
      %v380 = vpop.f32.mrf.mxu0
      %v381 = vadd.f32 %v213, %v380
      %v382 = vpop.f32.mrf.mxu0
      %v383 = vadd.f32 %v213, %v382
      %384 = vmatmul.bf16.gmra.mxu0 %v321
      %v385 = vpop.f32.mrf.mxu0
      %v386 = vadd.f32 %v213, %v385
      %v387 = vpop.f32.mrf.mxu0
      %v388 = vadd.f32 %v213, %v387
      %389 = vmatmul.bf16.gmra.mxu0 %v324
      %v390 = vpop.f32.mrf.mxu0
      %v391 = vadd.f32 %v213, %v390
      %v392 = vpop.f32.mrf.mxu0
      %v393 = vadd.f32 %v213, %v392
      %394 = vmatmul.bf16.gmra.mxu0 %v327
      %v395 = vpop.f32.mrf.mxu0
      %v396 = vadd.f32 %v213, %v395
      %v397 = vpop.f32.mrf.mxu0
      %v398 = vadd.f32 %v213, %v397
      %399 = vmatmul.bf16.gmra.mxu0 %v330
      %v400 = vpop.f32.mrf.mxu0
      %v401 = vadd.f32 %v213, %v400
      %v402 = vpop.f32.mrf.mxu0
      %v403 = vadd.f32 %v213, %v402
      %404 = vmatmul.bf16.gmra.mxu0 %v333
      %v405 = vpop.f32.mrf.mxu0
      %v406 = vadd.f32 %v213, %v405
      %v407 = vpop.f32.mrf.mxu0
      %v408 = vadd.f32 %v213, %v407
      %409 = vmatmul.bf16.gmra.mxu0 %v336
      %v410 = vpop.f32.mrf.mxu0
      %v411 = vadd.f32 %v213, %v410
      %v412 = vpop.f32.mrf.mxu0
      %v413 = vadd.f32 %v213, %v412
      %414 = vmatmul.bf16.gmra.mxu0 %v339
      %v415 = vpop.f32.mrf.mxu0
      %v416 = vadd.f32 %v213, %v415
      %v417 = vpop.f32.mrf.mxu0
      %v418 = vadd.f32 %v213, %v417
      %419 = vmatmul.bf16.gmra.mxu0 %v342
      %v420 = vpop.f32.mrf.mxu0
      %v421 = vadd.f32 %v213, %v420
      %v422 = vpop.f32.mrf.mxu0
      %v423 = vadd.f32 %v213, %v422
      %424 = vmatmul.bf16.gmra.mxu0 %v345
      %v425 = vpop.f32.mrf.mxu0
      %v426 = vadd.f32 %v213, %v425
      %v427 = vpop.f32.mrf.mxu0
      %v428 = vadd.f32 %v213, %v427
      %429 = vmatmul.bf16.gmra.mxu0 %v348
      %v430 = vpop.f32.mrf.mxu0
      %v431 = vadd.f32 %v213, %v430
      %v432 = vpop.f32.mrf.mxu0
      %v433 = vadd.f32 %v213, %v432
      %434 = vmatmul.bf16.gmra.mxu0 %v351
      %v435 = vpop.f32.mrf.mxu0
      %v436 = vadd.f32 %v213, %v435
      %v437 = vpop.f32.mrf.mxu0
      %v438 = vadd.f32 %v213, %v437
      %439 = vmatmul.bf16.gmra.mxu0 %v354
      %v440 = vpop.f32.mrf.mxu0
      %v441 = vadd.f32 %v213, %v440
      %v442 = vpop.f32.mrf.mxu0
      %v443 = vadd.f32 %v213, %v442
      %444 = vdwg.mxu0
      %vm445 = vcmask 130048
      %446 = vst.msk [vmem:[%s172] sm:$0xff] %vm445, %v366
      %447 = vst.msk [vmem:[%s172 + $0x8] sm:$0xff] %vm445, %v368
      %448 = vst.msk [vmem:[%s172 + $0x10] sm:$0xff] %vm445, %v371
      %449 = vst.msk [vmem:[%s172 + $0x18] sm:$0xff] %vm445, %v373
      %450 = vst.msk [vmem:[%s172 + $0x20] sm:$0xff] %vm445, %v376
      %451 = vst.msk [vmem:[%s172 + $0x28] sm:$0xff] %vm445, %v378
      %452 = vst.msk [vmem:[%s172 + $0x30] sm:$0xff] %vm445, %v381
      %453 = vst.msk [vmem:[%s172 + $0x38] sm:$0xff] %vm445, %v383
      %454 = vst.msk [vmem:[%s172 + $0x40] sm:$0xff] %vm445, %v386
      %455 = vst.msk [vmem:[%s172 + $0x48] sm:$0xff] %vm445, %v388
      %456 = vst.msk [vmem:[%s172 + $0x50] sm:$0xff] %vm445, %v391
      %457 = vst.msk [vmem:[%s172 + $0x58] sm:$0xff] %vm445, %v393
      %458 = vst.msk [vmem:[%s172 + $0x60] sm:$0xff] %vm445, %v396
      %459 = vst.msk [vmem:[%s172 + $0x68] sm:$0xff] %vm445, %v398
      %460 = vst.msk [vmem:[%s172 + $0x70] sm:$0xff] %vm445, %v401
      %461 = vst.msk [vmem:[%s172 + $0x78] sm:$0xff] %vm445, %v403
      %462 = vst.msk [vmem:[%s172 + $0x80] sm:$0xff] %vm445, %v406
      %463 = vst.msk [vmem:[%s172 + $0x88] sm:$0xff] %vm445, %v408
      %464 = vst.msk [vmem:[%s172 + $0x90] sm:$0xff] %vm445, %v411
      %465 = vst.msk [vmem:[%s172 + $0x98] sm:$0xff] %vm445, %v413
      %466 = vst.msk [vmem:[%s172 + $0xa0] sm:$0xff] %vm445, %v416
      %467 = vst.msk [vmem:[%s172 + $0xa8] sm:$0xff] %vm445, %v418
      %468 = vst.msk [vmem:[%s172 + $0xb0] sm:$0xff] %vm445, %v421
      %469 = vst.msk [vmem:[%s172 + $0xb8] sm:$0xff] %vm445, %v423
      %470 = vst.msk [vmem:[%s172 + $0xc0] sm:$0xff] %vm445, %v426
      %471 = vst.msk [vmem:[%s172 + $0xc8] sm:$0xff] %vm445, %v428
      %472 = vst.msk [vmem:[%s172 + $0xd0] sm:$0xff] %vm445, %v431
      %473 = vst.msk [vmem:[%s172 + $0xd8] sm:$0xff] %vm445, %v433
      %474 = vst.msk [vmem:[%s172 + $0xe0] sm:$0xff] %vm445, %v436
      %475 = vst.msk [vmem:[%s172 + $0xe8] sm:$0xff] %vm445, %v438
      %476 = vst.msk [vmem:[%s172 + $0xf0] sm:$0xff] %vm445, %v441
      %477 = vst.msk [vmem:[%s172 + $0xf8] sm:$0xff] %vm445, %v443
      %s478 = smul.u32 32, %s14
      %p479 = scmp.lt.s32.totalorder %s478, 63
      %s480 = scalar_select %p479, %s478, 63
      %s481 = smul.addr %s480, 8
      %s482 = scalar_lea.vmem %s3, %s481
      // Predicated region
      $region33: #{_lambda_.39} parent=31 // pred_check
        %p483 = pneg %p100
      $region34: #{_lambda_.39} parent=31 // pred_check_branch
        %485 = sbr.rel (%p483) target = $region36
      $region35: #{_lambda_.39} parent=31 // pred_region
        %s486 = smul.u32 32, %s14
      $region36: #{_lambda_.39} parent=31 // pred_fallthru
        _
    $region32: #{_lambda_.39} parent=5 // pred_fallthru
      _
    %p487 = scmp.le.s32.totalorder 2, %s9
    // Predicated region
    $region37: #{_lambda_.39} parent=5 // pred_check
      %p488 = pneg %p487
    $region38: #{_lambda_.39} parent=5 // pred_check_branch
      %490 = sbr.rel (%p488) target = $region40
    $region39: #{_lambda_.39} parent=5 // pred_region
      %s491 = ssub.s32 %s9, 2
      // Predicated region
      $region41: #{_lambda_.39} parent=39 // pred_check
        %p492 = pneg %p106
      $region42: #{_lambda_.39} parent=39 // pred_check_branch
        %494 = sbr.rel (%p492) target = $region44
      $region43: #{_lambda_.39} parent=39 // pred_region
        %s495 = smul.u32 32, %s15
        %p496 = scmp.lt.s32.totalorder %s495, 63
        %s497 = scalar_select %p496, %s495, 63
        %s498 = smul.addr %s497, 8
        %s499 = scalar_lea.vmem %s3, %s498
      $region44: #{_lambda_.39} parent=39 // pred_fallthru
        _
    $region40: #{_lambda_.39} parent=5 // pred_fallthru
      _
  $region6: #{_lambda_.39} parent=0 // loop_footer
    %s13 = sadd.s32 1, %s9
  $region7: #{_lambda_.39} parent=0 // loop_footer_branch
    %8 = sbr.rel target = $region3
  $region8: #{_lambda_.39} parent=0 // loop_exit
    _

// kernel: _lambda_.40
$region0: #{_lambda_.40}
  #allocation0 [shape = 'u32[]', space=smem, size = 0x4, offset = 0x4, fixed_abs, tag = 'smem constant byte address 0x4 - core index']
  #allocation1 [shape = 'u32[72,128]{1,0:T(1,128)}', space=vmem, size = 0x9000, scoped, tag = 'internal scratch']
  %s0 = inlined_call_operand.vmem [shape: bf16[2048,32], index: 0, kind: input, shape index: {}]
  %s1 = inlined_call_operand.vmem [shape: bf16[32,16], index: 1, kind: input, shape index: {}]
  %s2 = inlined_call_operand.vmem [shape: f32[1,16], index: 2, kind: input, shape index: {}]
  %s3 = inlined_call_operand.vmem [shape: f32[2048,16], index: 3, kind: output, shape index: {}]
  %s4 = sld [smem:[#allocation0]]
  $region45: #{_lambda_.40} parent=0
    _
  %s6 = ssub.s32 1, %s4
  %s7 = scalar_select 0, %s6, %s4
  loop: start=0, step=1, limit=6
  $region2: #{_lambda_.40} parent=0 // loop_pre_header
    _
  $region3: #{_lambda_.40} parent=0 // loop_header
    %s9 = sphi 0, %s13
    %p10 = scmp.ge.s32.totalorder %s9, 6
    %s19 = sphi 0, %s21
    %s22 = sphi 0, %s19
    %s23 = sphi 0, %s22
    %s39 = sphi 0, %s23
    %s43 = sphi 0, %s43
    %s45 = sphi 0, %s43
    %s46 = sphi 0, %s45
    %s60 = sphi 0, %s46
    %s64 = sphi 0, %s64
    %s66 = sphi 0, %s64
    %s67 = sphi 0, %s66
    %s81 = sphi 0, %s67
    %s87 = sphi 0, %s89
    %s90 = sphi 0, %s87
    %s91 = sphi 0, %s90
    %s107 = sphi 0, %s91
  $region4: #{_lambda_.40} parent=0 // loop_header_branch
    %12 = sbr.rel (%p10) target = $region8
  $region5: #{_lambda_.40} parent=0 // loop_body
    %s14 = ssub.s32 %s9, 1
    %s15 = ssub.s32 %s9, 2
    %s16 = sadd.s32 %s9, 1
    %s17 = ssub.s32 %s9, %s16
    %p18 = scmp.eq.s32.totalorder %s17, 0
    %s20 = sadd.s32 %s19, 1
    %s21 = scalar_select %p18, %s19, %s20
    %p24 = pneg %p18
    %p25 = scmp.eq.s32.totalorder %s9, 3
    %p26 = por %p24, %p25
    %p27 = scmp.ne.s32.totalorder %s19, %s22
    %p28 = scmp.eq.s32.totalorder %s9, 0
    %p29 = por %p27, %p28
    %p30 = scmp.ne.s32.totalorder %s19, %s22
    %p31 = scmp.eq.s32.totalorder %s14, 3
    %p32 = por %p30, %p31
    %p33 = scmp.ne.s32.totalorder %s22, %s23
    %p34 = scmp.eq.s32.totalorder %s14, 0
    %p35 = por %p33, %p34
    %p36 = scmp.ne.s32.totalorder %s22, %s23
    %p37 = scmp.eq.s32.totalorder %s15, 3
    %p38 = por %p36, %p37
    %p40 = scmp.ne.s32.totalorder %s23, %s39
    %p41 = scmp.eq.s32.totalorder %s15, 0
    %p42 = por %p40, %p41
    %s44 = sadd.s32 %s43, 1
    %p47 = scmp.eq.s32.totalorder %s9, 3
    %p48 = scmp.ne.s32.totalorder %s43, %s45
    %p49 = scmp.eq.s32.totalorder %s9, 0
    %p50 = por %p48, %p49
    %p51 = scmp.ne.s32.totalorder %s43, %s45
    %p52 = scmp.eq.s32.totalorder %s14, 3
    %p53 = por %p51, %p52
    %p54 = scmp.ne.s32.totalorder %s45, %s46
    %p55 = scmp.eq.s32.totalorder %s14, 0
    %p56 = por %p54, %p55
    %p57 = scmp.ne.s32.totalorder %s45, %s46
    %p58 = scmp.eq.s32.totalorder %s15, 3
    %p59 = por %p57, %p58
    %p61 = scmp.ne.s32.totalorder %s46, %s60
    %p62 = scmp.eq.s32.totalorder %s15, 0
    %p63 = por %p61, %p62
    %s65 = sadd.s32 %s64, 1
    %p68 = scmp.eq.s32.totalorder %s9, 3
    %p69 = scmp.ne.s32.totalorder %s64, %s66
    %p70 = scmp.eq.s32.totalorder %s9, 0
    %p71 = por %p69, %p70
    %p72 = scmp.ne.s32.totalorder %s64, %s66
    %p73 = scmp.eq.s32.totalorder %s14, 3
    %p74 = por %p72, %p73
    %p75 = scmp.ne.s32.totalorder %s66, %s67
    %p76 = scmp.eq.s32.totalorder %s14, 0
    %p77 = por %p75, %p76
    %p78 = scmp.ne.s32.totalorder %s66, %s67
    %p79 = scmp.eq.s32.totalorder %s15, 3
    %p80 = por %p78, %p79
    %p82 = scmp.ne.s32.totalorder %s67, %s81
    %p83 = scmp.eq.s32.totalorder %s15, 0
    %p84 = por %p82, %p83
    %s85 = ssub.s32 %s9, %s16
    %p86 = scmp.eq.s32.totalorder %s85, 0
    %s88 = sadd.s32 %s87, 1
    %s89 = scalar_select %p86, %s87, %s88
    %p92 = pneg %p86
    %p93 = scmp.eq.s32.totalorder %s9, 3
    %p94 = por %p92, %p93
    %p95 = scmp.ne.s32.totalorder %s87, %s90
    %p96 = scmp.eq.s32.totalorder %s9, 0
    %p97 = por %p95, %p96
    %p98 = scmp.ne.s32.totalorder %s87, %s90
    %p99 = scmp.eq.s32.totalorder %s14, 3
    %p100 = por %p98, %p99
    %p101 = scmp.ne.s32.totalorder %s90, %s91
    %p102 = scmp.eq.s32.totalorder %s14, 0
    %p103 = por %p101, %p102
    %p104 = scmp.ne.s32.totalorder %s90, %s91
    %p105 = scmp.eq.s32.totalorder %s15, 3
    %p106 = por %p104, %p105
    %p108 = scmp.ne.s32.totalorder %s91, %s107
    %p109 = scmp.eq.s32.totalorder %s15, 0
    %p110 = por %p108, %p109
    %p111 = scmp.le.s32.totalorder 1, %s9
    %p112 = scmp.lt.s32.totalorder %s9, 5
    %p113 = pnand %p111, %p112
    %p114 = pneg %p113
    // Predicated region
    $region9: #{_lambda_.40} parent=5 // pred_check
      _
    $region10: #{_lambda_.40} parent=5 // pred_check_branch
      %116 = sbr.rel (%p113) target = $region12
    $region11: #{_lambda_.40} parent=5 // pred_region
      %s117 = ssub.s32 %s9, 1
      // Predicated region
      $region13: #{_lambda_.40} parent=11 // pred_check
        %p118 = pneg %p56
      $region14: #{_lambda_.40} parent=11 // pred_check_branch
        %120 = sbr.rel (%p118) target = $region16
      $region15: #{_lambda_.40} parent=11 // pred_region
        _
      $region16: #{_lambda_.40} parent=11 // pred_fallthru
        _
      // Predicated region
      $region17: #{_lambda_.40} parent=11 // pred_check
        %p121 = pneg %p77
      $region18: #{_lambda_.40} parent=11 // pred_check_branch
        %123 = sbr.rel (%p121) target = $region20
      $region19: #{_lambda_.40} parent=11 // pred_region
        _
      $region20: #{_lambda_.40} parent=11 // pred_fallthru
        _
    $region12: #{_lambda_.40} parent=5 // pred_fallthru
      _
    %p124 = scmp.lt.s32.totalorder %s9, 4
    // Predicated region
    $region21: #{_lambda_.40} parent=5 // pred_check
      %p125 = pneg %p124
    $region22: #{_lambda_.40} parent=5 // pred_check_branch
      %127 = sbr.rel (%p125) target = $region24
    $region23: #{_lambda_.40} parent=5 // pred_region
      // Predicated region
      $region25: #{_lambda_.40} parent=23 // pred_check
        %p128 = pneg %p29
      $region26: #{_lambda_.40} parent=23 // pred_check_branch
        %130 = sbr.rel (%p128) target = $region28
      $region27: #{_lambda_.40} parent=23 // pred_region
        %s131 = smul.u32 64, %s9
        %p132 = scmp.lt.s32.totalorder %s131, 255
        %s133 = scalar_select %p132, %s131, 255
        %s134 = smul.addr %s133, 4
        %s135 = scalar_lea.vmem %s0, %s134
        %s136 = smul.u32 64, %s9
      $region28: #{_lambda_.40} parent=23 // pred_fallthru
        _
    $region24: #{_lambda_.40} parent=5 // pred_fallthru
      _
    %p137 = scmp.le.s32.totalorder 1, %s9
    %p138 = scmp.lt.s32.totalorder %s9, 5
    %p139 = pnand %p137, %p138
    %p140 = pneg %p139
    // Predicated region
    $region29: #{_lambda_.40} parent=5 // pred_check
      _
    $region30: #{_lambda_.40} parent=5 // pred_check_branch
      %142 = sbr.rel (%p139) target = $region32
    $region31: #{_lambda_.40} parent=5 // pred_region
      %s143 = ssub.s32 %s9, 1
      %s144 = smul.u32 64, %s14
      %p145 = scmp.lt.s32.totalorder %s144, 255
      %s146 = scalar_select %p145, %s144, 255
      %s147 = smul.addr %s146, 4
      %s148 = scalar_lea.vmem %s0, %s147
      %p149 = pneg %p35
      %p150 = pneg %p32
      %p151 = pneg %p56
      %p152 = pneg %p53
      %p153 = pneg %p77
      %p154 = pneg %p74
      %p155 = pneg %p103
      %p156 = pneg %p100
      %s157 = smul.u32 64, %s14
      %p158 = scmp.lt.s32.totalorder %s157, 255
      %s159 = scalar_select %p158, %s157, 255
      %s160 = smul.addr %s159, 8
      %s161 = scalar_lea.vmem %s3, %s160
      %s162 = smul.u32 64, %s14
      %p163 = scmp.lt.s32.totalorder %s162, 255
      %s164 = scalar_select %p163, %s162, 255
      %s165 = smul.addr %s164, 4
      %s166 = scalar_lea.vmem %s0, %s165
      %s167 = smul.u32 64, %s14
      %s168 = smul.u32 64, %s14
      %p169 = scmp.lt.s32.totalorder %s168, 255
      %s170 = scalar_select %p169, %s168, 255
      %s171 = smul.addr %s170, 8
      %s172 = scalar_lea.vmem %s3, %s171
      %s173 = smul.u32 64, %s14
      %v175 = vld [vmem:[%s166] sm:$0xf]
      %v176 = vld [vmem:[%s166 + $0x4] sm:$0xf]
      %v177 = vld [vmem:[%s166 + $0x8] sm:$0xf]
      %v178 = vld [vmem:[%s166 + $0xc] sm:$0xf]
      %v179 = vld [vmem:[%s166 + $0x10] sm:$0xf]
      %v180 = vld [vmem:[%s166 + $0x14] sm:$0xf]
      %v181 = vld [vmem:[%s166 + $0x18] sm:$0xf]
      %v182 = vld [vmem:[%s166 + $0x1c] sm:$0xf]
      %v183 = vld [vmem:[%s166 + $0x20] sm:$0xf]
      %v184 = vld [vmem:[%s166 + $0x24] sm:$0xf]
      %v185 = vld [vmem:[%s166 + $0x28] sm:$0xf]
      %v186 = vld [vmem:[%s166 + $0x2c] sm:$0xf]
      %v187 = vld [vmem:[%s166 + $0x30] sm:$0xf]
      %v188 = vld [vmem:[%s166 + $0x34] sm:$0xf]
      %v189 = vld [vmem:[%s166 + $0x38] sm:$0xf]
      %v190 = vld [vmem:[%s166 + $0x3c] sm:$0xf]
      %v191 = vld [vmem:[%s166 + $0x40] sm:$0xf]
      %v192 = vld [vmem:[%s166 + $0x44] sm:$0xf]
      %v193 = vld [vmem:[%s166 + $0x48] sm:$0xf]
      %v194 = vld [vmem:[%s166 + $0x4c] sm:$0xf]
      %v195 = vld [vmem:[%s166 + $0x50] sm:$0xf]
      %v196 = vld [vmem:[%s166 + $0x54] sm:$0xf]
      %v197 = vld [vmem:[%s166 + $0x58] sm:$0xf]
      %v198 = vld [vmem:[%s166 + $0x5c] sm:$0xf]
      %v199 = vld [vmem:[%s166 + $0x60] sm:$0xf]
      %v200 = vld [vmem:[%s166 + $0x64] sm:$0xf]
      %v201 = vld [vmem:[%s166 + $0x68] sm:$0xf]
      %v202 = vld [vmem:[%s166 + $0x6c] sm:$0xf]
      %v203 = vld [vmem:[%s166 + $0x70] sm:$0xf]
      %v204 = vld [vmem:[%s166 + $0x74] sm:$0xf]
      %v205 = vld [vmem:[%s166 + $0x78] sm:$0xf]
      %v206 = vld [vmem:[%s166 + $0x7c] sm:$0xf]
      %v207 = vld [vmem:[%s166 + $0x80] sm:$0xf]
      %v208 = vld [vmem:[%s166 + $0x84] sm:$0xf]
      %v209 = vld [vmem:[%s166 + $0x88] sm:$0xf]
      %v210 = vld [vmem:[%s166 + $0x8c] sm:$0xf]
      %v211 = vld [vmem:[%s166 + $0x90] sm:$0xf]
      %v212 = vld [vmem:[%s166 + $0x94] sm:$0xf]
      %v213 = vld [vmem:[%s166 + $0x98] sm:$0xf]
      %v214 = vld [vmem:[%s166 + $0x9c] sm:$0xf]
      %v215 = vld [vmem:[%s166 + $0xa0] sm:$0xf]
      %v216 = vld [vmem:[%s166 + $0xa4] sm:$0xf]
      %v217 = vld [vmem:[%s166 + $0xa8] sm:$0xf]
      %v218 = vld [vmem:[%s166 + $0xac] sm:$0xf]
      %v219 = vld [vmem:[%s166 + $0xb0] sm:$0xf]
      %v220 = vld [vmem:[%s166 + $0xb4] sm:$0xf]
      %v221 = vld [vmem:[%s166 + $0xb8] sm:$0xf]
      %v222 = vld [vmem:[%s166 + $0xbc] sm:$0xf]
      %v223 = vld [vmem:[%s166 + $0xc0] sm:$0xf]
      %v224 = vld [vmem:[%s166 + $0xc4] sm:$0xf]
      %v225 = vld [vmem:[%s166 + $0xc8] sm:$0xf]
      %v226 = vld [vmem:[%s166 + $0xcc] sm:$0xf]
      %v227 = vld [vmem:[%s166 + $0xd0] sm:$0xf]
      %v228 = vld [vmem:[%s166 + $0xd4] sm:$0xf]
      %v229 = vld [vmem:[%s166 + $0xd8] sm:$0xf]
      %v230 = vld [vmem:[%s166 + $0xdc] sm:$0xf]
      %v231 = vld [vmem:[%s166 + $0xe0] sm:$0xf]
      %v232 = vld [vmem:[%s166 + $0xe4] sm:$0xf]
      %v233 = vld [vmem:[%s166 + $0xe8] sm:$0xf]
      %v234 = vld [vmem:[%s166 + $0xec] sm:$0xf]
      %v235 = vld [vmem:[%s166 + $0xf0] sm:$0xf]
      %v236 = vld [vmem:[%s166 + $0xf4] sm:$0xf]
      %v237 = vld [vmem:[%s166 + $0xf8] sm:$0xf]
      %v238 = vld [vmem:[%s166 + $0xfc] sm:$0xf]
      %v239 = vld [vmem:[%s1] sm:$0xf]
      %v240 = vld [vmem:[%s1 + $0x4] sm:$0xf]
      %v241 = vld [vmem:[%s1 + $0x8] sm:$0xf]
      %v242 = vld [vmem:[%s1 + $0xc] sm:$0xf]
      %v243 = vld [vmem:[%s2] sm:$0x1]
      %v245 = vperm.slane %v243, 0
      %v311 = vunpack.c.l.b16 %v175
      %v312 = vunpack.c.l.b16 %v176
      %v313 = vunpack.c.l.b16 %v177
      %v314 = vunpack.c.l.b16 %v178
      %v315 = vunpack.c.l.b16 %v179
      %v316 = vunpack.c.l.b16 %v180
      %v317 = vunpack.c.l.b16 %v181
      %v318 = vunpack.c.l.b16 %v182
      %v319 = vunpack.c.l.b16 %v183
      %v320 = vunpack.c.l.b16 %v184
      %v321 = vunpack.c.l.b16 %v185
      %v322 = vunpack.c.l.b16 %v186
      %v323 = vunpack.c.l.b16 %v187
      %v324 = vunpack.c.l.b16 %v188
      %v325 = vunpack.c.l.b16 %v189
      %v326 = vunpack.c.l.b16 %v190
      %v327 = vunpack.c.l.b16 %v191
      %v328 = vunpack.c.l.b16 %v192
      %v329 = vunpack.c.l.b16 %v193
      %v330 = vunpack.c.l.b16 %v194
      %v331 = vunpack.c.l.b16 %v195
      %v332 = vunpack.c.l.b16 %v196
      %v333 = vunpack.c.l.b16 %v197
      %v334 = vunpack.c.l.b16 %v198
      %v335 = vunpack.c.l.b16 %v199
      %v336 = vunpack.c.l.b16 %v200
      %v337 = vunpack.c.l.b16 %v201
      %v338 = vunpack.c.l.b16 %v202
      %v339 = vunpack.c.l.b16 %v203
      %v340 = vunpack.c.l.b16 %v204
      %v341 = vunpack.c.l.b16 %v205
      %v342 = vunpack.c.l.b16 %v206
      %v343 = vunpack.c.l.b16 %v207
      %v344 = vunpack.c.l.b16 %v208
      %v345 = vunpack.c.l.b16 %v209
      %v346 = vunpack.c.l.b16 %v210
      %v347 = vunpack.c.l.b16 %v211
      %v348 = vunpack.c.l.b16 %v212
      %v349 = vunpack.c.l.b16 %v213
      %v350 = vunpack.c.l.b16 %v214
      %v351 = vunpack.c.l.b16 %v215
      %v352 = vunpack.c.l.b16 %v216
      %v353 = vunpack.c.l.b16 %v217
      %v354 = vunpack.c.l.b16 %v218
      %v355 = vunpack.c.l.b16 %v219
      %v356 = vunpack.c.l.b16 %v220
      %v357 = vunpack.c.l.b16 %v221
      %v358 = vunpack.c.l.b16 %v222
      %v359 = vunpack.c.l.b16 %v223
      %v360 = vunpack.c.l.b16 %v224
      %v361 = vunpack.c.l.b16 %v225
      %v362 = vunpack.c.l.b16 %v226
      %v363 = vunpack.c.l.b16 %v227
      %v364 = vunpack.c.l.b16 %v228
      %v365 = vunpack.c.l.b16 %v229
      %v366 = vunpack.c.l.b16 %v230
      %v367 = vunpack.c.l.b16 %v231
      %v368 = vunpack.c.l.b16 %v232
      %v369 = vunpack.c.l.b16 %v233
      %v370 = vunpack.c.l.b16 %v234
      %v371 = vunpack.c.l.b16 %v235
      %v372 = vunpack.c.l.b16 %v236
      %v373 = vunpack.c.l.b16 %v237
      %v374 = vunpack.c.l.b16 %v238
      %v375 = vpack.c.b16 %v312, %v311
      %v376 = vpack.c.b16 %v314, %v313
      %v377 = vpack.c.b16 %v316, %v315
      %v378 = vpack.c.b16 %v318, %v317
      %v379 = vpack.c.b16 %v320, %v319
      %v380 = vpack.c.b16 %v322, %v321
      %v381 = vpack.c.b16 %v324, %v323
      %v382 = vpack.c.b16 %v326, %v325
      %v383 = vpack.c.b16 %v328, %v327
      %v384 = vpack.c.b16 %v330, %v329
      %v385 = vpack.c.b16 %v332, %v331
      %v386 = vpack.c.b16 %v334, %v333
      %v387 = vpack.c.b16 %v336, %v335
      %v388 = vpack.c.b16 %v338, %v337
      %v389 = vpack.c.b16 %v340, %v339
      %v390 = vpack.c.b16 %v342, %v341
      %v391 = vpack.c.b16 %v344, %v343
      %v392 = vpack.c.b16 %v346, %v345
      %v393 = vpack.c.b16 %v348, %v347
      %v394 = vpack.c.b16 %v350, %v349
      %v395 = vpack.c.b16 %v352, %v351
      %v396 = vpack.c.b16 %v354, %v353
      %v397 = vpack.c.b16 %v356, %v355
      %v398 = vpack.c.b16 %v358, %v357
      %v399 = vpack.c.b16 %v360, %v359
      %v400 = vpack.c.b16 %v362, %v361
      %v401 = vpack.c.b16 %v364, %v363
      %v402 = vpack.c.b16 %v366, %v365
      %v403 = vpack.c.b16 %v368, %v367
      %v404 = vpack.c.b16 %v370, %v369
      %v405 = vpack.c.b16 %v372, %v371
      %v406 = vpack.c.b16 %v374, %v373
      %v411 = vunpack.c.l.b16 %v239
      %v412 = vunpack.c.l.b16 %v240
      %v413 = vunpack.c.l.b16 %v241
      %v414 = vunpack.c.l.b16 %v242
      %v415 = vpack.c.b16 %v412, %v411
      %v416 = vpack.c.b16 %v414, %v413
      %vm419 = vcmask 261120
      %v421 = vsel %vm419, %v375, 0
      %v424 = vsel %vm419, %v376, 0
      %v427 = vsel %vm419, %v377, 0
      %v430 = vsel %vm419, %v378, 0
      %v433 = vsel %vm419, %v379, 0
      %v436 = vsel %vm419, %v380, 0
      %v439 = vsel %vm419, %v381, 0
      %v442 = vsel %vm419, %v382, 0
      %v445 = vsel %vm419, %v383, 0
      %v448 = vsel %vm419, %v384, 0
      %v451 = vsel %vm419, %v385, 0
      %v454 = vsel %vm419, %v386, 0
      %v457 = vsel %vm419, %v387, 0
      %v460 = vsel %vm419, %v388, 0
      %v463 = vsel %vm419, %v389, 0
      %v466 = vsel %vm419, %v390, 0
      %v469 = vsel %vm419, %v391, 0
      %v472 = vsel %vm419, %v392, 0
      %v475 = vsel %vm419, %v393, 0
      %v478 = vsel %vm419, %v394, 0
      %v481 = vsel %vm419, %v395, 0
      %v484 = vsel %vm419, %v396, 0
      %v487 = vsel %vm419, %v397, 0
      %v490 = vsel %vm419, %v398, 0
      %v493 = vsel %vm419, %v399, 0
      %v496 = vsel %vm419, %v400, 0
      %v499 = vsel %vm419, %v401, 0
      %v502 = vsel %vm419, %v402, 0
      %v505 = vsel %vm419, %v403, 0
      %v508 = vsel %vm419, %v404, 0
      %v511 = vsel %vm419, %v405, 0
      %v514 = vsel %vm419, %v406, 0
      %516 = vmatpush.bf16.msra.mxu0 0
      %517 = vmatpush.bf16.msra.mxu0 0
      %518 = vmatpush.bf16.msra.mxu0 0
      %519 = vmatpush.bf16.msra.mxu0 0
      %520 = vmatpush.bf16.msra.mxu0 0
      %521 = vmatpush.bf16.msra.mxu0 0
      %522 = vmatpush.bf16.msra.mxu0 %v416
      %523 = vmatpush.bf16.msra.mxu0 %v415
      %524 = vmatmul.bf16.gmra.mxu0 %v421
      %v525 = vpop.f32.mrf.mxu0
      %v526 = vadd.f32 %v245, %v525
      %v527 = vpop.f32.mrf.mxu0
      %v528 = vadd.f32 %v245, %v527
      %529 = vmatmul.bf16.gmra.mxu0 %v424
      %v530 = vpop.f32.mrf.mxu0
      %v531 = vadd.f32 %v245, %v530
      %v532 = vpop.f32.mrf.mxu0
      %v533 = vadd.f32 %v245, %v532
      %534 = vmatmul.bf16.gmra.mxu0 %v427
      %v535 = vpop.f32.mrf.mxu0
      %v536 = vadd.f32 %v245, %v535
      %v537 = vpop.f32.mrf.mxu0
      %v538 = vadd.f32 %v245, %v537
      %539 = vmatmul.bf16.gmra.mxu0 %v430
      %v540 = vpop.f32.mrf.mxu0
      %v541 = vadd.f32 %v245, %v540
      %v542 = vpop.f32.mrf.mxu0
      %v543 = vadd.f32 %v245, %v542
      %544 = vmatmul.bf16.gmra.mxu0 %v433
      %v545 = vpop.f32.mrf.mxu0
      %v546 = vadd.f32 %v245, %v545
      %v547 = vpop.f32.mrf.mxu0
      %v548 = vadd.f32 %v245, %v547
      %549 = vmatmul.bf16.gmra.mxu0 %v436
      %v550 = vpop.f32.mrf.mxu0
      %v551 = vadd.f32 %v245, %v550
      %v552 = vpop.f32.mrf.mxu0
      %v553 = vadd.f32 %v245, %v552
      %554 = vmatmul.bf16.gmra.mxu0 %v439
      %v555 = vpop.f32.mrf.mxu0
      %v556 = vadd.f32 %v245, %v555
      %v557 = vpop.f32.mrf.mxu0
      %v558 = vadd.f32 %v245, %v557
      %559 = vmatmul.bf16.gmra.mxu0 %v442
      %v560 = vpop.f32.mrf.mxu0
      %v561 = vadd.f32 %v245, %v560
      %v562 = vpop.f32.mrf.mxu0
      %v563 = vadd.f32 %v245, %v562
      %564 = vmatmul.bf16.gmra.mxu0 %v445
      %v565 = vpop.f32.mrf.mxu0
      %v566 = vadd.f32 %v245, %v565
      %v567 = vpop.f32.mrf.mxu0
      %v568 = vadd.f32 %v245, %v567
      %569 = vmatmul.bf16.gmra.mxu0 %v448
      %v570 = vpop.f32.mrf.mxu0
      %v571 = vadd.f32 %v245, %v570
      %v572 = vpop.f32.mrf.mxu0
      %v573 = vadd.f32 %v245, %v572
      %574 = vmatmul.bf16.gmra.mxu0 %v451
      %v575 = vpop.f32.mrf.mxu0
      %v576 = vadd.f32 %v245, %v575
      %v577 = vpop.f32.mrf.mxu0
      %v578 = vadd.f32 %v245, %v577
      %579 = vmatmul.bf16.gmra.mxu0 %v454
      %v580 = vpop.f32.mrf.mxu0
      %v581 = vadd.f32 %v245, %v580
      %v582 = vpop.f32.mrf.mxu0
      %v583 = vadd.f32 %v245, %v582
      %584 = vmatmul.bf16.gmra.mxu0 %v457
      %v585 = vpop.f32.mrf.mxu0
      %v586 = vadd.f32 %v245, %v585
      %v587 = vpop.f32.mrf.mxu0
      %v588 = vadd.f32 %v245, %v587
      %589 = vmatmul.bf16.gmra.mxu0 %v460
      %v590 = vpop.f32.mrf.mxu0
      %v591 = vadd.f32 %v245, %v590
      %v592 = vpop.f32.mrf.mxu0
      %v593 = vadd.f32 %v245, %v592
      %594 = vmatmul.bf16.gmra.mxu0 %v463
      %v595 = vpop.f32.mrf.mxu0
      %v596 = vadd.f32 %v245, %v595
      %v597 = vpop.f32.mrf.mxu0
      %v598 = vadd.f32 %v245, %v597
      %599 = vmatmul.bf16.gmra.mxu0 %v466
      %v600 = vpop.f32.mrf.mxu0
      %v601 = vadd.f32 %v245, %v600
      %v602 = vpop.f32.mrf.mxu0
      %v603 = vadd.f32 %v245, %v602
      %604 = vmatmul.bf16.gmra.mxu0 %v469
      %v605 = vpop.f32.mrf.mxu0
      %v606 = vadd.f32 %v245, %v605
      %v607 = vpop.f32.mrf.mxu0
      %v608 = vadd.f32 %v245, %v607
      %609 = vmatmul.bf16.gmra.mxu0 %v472
      %v610 = vpop.f32.mrf.mxu0
      %v611 = vadd.f32 %v245, %v610
      %v612 = vpop.f32.mrf.mxu0
      %v613 = vadd.f32 %v245, %v612
      %614 = vmatmul.bf16.gmra.mxu0 %v475
      %v615 = vpop.f32.mrf.mxu0
      %v616 = vadd.f32 %v245, %v615
      %v617 = vpop.f32.mrf.mxu0
      %v618 = vadd.f32 %v245, %v617
      %619 = vmatmul.bf16.gmra.mxu0 %v478
      %v620 = vpop.f32.mrf.mxu0
      %v621 = vadd.f32 %v245, %v620
      %v622 = vpop.f32.mrf.mxu0
      %v623 = vadd.f32 %v245, %v622
      %624 = vmatmul.bf16.gmra.mxu0 %v481
      %v625 = vpop.f32.mrf.mxu0
      %v626 = vadd.f32 %v245, %v625
      %v627 = vpop.f32.mrf.mxu0
      %v628 = vadd.f32 %v245, %v627
      %629 = vmatmul.bf16.gmra.mxu0 %v484
      %v630 = vpop.f32.mrf.mxu0
      %v631 = vadd.f32 %v245, %v630
      %v632 = vpop.f32.mrf.mxu0
      %v633 = vadd.f32 %v245, %v632
      %634 = vmatmul.bf16.gmra.mxu0 %v487
      %v635 = vpop.f32.mrf.mxu0
      %v636 = vadd.f32 %v245, %v635
      %v637 = vpop.f32.mrf.mxu0
      %v638 = vadd.f32 %v245, %v637
      %639 = vmatmul.bf16.gmra.mxu0 %v490
      %v640 = vpop.f32.mrf.mxu0
      %v641 = vadd.f32 %v245, %v640
      %v642 = vpop.f32.mrf.mxu0
      %v643 = vadd.f32 %v245, %v642
      %644 = vmatmul.bf16.gmra.mxu0 %v493
      %v645 = vpop.f32.mrf.mxu0
      %v646 = vadd.f32 %v245, %v645
      %v647 = vpop.f32.mrf.mxu0
      %v648 = vadd.f32 %v245, %v647
      %649 = vmatmul.bf16.gmra.mxu0 %v496
      %v650 = vpop.f32.mrf.mxu0
      %v651 = vadd.f32 %v245, %v650
      %v652 = vpop.f32.mrf.mxu0
      %v653 = vadd.f32 %v245, %v652
      %654 = vmatmul.bf16.gmra.mxu0 %v499
      %v655 = vpop.f32.mrf.mxu0
      %v656 = vadd.f32 %v245, %v655
      %v657 = vpop.f32.mrf.mxu0
      %v658 = vadd.f32 %v245, %v657
      %659 = vmatmul.bf16.gmra.mxu0 %v502
      %v660 = vpop.f32.mrf.mxu0
      %v661 = vadd.f32 %v245, %v660
      %v662 = vpop.f32.mrf.mxu0
      %v663 = vadd.f32 %v245, %v662
      %664 = vmatmul.bf16.gmra.mxu0 %v505
      %v665 = vpop.f32.mrf.mxu0
      %v666 = vadd.f32 %v245, %v665
      %v667 = vpop.f32.mrf.mxu0
      %v668 = vadd.f32 %v245, %v667
      %669 = vmatmul.bf16.gmra.mxu0 %v508
      %v670 = vpop.f32.mrf.mxu0
      %v671 = vadd.f32 %v245, %v670
      %v672 = vpop.f32.mrf.mxu0
      %v673 = vadd.f32 %v245, %v672
      %674 = vmatmul.bf16.gmra.mxu0 %v511
      %v675 = vpop.f32.mrf.mxu0
      %v676 = vadd.f32 %v245, %v675
      %v677 = vpop.f32.mrf.mxu0
      %v678 = vadd.f32 %v245, %v677
      %679 = vmatmul.bf16.gmra.mxu0 %v514
      %v680 = vpop.f32.mrf.mxu0
      %v681 = vadd.f32 %v245, %v680
      %v682 = vpop.f32.mrf.mxu0
      %v683 = vadd.f32 %v245, %v682
      %684 = vdwg.mxu0
      %vm685 = vcmask 130048
      %686 = vst.msk [vmem:[%s172] sm:$0xff] %vm685, %v526
      %687 = vst.msk [vmem:[%s172 + $0x8] sm:$0xff] %vm685, %v528
      %688 = vst.msk [vmem:[%s172 + $0x10] sm:$0xff] %vm685, %v531
      %689 = vst.msk [vmem:[%s172 + $0x18] sm:$0xff] %vm685, %v533
      %690 = vst.msk [vmem:[%s172 + $0x20] sm:$0xff] %vm685, %v536
      %691 = vst.msk [vmem:[%s172 + $0x28] sm:$0xff] %vm685, %v538
      %692 = vst.msk [vmem:[%s172 + $0x30] sm:$0xff] %vm685, %v541
      %693 = vst.msk [vmem:[%s172 + $0x38] sm:$0xff] %vm685, %v543
      %694 = vst.msk [vmem:[%s172 + $0x40] sm:$0xff] %vm685, %v546
      %695 = vst.msk [vmem:[%s172 + $0x48] sm:$0xff] %vm685, %v548
      %696 = vst.msk [vmem:[%s172 + $0x50] sm:$0xff] %vm685, %v551
      %697 = vst.msk [vmem:[%s172 + $0x58] sm:$0xff] %vm685, %v553
      %698 = vst.msk [vmem:[%s172 + $0x60] sm:$0xff] %vm685, %v556
      %699 = vst.msk [vmem:[%s172 + $0x68] sm:$0xff] %vm685, %v558
      %700 = vst.msk [vmem:[%s172 + $0x70] sm:$0xff] %vm685, %v561
      %701 = vst.msk [vmem:[%s172 + $0x78] sm:$0xff] %vm685, %v563
      %702 = vst.msk [vmem:[%s172 + $0x80] sm:$0xff] %vm685, %v566
      %703 = vst.msk [vmem:[%s172 + $0x88] sm:$0xff] %vm685, %v568
      %704 = vst.msk [vmem:[%s172 + $0x90] sm:$0xff] %vm685, %v571
      %705 = vst.msk [vmem:[%s172 + $0x98] sm:$0xff] %vm685, %v573
      %706 = vst.msk [vmem:[%s172 + $0xa0] sm:$0xff] %vm685, %v576
      %707 = vst.msk [vmem:[%s172 + $0xa8] sm:$0xff] %vm685, %v578
      %708 = vst.msk [vmem:[%s172 + $0xb0] sm:$0xff] %vm685, %v581
      %709 = vst.msk [vmem:[%s172 + $0xb8] sm:$0xff] %vm685, %v583
      %710 = vst.msk [vmem:[%s172 + $0xc0] sm:$0xff] %vm685, %v586
      %711 = vst.msk [vmem:[%s172 + $0xc8] sm:$0xff] %vm685, %v588
      %712 = vst.msk [vmem:[%s172 + $0xd0] sm:$0xff] %vm685, %v591
      %713 = vst.msk [vmem:[%s172 + $0xd8] sm:$0xff] %vm685, %v593
      %714 = vst.msk [vmem:[%s172 + $0xe0] sm:$0xff] %vm685, %v596
      %715 = vst.msk [vmem:[%s172 + $0xe8] sm:$0xff] %vm685, %v598
      %716 = vst.msk [vmem:[%s172 + $0xf0] sm:$0xff] %vm685, %v601
      %717 = vst.msk [vmem:[%s172 + $0xf8] sm:$0xff] %vm685, %v603
      %718 = vst.msk [vmem:[%s172 + $0x100] sm:$0xff] %vm685, %v606
      %719 = vst.msk [vmem:[%s172 + $0x108] sm:$0xff] %vm685, %v608
      %720 = vst.msk [vmem:[%s172 + $0x110] sm:$0xff] %vm685, %v611
      %721 = vst.msk [vmem:[%s172 + $0x118] sm:$0xff] %vm685, %v613
      %722 = vst.msk [vmem:[%s172 + $0x120] sm:$0xff] %vm685, %v616
      %723 = vst.msk [vmem:[%s172 + $0x128] sm:$0xff] %vm685, %v618
      %724 = vst.msk [vmem:[%s172 + $0x130] sm:$0xff] %vm685, %v621
      %725 = vst.msk [vmem:[%s172 + $0x138] sm:$0xff] %vm685, %v623
      %726 = vst.msk [vmem:[%s172 + $0x140] sm:$0xff] %vm685, %v626
      %727 = vst.msk [vmem:[%s172 + $0x148] sm:$0xff] %vm685, %v628
      %728 = vst.msk [vmem:[%s172 + $0x150] sm:$0xff] %vm685, %v631
      %729 = vst.msk [vmem:[%s172 + $0x158] sm:$0xff] %vm685, %v633
      %730 = vst.msk [vmem:[%s172 + $0x160] sm:$0xff] %vm685, %v636
      %731 = vst.msk [vmem:[%s172 + $0x168] sm:$0xff] %vm685, %v638
      %732 = vst.msk [vmem:[%s172 + $0x170] sm:$0xff] %vm685, %v641
      %733 = vst.msk [vmem:[%s172 + $0x178] sm:$0xff] %vm685, %v643
      %734 = vst.msk [vmem:[%s172 + $0x180] sm:$0xff] %vm685, %v646
      %735 = vst.msk [vmem:[%s172 + $0x188] sm:$0xff] %vm685, %v648
      %736 = vst.msk [vmem:[%s172 + $0x190] sm:$0xff] %vm685, %v651
      %737 = vst.msk [vmem:[%s172 + $0x198] sm:$0xff] %vm685, %v653
      %738 = vst.msk [vmem:[%s172 + $0x1a0] sm:$0xff] %vm685, %v656
      %739 = vst.msk [vmem:[%s172 + $0x1a8] sm:$0xff] %vm685, %v658
      %740 = vst.msk [vmem:[%s172 + $0x1b0] sm:$0xff] %vm685, %v661
      %741 = vst.msk [vmem:[%s172 + $0x1b8] sm:$0xff] %vm685, %v663
      %742 = vst.msk [vmem:[%s172 + $0x1c0] sm:$0xff] %vm685, %v666
      %743 = vst.msk [vmem:[%s172 + $0x1c8] sm:$0xff] %vm685, %v668
      %744 = vst.msk [vmem:[%s172 + $0x1d0] sm:$0xff] %vm685, %v671
      %745 = vst.msk [vmem:[%s172 + $0x1d8] sm:$0xff] %vm685, %v673
      %746 = vst.msk [vmem:[%s172 + $0x1e0] sm:$0xff] %vm685, %v676
      %747 = vst.msk [vmem:[%s172 + $0x1e8] sm:$0xff] %vm685, %v678
      %748 = vst.msk [vmem:[%s172 + $0x1f0] sm:$0xff] %vm685, %v681
      %749 = vst.msk [vmem:[%s172 + $0x1f8] sm:$0xff] %vm685, %v683
      %s750 = smul.u32 64, %s14
      %p751 = scmp.lt.s32.totalorder %s750, 255
      %s752 = scalar_select %p751, %s750, 255
      %s753 = smul.addr %s752, 8
      %s754 = scalar_lea.vmem %s3, %s753
      // Predicated region
      $region33: #{_lambda_.40} parent=31 // pred_check
        %p755 = pneg %p100
      $region34: #{_lambda_.40} parent=31 // pred_check_branch
        %757 = sbr.rel (%p755) target = $region36
      $region35: #{_lambda_.40} parent=31 // pred_region
        %s758 = smul.u32 64, %s14
      $region36: #{_lambda_.40} parent=31 // pred_fallthru
        _
    $region32: #{_lambda_.40} parent=5 // pred_fallthru
      _
    %p759 = scmp.le.s32.totalorder 2, %s9
    // Predicated region
    $region37: #{_lambda_.40} parent=5 // pred_check
      %p760 = pneg %p759
    $region38: #{_lambda_.40} parent=5 // pred_check_branch
      %762 = sbr.rel (%p760) target = $region40
    $region39: #{_lambda_.40} parent=5 // pred_region
      %s763 = ssub.s32 %s9, 2
      // Predicated region
      $region41: #{_lambda_.40} parent=39 // pred_check
        %p764 = pneg %p106
      $region42: #{_lambda_.40} parent=39 // pred_check_branch
        %766 = sbr.rel (%p764) target = $region44
      $region43: #{_lambda_.40} parent=39 // pred_region
        %s767 = smul.u32 64, %s15
        %p768 = scmp.lt.s32.totalorder %s767, 255
        %s769 = scalar_select %p768, %s767, 255
        %s770 = smul.addr %s769, 8
        %s771 = scalar_lea.vmem %s3, %s770
      $region44: #{_lambda_.40} parent=39 // pred_fallthru
        _
    $region40: #{_lambda_.40} parent=5 // pred_fallthru
      _
  $region6: #{_lambda_.40} parent=0 // loop_footer
    %s13 = sadd.s32 1, %s9
  $region7: #{_lambda_.40} parent=0 // loop_footer_branch
    %8 = sbr.rel target = $region3
  $region8: #{_lambda_.40} parent=0 // loop_exit
    _

</llo_original>
